<compile_context>
chip_gen: v7x
topology: tpu7x:2x2x1
jax: 0.10.0
libtpu: 0.0.40
codegen_flags: <defaults>
</compile_context>

<pallas_src>
import math

import jax
import jax.numpy as jnp
from jax.experimental import pallas as pl
from jax.experimental.pallas import tpu as pltpu

N_HEADS = 2
HP = 128          # per-head lane-padded width (one vreg of lanes)
LN_EPS = 1e-5
BN_EPS = 1e-5


def _layernorm(x, g, b):
    mu = jnp.mean(x, axis=-1, keepdims=True)
    var = jnp.mean(jnp.square(x - mu), axis=-1, keepdims=True)
    return (x - mu) * jax.lax.rsqrt(var + LN_EPS) * g + b


# ---------------------------------------------------------------------------
# Single fused kernel: both branches, each 2 encoder layers + projector.
# ---------------------------------------------------------------------------
def tfc_kernel(x_ref, wqkv_ref, wo_ref, wff1_ref, wff2_ref, evec_ref,
               pw1_ref, pw2_ref, pvec_ref, h_ref, z_ref):
    n_br = x_ref.shape[0]                       # 2 (time / freq)
    S = x_ref.shape[1]                          # samples (attention mixes over this)
    E = x_ref.shape[2]                          # d_model = TSlength_aligned
    n_layers = wqkv_ref.shape[0] // n_br
    F = wff1_ref.shape[2]                       # dim_feedforward
    P2 = pw2_ref.shape[2]                       # projector output dim
    bf16 = jnp.bfloat16

    for b in range(n_br):                       # static unroll: two independent chains
        x = x_ref[b]                            # (S, E) f32 residual stream
        for l in range(n_layers):               # static unroll (n_layers = 2)
            idx = b * n_layers + l
            w_qkv = wqkv_ref[idx]               # (E, 6*HP) bf16  [q0|k0|v0|q1|k1|v1]
            w_o = wo_ref[idx]                   # (2*HP, E) bf16  per-head out proj
            vec = evec_ref[idx]                 # (8, 6*HP) f32   bias / LN slab

            # --- multi-head self attention (dropout = identity in eval mode) ---
            qkv = jnp.dot(x.astype(bf16), w_qkv,
                          preferred_element_type=jnp.float32) + vec[0:1]     # (S, 6*HP)
            attn = None
            for h in range(N_HEADS):            # static loop, N_HEADS = 2
                base = 3 * HP * h               # 128-lane aligned slices (no XLU shuffles)
                q = qkv[:, base:base + HP]      # 1/sqrt(dh) already folded into Wq
                k = qkv[:, base + HP:base + 2 * HP]
                v = qkv[:, base + 2 * HP:base + 3 * HP]
                s = jax.lax.dot_general(q.astype(bf16), k.astype(bf16),
                                        (((1,), (1,)), ((), ())),
                                        preferred_element_type=jnp.float32)  # (S, S)
                s = s - jnp.max(s, axis=-1, keepdims=True)
                p = jnp.exp(s)
                p = p * pl.reciprocal(jnp.sum(p, axis=-1, keepdims=True), approx=True)
                hh = jnp.dot(p.astype(bf16), v.astype(bf16),
                             preferred_element_type=jnp.float32)             # (S, HP)
                # concat(heads) @ Wo  ==  sum_h head_h @ Wo[h-block]
                contrib = jnp.dot(hh.astype(bf16), w_o[h * HP:(h + 1) * HP, :],
                                  preferred_element_type=jnp.float32)
                attn = contrib if attn is None else attn + contrib
            attn = attn + vec[1:2, :E]
            x = _layernorm(x + attn, vec[2:3, :E], vec[3:4, :E])

            # --- feed forward: Linear -> ReLU -> Linear ---
            ff = jnp.dot(x.astype(bf16), wff1_ref[idx],
                         preferred_element_type=jnp.float32) + vec[4:5, :F]
            ff = jnp.maximum(ff, 0.0)
            ff = jnp.dot(ff.astype(bf16), wff2_ref[idx],
                         preferred_element_type=jnp.float32) + vec[5:6, :E]
            x = _layernorm(x + ff, vec[6:7, :E], vec[7:8, :E])

        # lane-dense h output (pad E -> 128 so the store is unmasked); sliced in wrapper
        if E < HP:
            h_out = jnp.concatenate([x, jnp.zeros((S, HP - E), jnp.float32)], axis=1)
        else:
            h_out = x
        h_ref[b] = h_out.astype(h_ref.dtype)

        # --- projector: Linear -> (folded eval BatchNorm) -> ReLU -> Linear ---
        pvec = pvec_ref[b]                      # (2, P1) f32: [b1_folded ; b2 padded]
        z = jnp.dot(x.astype(bf16), pw1_ref[b],
                    preferred_element_type=jnp.float32) + pvec[0:1]
        z = jnp.maximum(z, 0.0)
        z = jnp.dot(z.astype(bf16), pw2_ref[b],
                    preferred_element_type=jnp.float32) + pvec[1:2, :P2]
        z_ref[b] = z.astype(z_ref.dtype)


# ---------------------------------------------------------------------------
# Wrapper: a single no-grid pallas_call, everything resident in VMEM (<1 MiB).
# ---------------------------------------------------------------------------
def tfc_forward(packed, x_in_t, x_in_f):
    B, C, Lts = x_in_t.shape
    assert C == 1, "TFC's projector Linear(TSlength, 256) requires channel dim == 1"
    assert Lts <= HP
    S, E = B, Lts
    n_layers = packed["w_qkv"].shape[0] // 2
    F = packed["w_ff1"].shape[-1]
    P1 = packed["pw1"].shape[-1]
    P2 = packed["pw2"].shape[-1]

    # (2, S, E): attention mixes across S (= samples), as in the non-batch-first module
    x = jnp.stack([x_in_t[:, 0, :], x_in_f[:, 0, :]], axis=0)

    args = (x, packed["w_qkv"], packed["w_o"], packed["w_ff1"], packed["w_ff2"],
            packed["evec"], packed["pw1"], packed["pw2"], packed["pvec"])

    # Advisory cost estimate so XLA schedules around the tiny custom call sensibly.
    per_layer = (2 * S * E * N_HEADS * 3 * HP            # qkv projection
                 + N_HEADS * 4 * S * S * HP               # q@k^T and p@v
                 + N_HEADS * 2 * S * HP * E                # per-head out proj
                 + 2 * S * E * F + 2 * S * F * E)          # FFN
    flops = 2 * (n_layers * per_layer + 2 * S * E * P1 + 2 * S * P1 * P2)
    transcendentals = 2 * n_layers * N_HEADS * S * S
    bytes_accessed = (sum(int(a.size) * a.dtype.itemsize for a in args)
                      + (2 * S * HP + 2 * S * P2) * 4)

    vmem_spec = pl.BlockSpec(memory_space=pltpu.MemorySpace.VMEM)
    h_pad, z = pl.pallas_call(
        tfc_kernel,
        in_specs=[vmem_spec] * len(args),
        out_specs=(vmem_spec, vmem_spec),
        out_shape=(jax.ShapeDtypeStruct((2, S, HP), jnp.float32),
                   jax.ShapeDtypeStruct((2, S, P2), jnp.float32)),
        cost_estimate=pl.CostEstimate(flops=int(flops),
                                      transcendentals=int(transcendentals),
                                      bytes_accessed=int(bytes_accessed)),
    )(*args)

    return h_pad[0, :, :E], z[0], h_pad[1, :, :E], z[1]   # h_time, z_time, h_freq, z_freq


# ---------------------------------------------------------------------------
# Parameter init (raw torch-layout) + packing into lane-dense bf16/f32 slabs.
# ---------------------------------------------------------------------------
def _pad_vec(v, width):
    return jnp.pad(v, (0, width - v.shape[0]))


def init_encoder_layer_raw(key, e, f):
    ks = jax.random.split(key, 12)
    s = 0.1
    return dict(
        in_proj_w=jax.random.normal(ks[0], (3 * e, e), jnp.float32) * s,
        in_proj_b=jax.random.normal(ks[1], (3 * e,), jnp.float32) * s,
        out_proj_w=jax.random.normal(ks[2], (e, e), jnp.float32) * s,
        out_proj_b=jax.random.normal(ks[3], (e,), jnp.float32) * s,
        ff1_w=jax.random.normal(ks[4], (f, e), jnp.float32) * s,
        ff1_b=jax.random.normal(ks[5], (f,), jnp.float32) * s,
        ff2_w=jax.random.normal(ks[6], (e, f), jnp.float32) * s,
        ff2_b=jax.random.normal(ks[7], (e,), jnp.float32) * s,
        ln1_g=1.0 + 0.1 * jax.random.normal(ks[8], (e,), jnp.float32),
        ln1_b=0.1 * jax.random.normal(ks[9], (e,), jnp.float32),
        ln2_g=1.0 + 0.1 * jax.random.normal(ks[10], (e,), jnp.float32),
        ln2_b=0.1 * jax.random.normal(ks[11], (e,), jnp.float32),
    )


def init_projector_raw(key, l, p1=256, p2=128):
    ks = jax.random.split(key, 8)
    s = 0.1
    return dict(
        w1=jax.random.normal(ks[0], (p1, l), jnp.float32) * s,
        b1=jax.random.normal(ks[1], (p1,), jnp.float32) * s,
        w2=jax.random.normal(ks[2], (p2, p1), jnp.float32) * s,
        b2=jax.random.normal(ks[3], (p2,), jnp.float32) * s,
        bn_g=1.0 + 0.1 * jax.random.normal(ks[4], (p1,), jnp.float32),
        bn_b=0.1 * jax.random.normal(ks[5], (p1,), jnp.float32),
        bn_m=0.1 * jax.random.normal(ks[6], (p1,), jnp.float32),
        bn_v=0.5 + jax.random.uniform(ks[7], (p1,), jnp.float32),
    )


def pack_encoder_layer(p, e):
    """Lane-pad per-head Q/K/V and out-proj blocks to 128; fold in 1/sqrt(dh)."""
    dh = e // N_HEADS
    scale = 1.0 / math.sqrt(dh)
    w_in = p["in_proj_w"].T          # (e, 3e): x @ w_in == x @ in_proj_w.T
    b_in = p["in_proj_b"]
    w_out = p["out_proj_w"].T        # (e, e)

    w_blocks, b_blocks, wo_blocks = [], [], []
    for h in range(N_HEADS):
        for part, sc in ((0, scale), (1, 1.0), (2, 1.0)):      # q (pre-scaled), k, v
            lo = part * e + h * dh
            cols = w_in[:, lo:lo + dh] * sc                    # (e, dh)
            w_blocks.append(jnp.pad(cols, ((0, 0), (0, HP - dh))))
            b_blocks.append(_pad_vec(b_in[lo:lo + dh] * sc, HP))
        wo_blocks.append(jnp.pad(w_out[h * dh:(h + 1) * dh, :], ((0, HP - dh), (0, 0))))

    w_qkv = jnp.concatenate(w_blocks, axis=1)                  # (e, 6*HP)
    b_qkv = jnp.concatenate(b_blocks, axis=0)                  # (6*HP,)
    w_o = jnp.concatenate(wo_blocks, axis=0)                   # (2*HP, e)

    row_w = N_HEADS * 3 * HP
    vec = jnp.stack([b_qkv,
                     _pad_vec(p["out_proj_b"], row_w),
                     _pad_vec(p["ln1_g"], row_w), _pad_vec(p["ln1_b"], row_w),
                     _pad_vec(p["ff1_b"], row_w), _pad_vec(p["ff2_b"], row_w),
                     _pad_vec(p["ln2_g"], row_w), _pad_vec(p["ln2_b"], row_w)],
                    axis=0)                                    # (8, 6*HP) f32
    return (w_qkv.astype(jnp.bfloat16), w_o.astype(jnp.bfloat16),
            p["ff1_w"].T.astype(jnp.bfloat16), p["ff2_w"].T.astype(jnp.bfloat16),
            vec.astype(jnp.float32))


def pack_projector(p):
    """Fold eval-mode BatchNorm1d into the first projector Linear (exact in eval)."""
    bn_scale = p["bn_g"] * jax.lax.rsqrt(p["bn_v"] + BN_EPS)           # (p1,)
    w1 = (p["w1"].T * bn_scale[None, :]).astype(jnp.bfloat16)          # (l, p1)
    b1 = (p["b1"] - p["bn_m"]) * bn_scale + p["bn_b"]                  # (p1,)
    p1 = p["w1"].shape[0]
    pvec = jnp.stack([b1, _pad_vec(p["b2"], p1)], axis=0).astype(jnp.float32)
    return w1, p["w2"].T.astype(jnp.bfloat16), pvec


def init_tfc_params(key, ts_len, n_layers=2):
    """Returns (packed kernel params, raw torch-layout params for the reference)."""
    f = 2 * ts_len
    kt, kf, kpt, kpf = jax.random.split(key, 4)

    raw = {
        "t": ([init_encoder_layer_raw(k, ts_len, f) for k in jax.random.split(kt, n_layers)],
              init_projector_raw(kpt, ts_len)),
        "f": ([init_encoder_layer_raw(k, ts_len, f) for k in jax.random.split(kf, n_layers)],
              init_projector_raw(kpf, ts_len)),
    }

    def pack_branch(layers, proj):
        pk = [pack_encoder_layer(lp, ts_len) for lp in layers]
        return ([jnp.stack([q[i] for q in pk]) for i in range(5)]   # per-layer slabs
                + list(pack_projector(proj)))

    bt = pack_branch(*raw["t"])
    bf = pack_branch(*raw["f"])

    def merge(i):
        a = jnp.stack([bt[i], bf[i]])            # (2, L, ...) -> (2*L, ...), branch-major
        return a.reshape((-1,) + a.shape[2:])

    packed = dict(
        w_qkv=merge(0),                          # (2*L, E, 6*128)  bf16
        w_o=merge(1),                            # (2*L, 2*128, E)  bf16
        w_ff1=merge(2),                          # (2*L, E, F)      bf16
        w_ff2=merge(3),                          # (2*L, F, E)      bf16
        evec=merge(4),                           # (2*L, 8, 6*128)  f32
        pw1=jnp.stack([bt[5], bf[5]]),           # (2, E, 256)      bf16 (BN folded)
        pw2=jnp.stack([bt[6], bf[6]]),           # (2, 256, 128)    bf16
        pvec=jnp.stack([bt[7], bf[7]]),          # (2, 2, 256)      f32
    )
    return packed, raw


# ---------------------------------------------------------------------------
# Pure-JAX f32 reference from the RAW torch-layout params (PyTorch eval semantics).
# ---------------------------------------------------------------------------
def tfc_reference(raw, x_in_t, x_in_f):
    outs = []
    for (layers, proj), xin in ((raw["t"], x_in_t), (raw["f"], x_in_f)):
        x = xin[:, 0, :]
        e = x.shape[-1]
        dh = e // N_HEADS
        for lp in layers:
            qkv = x @ lp["in_proj_w"].T + lp["in_proj_b"]
            q, k, v = qkv[:, :e], qkv[:, e:2 * e], qkv[:, 2 * e:]
            heads = []
            for h in range(N_HEADS):
                qh, kh, vh = (t[:, h * dh:(h + 1) * dh] for t in (q, k, v))
                s = qh @ kh.T / math.sqrt(dh)
                heads.append(jax.nn.softmax(s, axis=-1) @ vh)
            attn = jnp.concatenate(heads, axis=-1) @ lp["out_proj_w"].T + lp["out_proj_b"]
            x = _layernorm(x + attn, lp["ln1_g"], lp["ln1_b"])
            ff = jnp.maximum(x @ lp["ff1_w"].T + lp["ff1_b"], 0.0)
            ff = ff @ lp["ff2_w"].T + lp["ff2_b"]
            x = _layernorm(x + ff, lp["ln2_g"], lp["ln2_b"])
        z = x @ proj["w1"].T + proj["b1"]
        z = (z - proj["bn_m"]) * jax.lax.rsqrt(proj["bn_v"] + BN_EPS) * proj["bn_g"] + proj["bn_b"]
        z = jnp.maximum(z, 0.0)
        z = z @ proj["w2"].T + proj["b2"]
        outs.append((x, z))
    return outs[0][0], outs[0][1], outs[1][0], outs[1][1]


if __name__ == "__main__":
    TS_LEN = 16      # configs.TSlength_aligned (d_model of the transformer)
    B = 4            # samples; attention mixes across this axis (non-batch-first usage)

    key = jax.random.PRNGKey(0)
    kp, kt, kf = jax.random.split(key, 3)
    packed, raw = init_tfc_params(kp, TS_LEN)
    x_in_t = jax.random.normal(kt, (B, 1, TS_LEN), jnp.float32)
    x_in_f = jax.random.normal(kf, (B, 1, TS_LEN), jnp.float32)

    h_time, z_time, h_freq, z_freq = jax.block_until_ready(
        jax.jit(tfc_forward)(packed, x_in_t, x_in_f))

    assert h_time.shape == (B, TS_LEN) and z_time.shape == (B, 128)
    assert h_freq.shape == (B, TS_LEN) and z_freq.shape == (B, 128)
    assert h_time.dtype == jnp.float32 and z_time.dtype == jnp.float32

    # Loose numerical sanity check vs a pure-JAX f32 reference built from the raw
    # torch-layout parameters (kernel uses bf16 MXU operands + approx reciprocal,
    # so allow a correspondingly loose absolute tolerance).
    rh_t, rz_t, rh_f, rz_f = tfc_reference(raw, x_in_t, x_in_f)
    max_diff = max(float(jnp.max(jnp.abs(a - b))) for a, b in
                   ((h_time, rh_t), (z_time, rz_t), (h_freq, rh_f), (z_freq, rz_f)))
    assert max_diff < 1e-1, f"mismatch vs reference: {max_diff}"

    print("KERNEL_OK")
</pallas_src>

<mosaic_0001>
module attributes {stable_mosaic.version = 11 : i64} {
  func.func @tfc_kernel(%arg0: memref<2x4x16xf32, #tpu.memory_space<vmem>>, %arg1: memref<4x16x768xbf16, #tpu.memory_space<vmem>>, %arg2: memref<4x256x16xbf16, #tpu.memory_space<vmem>>, %arg3: memref<4x16x32xbf16, #tpu.memory_space<vmem>>, %arg4: memref<4x32x16xbf16, #tpu.memory_space<vmem>>, %arg5: memref<4x8x768xf32, #tpu.memory_space<vmem>>, %arg6: memref<2x16x256xbf16, #tpu.memory_space<vmem>>, %arg7: memref<2x256x128xbf16, #tpu.memory_space<vmem>>, %arg8: memref<2x2x256xf32, #tpu.memory_space<vmem>>, %arg9: memref<2x4x128xf32, #tpu.memory_space<vmem>>, %arg10: memref<2x4x128xf32, #tpu.memory_space<vmem>>) attributes {dimension_semantics = [], scalar_prefetch = 0 : i64, scratch_operands = 0 : i64, tpu.core_type = #tpu.core_type<tc>} {
    %c0 = arith.constant 0 : index
    %c0_0 = arith.constant 0 : index
    %c0_1 = arith.constant 0 : index
    %0 = vector.load %arg0[%c0, %c0_0, %c0_1] : memref<2x4x16xf32, #tpu.memory_space<vmem>>, vector<1x4x16xf32>
    %1 = vector.shape_cast %0 : vector<1x4x16xf32> to vector<4x16xf32>
    %c0_2 = arith.constant 0 : index
    %c0_3 = arith.constant 0 : index
    %c0_4 = arith.constant 0 : index
    %2 = vector.load %arg1[%c0_2, %c0_3, %c0_4] : memref<4x16x768xbf16, #tpu.memory_space<vmem>>, vector<1x16x768xbf16>
    %3 = vector.shape_cast %2 : vector<1x16x768xbf16> to vector<16x768xbf16>
    %c0_5 = arith.constant 0 : index
    %c0_6 = arith.constant 0 : index
    %c0_7 = arith.constant 0 : index
    %4 = vector.load %arg2[%c0_5, %c0_6, %c0_7] : memref<4x256x16xbf16, #tpu.memory_space<vmem>>, vector<1x256x16xbf16>
    %5 = vector.shape_cast %4 : vector<1x256x16xbf16> to vector<256x16xbf16>
    %c0_8 = arith.constant 0 : index
    %c0_9 = arith.constant 0 : index
    %c0_10 = arith.constant 0 : index
    %6 = vector.load %arg5[%c0_8, %c0_9, %c0_10] : memref<4x8x768xf32, #tpu.memory_space<vmem>>, vector<1x8x768xf32>
    %7 = vector.shape_cast %6 : vector<1x8x768xf32> to vector<8x768xf32>
    %8 = arith.truncf %1 : vector<4x16xf32> to vector<4x16xbf16>
    %cst = arith.constant dense<0.000000e+00> : vector<4x768xf32>
    %9 = tpu.matmul %8, %3, %cst {dimension_numbers = #tpu.dot_dimension_numbers<[1], [0], [0], [1], [0, 0, 1, 1], [], []>} : vector<4x16xbf16>, vector<16x768xbf16>, vector<4x768xf32> -> vector<4x768xf32>
    %10 = vector.extract_strided_slice %7 {offsets = [0, 0], sizes = [1, 768], strides = [1, 1]} : vector<8x768xf32> to vector<1x768xf32>
    %11 = vector.broadcast %10 : vector<1x768xf32> to vector<4x768xf32>
    %12 = arith.addf %9, %11 : vector<4x768xf32>
    %13 = vector.extract_strided_slice %12 {offsets = [0, 0], sizes = [4, 128], strides = [1, 1]} : vector<4x768xf32> to vector<4x128xf32>
    %14 = vector.extract_strided_slice %12 {offsets = [0, 128], sizes = [4, 128], strides = [1, 1]} : vector<4x768xf32> to vector<4x128xf32>
    %15 = vector.extract_strided_slice %12 {offsets = [0, 256], sizes = [4, 128], strides = [1, 1]} : vector<4x768xf32> to vector<4x128xf32>
    %16 = arith.truncf %13 : vector<4x128xf32> to vector<4x128xbf16>
    %17 = arith.truncf %14 : vector<4x128xf32> to vector<4x128xbf16>
    %cst_11 = arith.constant dense<0.000000e+00> : vector<4x4xf32>
    %18 = tpu.matmul %16, %17, %cst_11 {dimension_numbers = #tpu.dot_dimension_numbers<[1], [1], [0], [0], [0, 0, 1, 0], [], []>} : vector<4x128xbf16>, vector<4x128xbf16>, vector<4x4xf32> -> vector<4x4xf32>
    %cst_12 = arith.constant dense<0xFF800000> : vector<4xf32>
    %19 = vector.multi_reduction <maximumf>, %18, %cst_12 [1] : vector<4x4xf32> to vector<4xf32>
    %20 = vector.shape_cast %19 : vector<4xf32> to vector<4x1xf32>
    %21 = vector.broadcast %20 : vector<4x1xf32> to vector<4x4xf32>
    %22 = arith.subf %18, %21 : vector<4x4xf32>
    %23 = math.exp %22 : vector<4x4xf32>
    %cst_13 = arith.constant dense<0.000000e+00> : vector<4xf32>
    %24 = vector.multi_reduction <add>, %23, %cst_13 [1] : vector<4x4xf32> to vector<4xf32>
    %25 = vector.shape_cast %24 : vector<4xf32> to vector<4x1xf32>
    %26 = tpu.reciprocal %25 {approx = true} : vector<4x1xf32> -> vector<4x1xf32>
    %27 = vector.broadcast %26 : vector<4x1xf32> to vector<4x4xf32>
    %28 = arith.mulf %23, %27 : vector<4x4xf32>
    %29 = arith.truncf %28 : vector<4x4xf32> to vector<4x4xbf16>
    %30 = arith.truncf %15 : vector<4x128xf32> to vector<4x128xbf16>
    %cst_14 = arith.constant dense<0.000000e+00> : vector<4x128xf32>
    %31 = tpu.matmul %29, %30, %cst_14 {dimension_numbers = #tpu.dot_dimension_numbers<[1], [0], [0], [1], [0, 0, 1, 1], [], []>} : vector<4x4xbf16>, vector<4x128xbf16>, vector<4x128xf32> -> vector<4x128xf32>
    %32 = arith.truncf %31 : vector<4x128xf32> to vector<4x128xbf16>
    %33 = vector.extract_strided_slice %5 {offsets = [0, 0], sizes = [128, 16], strides = [1, 1]} : vector<256x16xbf16> to vector<128x16xbf16>
    %cst_15 = arith.constant dense<0.000000e+00> : vector<4x16xf32>
    %34 = tpu.matmul %32, %33, %cst_15 {dimension_numbers = #tpu.dot_dimension_numbers<[1], [0], [0], [1], [0, 0, 1, 1], [], []>} : vector<4x128xbf16>, vector<128x16xbf16>, vector<4x16xf32> -> vector<4x16xf32>
    %35 = vector.extract_strided_slice %12 {offsets = [0, 384], sizes = [4, 128], strides = [1, 1]} : vector<4x768xf32> to vector<4x128xf32>
    %36 = vector.extract_strided_slice %12 {offsets = [0, 512], sizes = [4, 128], strides = [1, 1]} : vector<4x768xf32> to vector<4x128xf32>
    %37 = vector.extract_strided_slice %12 {offsets = [0, 640], sizes = [4, 128], strides = [1, 1]} : vector<4x768xf32> to vector<4x128xf32>
    %38 = arith.truncf %35 : vector<4x128xf32> to vector<4x128xbf16>
    %39 = arith.truncf %36 : vector<4x128xf32> to vector<4x128xbf16>
    %cst_16 = arith.constant dense<0.000000e+00> : vector<4x4xf32>
    %40 = tpu.matmul %38, %39, %cst_16 {dimension_numbers = #tpu.dot_dimension_numbers<[1], [1], [0], [0], [0, 0, 1, 0], [], []>} : vector<4x128xbf16>, vector<4x128xbf16>, vector<4x4xf32> -> vector<4x4xf32>
    %cst_17 = arith.constant dense<0xFF800000> : vector<4xf32>
    %41 = vector.multi_reduction <maximumf>, %40, %cst_17 [1] : vector<4x4xf32> to vector<4xf32>
    %42 = vector.shape_cast %41 : vector<4xf32> to vector<4x1xf32>
    %43 = vector.broadcast %42 : vector<4x1xf32> to vector<4x4xf32>
    %44 = arith.subf %40, %43 : vector<4x4xf32>
    %45 = math.exp %44 : vector<4x4xf32>
    %cst_18 = arith.constant dense<0.000000e+00> : vector<4xf32>
    %46 = vector.multi_reduction <add>, %45, %cst_18 [1] : vector<4x4xf32> to vector<4xf32>
    %47 = vector.shape_cast %46 : vector<4xf32> to vector<4x1xf32>
    %48 = tpu.reciprocal %47 {approx = true} : vector<4x1xf32> -> vector<4x1xf32>
    %49 = vector.broadcast %48 : vector<4x1xf32> to vector<4x4xf32>
    %50 = arith.mulf %45, %49 : vector<4x4xf32>
    %51 = arith.truncf %50 : vector<4x4xf32> to vector<4x4xbf16>
    %52 = arith.truncf %37 : vector<4x128xf32> to vector<4x128xbf16>
    %cst_19 = arith.constant dense<0.000000e+00> : vector<4x128xf32>
    %53 = tpu.matmul %51, %52, %cst_19 {dimension_numbers = #tpu.dot_dimension_numbers<[1], [0], [0], [1], [0, 0, 1, 1], [], []>} : vector<4x4xbf16>, vector<4x128xbf16>, vector<4x128xf32> -> vector<4x128xf32>
    %54 = arith.truncf %53 : vector<4x128xf32> to vector<4x128xbf16>
    %55 = vector.extract_strided_slice %5 {offsets = [128, 0], sizes = [128, 16], strides = [1, 1]} : vector<256x16xbf16> to vector<128x16xbf16>
    %cst_20 = arith.constant dense<0.000000e+00> : vector<4x16xf32>
    %56 = tpu.matmul %54, %55, %cst_20 {dimension_numbers = #tpu.dot_dimension_numbers<[1], [0], [0], [1], [0, 0, 1, 1], [], []>} : vector<4x128xbf16>, vector<128x16xbf16>, vector<4x16xf32> -> vector<4x16xf32>
    %57 = arith.addf %34, %56 : vector<4x16xf32>
    %58 = vector.extract_strided_slice %7 {offsets = [1, 0], sizes = [1, 16], strides = [1, 1]} : vector<8x768xf32> to vector<1x16xf32>
    %59 = vector.broadcast %58 : vector<1x16xf32> to vector<4x16xf32>
    %60 = arith.addf %57, %59 : vector<4x16xf32>
    %61 = arith.addf %1, %60 : vector<4x16xf32>
    %62 = vector.extract_strided_slice %7 {offsets = [2, 0], sizes = [1, 16], strides = [1, 1]} : vector<8x768xf32> to vector<1x16xf32>
    %63 = vector.extract_strided_slice %7 {offsets = [3, 0], sizes = [1, 16], strides = [1, 1]} : vector<8x768xf32> to vector<1x16xf32>
    %cst_21 = arith.constant dense<0.000000e+00> : vector<4xf32>
    %64 = vector.multi_reduction <add>, %61, %cst_21 [1] : vector<4x16xf32> to vector<4xf32>
    %65 = vector.shape_cast %64 : vector<4xf32> to vector<4x1xf32>
    %cst_22 = arith.constant 1.600000e+01 : f32
    %66 = vector.broadcast %cst_22 : f32 to vector<4x1xf32>
    %67 = arith.divf %65, %66 : vector<4x1xf32>
    %68 = vector.broadcast %67 : vector<4x1xf32> to vector<4x16xf32>
    %69 = arith.subf %61, %68 : vector<4x16xf32>
    %70 = arith.mulf %69, %69 : vector<4x16xf32>
    %cst_23 = arith.constant dense<0.000000e+00> : vector<4xf32>
    %71 = vector.multi_reduction <add>, %70, %cst_23 [1] : vector<4x16xf32> to vector<4xf32>
    %72 = vector.shape_cast %71 : vector<4xf32> to vector<4x1xf32>
    %cst_24 = arith.constant 1.600000e+01 : f32
    %73 = vector.broadcast %cst_24 : f32 to vector<4x1xf32>
    %74 = arith.divf %72, %73 : vector<4x1xf32>
    %75 = vector.broadcast %67 : vector<4x1xf32> to vector<4x16xf32>
    %76 = arith.subf %61, %75 : vector<4x16xf32>
    %cst_25 = arith.constant 9.99999974E-6 : f32
    %77 = vector.broadcast %cst_25 : f32 to vector<4x1xf32>
    %78 = arith.addf %74, %77 : vector<4x1xf32>
    %79 = math.rsqrt %78 : vector<4x1xf32>
    %80 = vector.broadcast %79 : vector<4x1xf32> to vector<4x16xf32>
    %81 = arith.mulf %76, %80 : vector<4x16xf32>
    %82 = vector.broadcast %62 : vector<1x16xf32> to vector<4x16xf32>
    %83 = arith.mulf %81, %82 : vector<4x16xf32>
    %84 = vector.broadcast %63 : vector<1x16xf32> to vector<4x16xf32>
    %85 = arith.addf %83, %84 : vector<4x16xf32>
    %86 = arith.truncf %85 : vector<4x16xf32> to vector<4x16xbf16>
    %c0_26 = arith.constant 0 : index
    %c0_27 = arith.constant 0 : index
    %c0_28 = arith.constant 0 : index
    %87 = vector.load %arg3[%c0_26, %c0_27, %c0_28] : memref<4x16x32xbf16, #tpu.memory_space<vmem>>, vector<1x16x32xbf16>
    %88 = vector.shape_cast %87 : vector<1x16x32xbf16> to vector<16x32xbf16>
    %cst_29 = arith.constant dense<0.000000e+00> : vector<4x32xf32>
    %89 = tpu.matmul %86, %88, %cst_29 {dimension_numbers = #tpu.dot_dimension_numbers<[1], [0], [0], [1], [0, 0, 1, 1], [], []>} : vector<4x16xbf16>, vector<16x32xbf16>, vector<4x32xf32> -> vector<4x32xf32>
    %90 = vector.extract_strided_slice %7 {offsets = [4, 0], sizes = [1, 32], strides = [1, 1]} : vector<8x768xf32> to vector<1x32xf32>
    %91 = vector.broadcast %90 : vector<1x32xf32> to vector<4x32xf32>
    %92 = arith.addf %89, %91 : vector<4x32xf32>
    %cst_30 = arith.constant 0.000000e+00 : f32
    %93 = vector.broadcast %cst_30 : f32 to vector<4x32xf32>
    %94 = arith.maximumf %92, %93 : vector<4x32xf32>
    %95 = arith.truncf %94 : vector<4x32xf32> to vector<4x32xbf16>
    %c0_31 = arith.constant 0 : index
    %c0_32 = arith.constant 0 : index
    %c0_33 = arith.constant 0 : index
    %96 = vector.load %arg4[%c0_31, %c0_32, %c0_33] : memref<4x32x16xbf16, #tpu.memory_space<vmem>>, vector<1x32x16xbf16>
    %97 = vector.shape_cast %96 : vector<1x32x16xbf16> to vector<32x16xbf16>
    %cst_34 = arith.constant dense<0.000000e+00> : vector<4x16xf32>
    %98 = tpu.matmul %95, %97, %cst_34 {dimension_numbers = #tpu.dot_dimension_numbers<[1], [0], [0], [1], [0, 0, 1, 1], [], []>} : vector<4x32xbf16>, vector<32x16xbf16>, vector<4x16xf32> -> vector<4x16xf32>
    %99 = vector.extract_strided_slice %7 {offsets = [5, 0], sizes = [1, 16], strides = [1, 1]} : vector<8x768xf32> to vector<1x16xf32>
    %100 = vector.broadcast %99 : vector<1x16xf32> to vector<4x16xf32>
    %101 = arith.addf %98, %100 : vector<4x16xf32>
    %102 = arith.addf %85, %101 : vector<4x16xf32>
    %103 = vector.extract_strided_slice %7 {offsets = [6, 0], sizes = [1, 16], strides = [1, 1]} : vector<8x768xf32> to vector<1x16xf32>
    %104 = vector.extract_strided_slice %7 {offsets = [7, 0], sizes = [1, 16], strides = [1, 1]} : vector<8x768xf32> to vector<1x16xf32>
    %cst_35 = arith.constant dense<0.000000e+00> : vector<4xf32>
    %105 = vector.multi_reduction <add>, %102, %cst_35 [1] : vector<4x16xf32> to vector<4xf32>
    %106 = vector.shape_cast %105 : vector<4xf32> to vector<4x1xf32>
    %cst_36 = arith.constant 1.600000e+01 : f32
    %107 = vector.broadcast %cst_36 : f32 to vector<4x1xf32>
    %108 = arith.divf %106, %107 : vector<4x1xf32>
    %109 = vector.broadcast %108 : vector<4x1xf32> to vector<4x16xf32>
    %110 = arith.subf %102, %109 : vector<4x16xf32>
    %111 = arith.mulf %110, %110 : vector<4x16xf32>
    %cst_37 = arith.constant dense<0.000000e+00> : vector<4xf32>
    %112 = vector.multi_reduction <add>, %111, %cst_37 [1] : vector<4x16xf32> to vector<4xf32>
    %113 = vector.shape_cast %112 : vector<4xf32> to vector<4x1xf32>
    %cst_38 = arith.constant 1.600000e+01 : f32
    %114 = vector.broadcast %cst_38 : f32 to vector<4x1xf32>
    %115 = arith.divf %113, %114 : vector<4x1xf32>
    %116 = vector.broadcast %108 : vector<4x1xf32> to vector<4x16xf32>
    %117 = arith.subf %102, %116 : vector<4x16xf32>
    %cst_39 = arith.constant 9.99999974E-6 : f32
    %118 = vector.broadcast %cst_39 : f32 to vector<4x1xf32>
    %119 = arith.addf %115, %118 : vector<4x1xf32>
    %120 = math.rsqrt %119 : vector<4x1xf32>
    %121 = vector.broadcast %120 : vector<4x1xf32> to vector<4x16xf32>
    %122 = arith.mulf %117, %121 : vector<4x16xf32>
    %123 = vector.broadcast %103 : vector<1x16xf32> to vector<4x16xf32>
    %124 = arith.mulf %122, %123 : vector<4x16xf32>
    %125 = vector.broadcast %104 : vector<1x16xf32> to vector<4x16xf32>
    %126 = arith.addf %124, %125 : vector<4x16xf32>
    %c1 = arith.constant 1 : index
    %c0_40 = arith.constant 0 : index
    %c0_41 = arith.constant 0 : index
    %127 = vector.load %arg1[%c1, %c0_40, %c0_41] : memref<4x16x768xbf16, #tpu.memory_space<vmem>>, vector<1x16x768xbf16>
    %128 = vector.shape_cast %127 : vector<1x16x768xbf16> to vector<16x768xbf16>
    %c1_42 = arith.constant 1 : index
    %c0_43 = arith.constant 0 : index
    %c0_44 = arith.constant 0 : index
    %129 = vector.load %arg2[%c1_42, %c0_43, %c0_44] : memref<4x256x16xbf16, #tpu.memory_space<vmem>>, vector<1x256x16xbf16>
    %130 = vector.shape_cast %129 : vector<1x256x16xbf16> to vector<256x16xbf16>
    %c1_45 = arith.constant 1 : index
    %c0_46 = arith.constant 0 : index
    %c0_47 = arith.constant 0 : index
    %131 = vector.load %arg5[%c1_45, %c0_46, %c0_47] : memref<4x8x768xf32, #tpu.memory_space<vmem>>, vector<1x8x768xf32>
    %132 = vector.shape_cast %131 : vector<1x8x768xf32> to vector<8x768xf32>
    %133 = arith.truncf %126 : vector<4x16xf32> to vector<4x16xbf16>
    %cst_48 = arith.constant dense<0.000000e+00> : vector<4x768xf32>
    %134 = tpu.matmul %133, %128, %cst_48 {dimension_numbers = #tpu.dot_dimension_numbers<[1], [0], [0], [1], [0, 0, 1, 1], [], []>} : vector<4x16xbf16>, vector<16x768xbf16>, vector<4x768xf32> -> vector<4x768xf32>
    %135 = vector.extract_strided_slice %132 {offsets = [0, 0], sizes = [1, 768], strides = [1, 1]} : vector<8x768xf32> to vector<1x768xf32>
    %136 = vector.broadcast %135 : vector<1x768xf32> to vector<4x768xf32>
    %137 = arith.addf %134, %136 : vector<4x768xf32>
    %138 = vector.extract_strided_slice %137 {offsets = [0, 0], sizes = [4, 128], strides = [1, 1]} : vector<4x768xf32> to vector<4x128xf32>
    %139 = vector.extract_strided_slice %137 {offsets = [0, 128], sizes = [4, 128], strides = [1, 1]} : vector<4x768xf32> to vector<4x128xf32>
    %140 = vector.extract_strided_slice %137 {offsets = [0, 256], sizes = [4, 128], strides = [1, 1]} : vector<4x768xf32> to vector<4x128xf32>
    %141 = arith.truncf %138 : vector<4x128xf32> to vector<4x128xbf16>
    %142 = arith.truncf %139 : vector<4x128xf32> to vector<4x128xbf16>
    %cst_49 = arith.constant dense<0.000000e+00> : vector<4x4xf32>
    %143 = tpu.matmul %141, %142, %cst_49 {dimension_numbers = #tpu.dot_dimension_numbers<[1], [1], [0], [0], [0, 0, 1, 0], [], []>} : vector<4x128xbf16>, vector<4x128xbf16>, vector<4x4xf32> -> vector<4x4xf32>
    %cst_50 = arith.constant dense<0xFF800000> : vector<4xf32>
    %144 = vector.multi_reduction <maximumf>, %143, %cst_50 [1] : vector<4x4xf32> to vector<4xf32>
    %145 = vector.shape_cast %144 : vector<4xf32> to vector<4x1xf32>
    %146 = vector.broadcast %145 : vector<4x1xf32> to vector<4x4xf32>
    %147 = arith.subf %143, %146 : vector<4x4xf32>
    %148 = math.exp %147 : vector<4x4xf32>
    %cst_51 = arith.constant dense<0.000000e+00> : vector<4xf32>
    %149 = vector.multi_reduction <add>, %148, %cst_51 [1] : vector<4x4xf32> to vector<4xf32>
    %150 = vector.shape_cast %149 : vector<4xf32> to vector<4x1xf32>
    %151 = tpu.reciprocal %150 {approx = true} : vector<4x1xf32> -> vector<4x1xf32>
    %152 = vector.broadcast %151 : vector<4x1xf32> to vector<4x4xf32>
    %153 = arith.mulf %148, %152 : vector<4x4xf32>
    %154 = arith.truncf %153 : vector<4x4xf32> to vector<4x4xbf16>
    %155 = arith.truncf %140 : vector<4x128xf32> to vector<4x128xbf16>
    %cst_52 = arith.constant dense<0.000000e+00> : vector<4x128xf32>
    %156 = tpu.matmul %154, %155, %cst_52 {dimension_numbers = #tpu.dot_dimension_numbers<[1], [0], [0], [1], [0, 0, 1, 1], [], []>} : vector<4x4xbf16>, vector<4x128xbf16>, vector<4x128xf32> -> vector<4x128xf32>
    %157 = arith.truncf %156 : vector<4x128xf32> to vector<4x128xbf16>
    %158 = vector.extract_strided_slice %130 {offsets = [0, 0], sizes = [128, 16], strides = [1, 1]} : vector<256x16xbf16> to vector<128x16xbf16>
    %cst_53 = arith.constant dense<0.000000e+00> : vector<4x16xf32>
    %159 = tpu.matmul %157, %158, %cst_53 {dimension_numbers = #tpu.dot_dimension_numbers<[1], [0], [0], [1], [0, 0, 1, 1], [], []>} : vector<4x128xbf16>, vector<128x16xbf16>, vector<4x16xf32> -> vector<4x16xf32>
    %160 = vector.extract_strided_slice %137 {offsets = [0, 384], sizes = [4, 128], strides = [1, 1]} : vector<4x768xf32> to vector<4x128xf32>
    %161 = vector.extract_strided_slice %137 {offsets = [0, 512], sizes = [4, 128], strides = [1, 1]} : vector<4x768xf32> to vector<4x128xf32>
    %162 = vector.extract_strided_slice %137 {offsets = [0, 640], sizes = [4, 128], strides = [1, 1]} : vector<4x768xf32> to vector<4x128xf32>
    %163 = arith.truncf %160 : vector<4x128xf32> to vector<4x128xbf16>
    %164 = arith.truncf %161 : vector<4x128xf32> to vector<4x128xbf16>
    %cst_54 = arith.constant dense<0.000000e+00> : vector<4x4xf32>
    %165 = tpu.matmul %163, %164, %cst_54 {dimension_numbers = #tpu.dot_dimension_numbers<[1], [1], [0], [0], [0, 0, 1, 0], [], []>} : vector<4x128xbf16>, vector<4x128xbf16>, vector<4x4xf32> -> vector<4x4xf32>
    %cst_55 = arith.constant dense<0xFF800000> : vector<4xf32>
    %166 = vector.multi_reduction <maximumf>, %165, %cst_55 [1] : vector<4x4xf32> to vector<4xf32>
    %167 = vector.shape_cast %166 : vector<4xf32> to vector<4x1xf32>
    %168 = vector.broadcast %167 : vector<4x1xf32> to vector<4x4xf32>
    %169 = arith.subf %165, %168 : vector<4x4xf32>
    %170 = math.exp %169 : vector<4x4xf32>
    %cst_56 = arith.constant dense<0.000000e+00> : vector<4xf32>
    %171 = vector.multi_reduction <add>, %170, %cst_56 [1] : vector<4x4xf32> to vector<4xf32>
    %172 = vector.shape_cast %171 : vector<4xf32> to vector<4x1xf32>
    %173 = tpu.reciprocal %172 {approx = true} : vector<4x1xf32> -> vector<4x1xf32>
    %174 = vector.broadcast %173 : vector<4x1xf32> to vector<4x4xf32>
    %175 = arith.mulf %170, %174 : vector<4x4xf32>
    %176 = arith.truncf %175 : vector<4x4xf32> to vector<4x4xbf16>
    %177 = arith.truncf %162 : vector<4x128xf32> to vector<4x128xbf16>
    %cst_57 = arith.constant dense<0.000000e+00> : vector<4x128xf32>
    %178 = tpu.matmul %176, %177, %cst_57 {dimension_numbers = #tpu.dot_dimension_numbers<[1], [0], [0], [1], [0, 0, 1, 1], [], []>} : vector<4x4xbf16>, vector<4x128xbf16>, vector<4x128xf32> -> vector<4x128xf32>
    %179 = arith.truncf %178 : vector<4x128xf32> to vector<4x128xbf16>
    %180 = vector.extract_strided_slice %130 {offsets = [128, 0], sizes = [128, 16], strides = [1, 1]} : vector<256x16xbf16> to vector<128x16xbf16>
    %cst_58 = arith.constant dense<0.000000e+00> : vector<4x16xf32>
    %181 = tpu.matmul %179, %180, %cst_58 {dimension_numbers = #tpu.dot_dimension_numbers<[1], [0], [0], [1], [0, 0, 1, 1], [], []>} : vector<4x128xbf16>, vector<128x16xbf16>, vector<4x16xf32> -> vector<4x16xf32>
    %182 = arith.addf %159, %181 : vector<4x16xf32>
    %183 = vector.extract_strided_slice %132 {offsets = [1, 0], sizes = [1, 16], strides = [1, 1]} : vector<8x768xf32> to vector<1x16xf32>
    %184 = vector.broadcast %183 : vector<1x16xf32> to vector<4x16xf32>
    %185 = arith.addf %182, %184 : vector<4x16xf32>
    %186 = arith.addf %126, %185 : vector<4x16xf32>
    %187 = vector.extract_strided_slice %132 {offsets = [2, 0], sizes = [1, 16], strides = [1, 1]} : vector<8x768xf32> to vector<1x16xf32>
    %188 = vector.extract_strided_slice %132 {offsets = [3, 0], sizes = [1, 16], strides = [1, 1]} : vector<8x768xf32> to vector<1x16xf32>
    %cst_59 = arith.constant dense<0.000000e+00> : vector<4xf32>
    %189 = vector.multi_reduction <add>, %186, %cst_59 [1] : vector<4x16xf32> to vector<4xf32>
    %190 = vector.shape_cast %189 : vector<4xf32> to vector<4x1xf32>
    %cst_60 = arith.constant 1.600000e+01 : f32
    %191 = vector.broadcast %cst_60 : f32 to vector<4x1xf32>
    %192 = arith.divf %190, %191 : vector<4x1xf32>
    %193 = vector.broadcast %192 : vector<4x1xf32> to vector<4x16xf32>
    %194 = arith.subf %186, %193 : vector<4x16xf32>
    %195 = arith.mulf %194, %194 : vector<4x16xf32>
    %cst_61 = arith.constant dense<0.000000e+00> : vector<4xf32>
    %196 = vector.multi_reduction <add>, %195, %cst_61 [1] : vector<4x16xf32> to vector<4xf32>
    %197 = vector.shape_cast %196 : vector<4xf32> to vector<4x1xf32>
    %cst_62 = arith.constant 1.600000e+01 : f32
    %198 = vector.broadcast %cst_62 : f32 to vector<4x1xf32>
    %199 = arith.divf %197, %198 : vector<4x1xf32>
    %200 = vector.broadcast %192 : vector<4x1xf32> to vector<4x16xf32>
    %201 = arith.subf %186, %200 : vector<4x16xf32>
    %cst_63 = arith.constant 9.99999974E-6 : f32
    %202 = vector.broadcast %cst_63 : f32 to vector<4x1xf32>
    %203 = arith.addf %199, %202 : vector<4x1xf32>
    %204 = math.rsqrt %203 : vector<4x1xf32>
    %205 = vector.broadcast %204 : vector<4x1xf32> to vector<4x16xf32>
    %206 = arith.mulf %201, %205 : vector<4x16xf32>
    %207 = vector.broadcast %187 : vector<1x16xf32> to vector<4x16xf32>
    %208 = arith.mulf %206, %207 : vector<4x16xf32>
    %209 = vector.broadcast %188 : vector<1x16xf32> to vector<4x16xf32>
    %210 = arith.addf %208, %209 : vector<4x16xf32>
    %211 = arith.truncf %210 : vector<4x16xf32> to vector<4x16xbf16>
    %c1_64 = arith.constant 1 : index
    %c0_65 = arith.constant 0 : index
    %c0_66 = arith.constant 0 : index
    %212 = vector.load %arg3[%c1_64, %c0_65, %c0_66] : memref<4x16x32xbf16, #tpu.memory_space<vmem>>, vector<1x16x32xbf16>
    %213 = vector.shape_cast %212 : vector<1x16x32xbf16> to vector<16x32xbf16>
    %cst_67 = arith.constant dense<0.000000e+00> : vector<4x32xf32>
    %214 = tpu.matmul %211, %213, %cst_67 {dimension_numbers = #tpu.dot_dimension_numbers<[1], [0], [0], [1], [0, 0, 1, 1], [], []>} : vector<4x16xbf16>, vector<16x32xbf16>, vector<4x32xf32> -> vector<4x32xf32>
    %215 = vector.extract_strided_slice %132 {offsets = [4, 0], sizes = [1, 32], strides = [1, 1]} : vector<8x768xf32> to vector<1x32xf32>
    %216 = vector.broadcast %215 : vector<1x32xf32> to vector<4x32xf32>
    %217 = arith.addf %214, %216 : vector<4x32xf32>
    %cst_68 = arith.constant 0.000000e+00 : f32
    %218 = vector.broadcast %cst_68 : f32 to vector<4x32xf32>
    %219 = arith.maximumf %217, %218 : vector<4x32xf32>
    %220 = arith.truncf %219 : vector<4x32xf32> to vector<4x32xbf16>
    %c1_69 = arith.constant 1 : index
    %c0_70 = arith.constant 0 : index
    %c0_71 = arith.constant 0 : index
    %221 = vector.load %arg4[%c1_69, %c0_70, %c0_71] : memref<4x32x16xbf16, #tpu.memory_space<vmem>>, vector<1x32x16xbf16>
    %222 = vector.shape_cast %221 : vector<1x32x16xbf16> to vector<32x16xbf16>
    %cst_72 = arith.constant dense<0.000000e+00> : vector<4x16xf32>
    %223 = tpu.matmul %220, %222, %cst_72 {dimension_numbers = #tpu.dot_dimension_numbers<[1], [0], [0], [1], [0, 0, 1, 1], [], []>} : vector<4x32xbf16>, vector<32x16xbf16>, vector<4x16xf32> -> vector<4x16xf32>
    %224 = vector.extract_strided_slice %132 {offsets = [5, 0], sizes = [1, 16], strides = [1, 1]} : vector<8x768xf32> to vector<1x16xf32>
    %225 = vector.broadcast %224 : vector<1x16xf32> to vector<4x16xf32>
    %226 = arith.addf %223, %225 : vector<4x16xf32>
    %227 = arith.addf %210, %226 : vector<4x16xf32>
    %228 = vector.extract_strided_slice %132 {offsets = [6, 0], sizes = [1, 16], strides = [1, 1]} : vector<8x768xf32> to vector<1x16xf32>
    %229 = vector.extract_strided_slice %132 {offsets = [7, 0], sizes = [1, 16], strides = [1, 1]} : vector<8x768xf32> to vector<1x16xf32>
    %cst_73 = arith.constant dense<0.000000e+00> : vector<4xf32>
    %230 = vector.multi_reduction <add>, %227, %cst_73 [1] : vector<4x16xf32> to vector<4xf32>
    %231 = vector.shape_cast %230 : vector<4xf32> to vector<4x1xf32>
    %cst_74 = arith.constant 1.600000e+01 : f32
    %232 = vector.broadcast %cst_74 : f32 to vector<4x1xf32>
    %233 = arith.divf %231, %232 : vector<4x1xf32>
    %234 = vector.broadcast %233 : vector<4x1xf32> to vector<4x16xf32>
    %235 = arith.subf %227, %234 : vector<4x16xf32>
    %236 = arith.mulf %235, %235 : vector<4x16xf32>
    %cst_75 = arith.constant dense<0.000000e+00> : vector<4xf32>
    %237 = vector.multi_reduction <add>, %236, %cst_75 [1] : vector<4x16xf32> to vector<4xf32>
    %238 = vector.shape_cast %237 : vector<4xf32> to vector<4x1xf32>
    %cst_76 = arith.constant 1.600000e+01 : f32
    %239 = vector.broadcast %cst_76 : f32 to vector<4x1xf32>
    %240 = arith.divf %238, %239 : vector<4x1xf32>
    %241 = vector.broadcast %233 : vector<4x1xf32> to vector<4x16xf32>
    %242 = arith.subf %227, %241 : vector<4x16xf32>
    %cst_77 = arith.constant 9.99999974E-6 : f32
    %243 = vector.broadcast %cst_77 : f32 to vector<4x1xf32>
    %244 = arith.addf %240, %243 : vector<4x1xf32>
    %245 = math.rsqrt %244 : vector<4x1xf32>
    %246 = vector.broadcast %245 : vector<4x1xf32> to vector<4x16xf32>
    %247 = arith.mulf %242, %246 : vector<4x16xf32>
    %248 = vector.broadcast %228 : vector<1x16xf32> to vector<4x16xf32>
    %249 = arith.mulf %247, %248 : vector<4x16xf32>
    %250 = vector.broadcast %229 : vector<1x16xf32> to vector<4x16xf32>
    %251 = arith.addf %249, %250 : vector<4x16xf32>
    %cst_78 = arith.constant 0.000000e+00 : f32
    %252 = vector.broadcast %cst_78 : f32 to vector<4x112xf32>
    %253 = tpu.concatenate %251, %252 in 1 : vector<4x16xf32>, vector<4x112xf32> -> vector<4x128xf32>
    %c0_79 = arith.constant 0 : index
    %c0_80 = arith.constant 0 : index
    %c0_81 = arith.constant 0 : index
    %254 = vector.load %arg9[%c0_79, %c0_80, %c0_81] : memref<2x4x128xf32, #tpu.memory_space<vmem>>, vector<1x4x128xf32>
    %255 = vector.shape_cast %254 : vector<1x4x128xf32> to vector<4x128xf32>
    %256 = vector.shape_cast %253 : vector<4x128xf32> to vector<1x4x128xf32>
    tpu.vector_store %arg9[%c0_79, %c0_80, %c0_81], %256 {strides = array<i32>} : memref<2x4x128xf32, #tpu.memory_space<vmem>>, vector<1x4x128xf32>,
    %c0_82 = arith.constant 0 : index
    %c0_83 = arith.constant 0 : index
    %c0_84 = arith.constant 0 : index
    %257 = vector.load %arg8[%c0_82, %c0_83, %c0_84] : memref<2x2x256xf32, #tpu.memory_space<vmem>>, vector<1x2x256xf32>
    %258 = vector.shape_cast %257 : vector<1x2x256xf32> to vector<2x256xf32>
    %259 = arith.truncf %251 : vector<4x16xf32> to vector<4x16xbf16>
    %c0_85 = arith.constant 0 : index
    %c0_86 = arith.constant 0 : index
    %c0_87 = arith.constant 0 : index
    %260 = vector.load %arg6[%c0_85, %c0_86, %c0_87] : memref<2x16x256xbf16, #tpu.memory_space<vmem>>, vector<1x16x256xbf16>
    %261 = vector.shape_cast %260 : vector<1x16x256xbf16> to vector<16x256xbf16>
    %cst_88 = arith.constant dense<0.000000e+00> : vector<4x256xf32>
    %262 = tpu.matmul %259, %261, %cst_88 {dimension_numbers = #tpu.dot_dimension_numbers<[1], [0], [0], [1], [0, 0, 1, 1], [], []>} : vector<4x16xbf16>, vector<16x256xbf16>, vector<4x256xf32> -> vector<4x256xf32>
    %263 = vector.extract_strided_slice %258 {offsets = [0, 0], sizes = [1, 256], strides = [1, 1]} : vector<2x256xf32> to vector<1x256xf32>
    %264 = vector.broadcast %263 : vector<1x256xf32> to vector<4x256xf32>
    %265 = arith.addf %262, %264 : vector<4x256xf32>
    %cst_89 = arith.constant 0.000000e+00 : f32
    %266 = vector.broadcast %cst_89 : f32 to vector<4x256xf32>
    %267 = arith.maximumf %265, %266 : vector<4x256xf32>
    %268 = arith.truncf %267 : vector<4x256xf32> to vector<4x256xbf16>
    %c0_90 = arith.constant 0 : index
    %c0_91 = arith.constant 0 : index
    %c0_92 = arith.constant 0 : index
    %269 = vector.load %arg7[%c0_90, %c0_91, %c0_92] : memref<2x256x128xbf16, #tpu.memory_space<vmem>>, vector<1x256x128xbf16>
    %270 = vector.shape_cast %269 : vector<1x256x128xbf16> to vector<256x128xbf16>
    %cst_93 = arith.constant dense<0.000000e+00> : vector<4x128xf32>
    %271 = tpu.matmul %268, %270, %cst_93 {dimension_numbers = #tpu.dot_dimension_numbers<[1], [0], [0], [1], [0, 0, 1, 1], [], []>} : vector<4x256xbf16>, vector<256x128xbf16>, vector<4x128xf32> -> vector<4x128xf32>
    %272 = vector.extract_strided_slice %258 {offsets = [1, 0], sizes = [1, 128], strides = [1, 1]} : vector<2x256xf32> to vector<1x128xf32>
    %273 = vector.broadcast %272 : vector<1x128xf32> to vector<4x128xf32>
    %274 = arith.addf %271, %273 : vector<4x128xf32>
    %c0_94 = arith.constant 0 : index
    %c0_95 = arith.constant 0 : index
    %c0_96 = arith.constant 0 : index
    %275 = vector.load %arg10[%c0_94, %c0_95, %c0_96] : memref<2x4x128xf32, #tpu.memory_space<vmem>>, vector<1x4x128xf32>
    %276 = vector.shape_cast %275 : vector<1x4x128xf32> to vector<4x128xf32>
    %277 = vector.shape_cast %274 : vector<4x128xf32> to vector<1x4x128xf32>
    tpu.vector_store %arg10[%c0_94, %c0_95, %c0_96], %277 {strides = array<i32>} : memref<2x4x128xf32, #tpu.memory_space<vmem>>, vector<1x4x128xf32>,
    %c1_97 = arith.constant 1 : index
    %c0_98 = arith.constant 0 : index
    %c0_99 = arith.constant 0 : index
    %278 = vector.load %arg0[%c1_97, %c0_98, %c0_99] : memref<2x4x16xf32, #tpu.memory_space<vmem>>, vector<1x4x16xf32>
    %279 = vector.shape_cast %278 : vector<1x4x16xf32> to vector<4x16xf32>
    %c2 = arith.constant 2 : index
    %c0_100 = arith.constant 0 : index
    %c0_101 = arith.constant 0 : index
    %280 = vector.load %arg1[%c2, %c0_100, %c0_101] : memref<4x16x768xbf16, #tpu.memory_space<vmem>>, vector<1x16x768xbf16>
    %281 = vector.shape_cast %280 : vector<1x16x768xbf16> to vector<16x768xbf16>
    %c2_102 = arith.constant 2 : index
    %c0_103 = arith.constant 0 : index
    %c0_104 = arith.constant 0 : index
    %282 = vector.load %arg2[%c2_102, %c0_103, %c0_104] : memref<4x256x16xbf16, #tpu.memory_space<vmem>>, vector<1x256x16xbf16>
    %283 = vector.shape_cast %282 : vector<1x256x16xbf16> to vector<256x16xbf16>
    %c2_105 = arith.constant 2 : index
    %c0_106 = arith.constant 0 : index
    %c0_107 = arith.constant 0 : index
    %284 = vector.load %arg5[%c2_105, %c0_106, %c0_107] : memref<4x8x768xf32, #tpu.memory_space<vmem>>, vector<1x8x768xf32>
    %285 = vector.shape_cast %284 : vector<1x8x768xf32> to vector<8x768xf32>
    %286 = arith.truncf %279 : vector<4x16xf32> to vector<4x16xbf16>
    %cst_108 = arith.constant dense<0.000000e+00> : vector<4x768xf32>
    %287 = tpu.matmul %286, %281, %cst_108 {dimension_numbers = #tpu.dot_dimension_numbers<[1], [0], [0], [1], [0, 0, 1, 1], [], []>} : vector<4x16xbf16>, vector<16x768xbf16>, vector<4x768xf32> -> vector<4x768xf32>
    %288 = vector.extract_strided_slice %285 {offsets = [0, 0], sizes = [1, 768], strides = [1, 1]} : vector<8x768xf32> to vector<1x768xf32>
    %289 = vector.broadcast %288 : vector<1x768xf32> to vector<4x768xf32>
    %290 = arith.addf %287, %289 : vector<4x768xf32>
    %291 = vector.extract_strided_slice %290 {offsets = [0, 0], sizes = [4, 128], strides = [1, 1]} : vector<4x768xf32> to vector<4x128xf32>
    %292 = vector.extract_strided_slice %290 {offsets = [0, 128], sizes = [4, 128], strides = [1, 1]} : vector<4x768xf32> to vector<4x128xf32>
    %293 = vector.extract_strided_slice %290 {offsets = [0, 256], sizes = [4, 128], strides = [1, 1]} : vector<4x768xf32> to vector<4x128xf32>
    %294 = arith.truncf %291 : vector<4x128xf32> to vector<4x128xbf16>
    %295 = arith.truncf %292 : vector<4x128xf32> to vector<4x128xbf16>
    %cst_109 = arith.constant dense<0.000000e+00> : vector<4x4xf32>
    %296 = tpu.matmul %294, %295, %cst_109 {dimension_numbers = #tpu.dot_dimension_numbers<[1], [1], [0], [0], [0, 0, 1, 0], [], []>} : vector<4x128xbf16>, vector<4x128xbf16>, vector<4x4xf32> -> vector<4x4xf32>
    %cst_110 = arith.constant dense<0xFF800000> : vector<4xf32>
    %297 = vector.multi_reduction <maximumf>, %296, %cst_110 [1] : vector<4x4xf32> to vector<4xf32>
    %298 = vector.shape_cast %297 : vector<4xf32> to vector<4x1xf32>
    %299 = vector.broadcast %298 : vector<4x1xf32> to vector<4x4xf32>
    %300 = arith.subf %296, %299 : vector<4x4xf32>
    %301 = math.exp %300 : vector<4x4xf32>
    %cst_111 = arith.constant dense<0.000000e+00> : vector<4xf32>
    %302 = vector.multi_reduction <add>, %301, %cst_111 [1] : vector<4x4xf32> to vector<4xf32>
    %303 = vector.shape_cast %302 : vector<4xf32> to vector<4x1xf32>
    %304 = tpu.reciprocal %303 {approx = true} : vector<4x1xf32> -> vector<4x1xf32>
    %305 = vector.broadcast %304 : vector<4x1xf32> to vector<4x4xf32>
    %306 = arith.mulf %301, %305 : vector<4x4xf32>
    %307 = arith.truncf %306 : vector<4x4xf32> to vector<4x4xbf16>
    %308 = arith.truncf %293 : vector<4x128xf32> to vector<4x128xbf16>
    %cst_112 = arith.constant dense<0.000000e+00> : vector<4x128xf32>
    %309 = tpu.matmul %307, %308, %cst_112 {dimension_numbers = #tpu.dot_dimension_numbers<[1], [0], [0], [1], [0, 0, 1, 1], [], []>} : vector<4x4xbf16>, vector<4x128xbf16>, vector<4x128xf32> -> vector<4x128xf32>
    %310 = arith.truncf %309 : vector<4x128xf32> to vector<4x128xbf16>
    %311 = vector.extract_strided_slice %283 {offsets = [0, 0], sizes = [128, 16], strides = [1, 1]} : vector<256x16xbf16> to vector<128x16xbf16>
    %cst_113 = arith.constant dense<0.000000e+00> : vector<4x16xf32>
    %312 = tpu.matmul %310, %311, %cst_113 {dimension_numbers = #tpu.dot_dimension_numbers<[1], [0], [0], [1], [0, 0, 1, 1], [], []>} : vector<4x128xbf16>, vector<128x16xbf16>, vector<4x16xf32> -> vector<4x16xf32>
    %313 = vector.extract_strided_slice %290 {offsets = [0, 384], sizes = [4, 128], strides = [1, 1]} : vector<4x768xf32> to vector<4x128xf32>
    %314 = vector.extract_strided_slice %290 {offsets = [0, 512], sizes = [4, 128], strides = [1, 1]} : vector<4x768xf32> to vector<4x128xf32>
    %315 = vector.extract_strided_slice %290 {offsets = [0, 640], sizes = [4, 128], strides = [1, 1]} : vector<4x768xf32> to vector<4x128xf32>
    %316 = arith.truncf %313 : vector<4x128xf32> to vector<4x128xbf16>
    %317 = arith.truncf %314 : vector<4x128xf32> to vector<4x128xbf16>
    %cst_114 = arith.constant dense<0.000000e+00> : vector<4x4xf32>
    %318 = tpu.matmul %316, %317, %cst_114 {dimension_numbers = #tpu.dot_dimension_numbers<[1], [1], [0], [0], [0, 0, 1, 0], [], []>} : vector<4x128xbf16>, vector<4x128xbf16>, vector<4x4xf32> -> vector<4x4xf32>
    %cst_115 = arith.constant dense<0xFF800000> : vector<4xf32>
    %319 = vector.multi_reduction <maximumf>, %318, %cst_115 [1] : vector<4x4xf32> to vector<4xf32>
    %320 = vector.shape_cast %319 : vector<4xf32> to vector<4x1xf32>
    %321 = vector.broadcast %320 : vector<4x1xf32> to vector<4x4xf32>
    %322 = arith.subf %318, %321 : vector<4x4xf32>
    %323 = math.exp %322 : vector<4x4xf32>
    %cst_116 = arith.constant dense<0.000000e+00> : vector<4xf32>
    %324 = vector.multi_reduction <add>, %323, %cst_116 [1] : vector<4x4xf32> to vector<4xf32>
    %325 = vector.shape_cast %324 : vector<4xf32> to vector<4x1xf32>
    %326 = tpu.reciprocal %325 {approx = true} : vector<4x1xf32> -> vector<4x1xf32>
    %327 = vector.broadcast %326 : vector<4x1xf32> to vector<4x4xf32>
    %328 = arith.mulf %323, %327 : vector<4x4xf32>
    %329 = arith.truncf %328 : vector<4x4xf32> to vector<4x4xbf16>
    %330 = arith.truncf %315 : vector<4x128xf32> to vector<4x128xbf16>
    %cst_117 = arith.constant dense<0.000000e+00> : vector<4x128xf32>
    %331 = tpu.matmul %329, %330, %cst_117 {dimension_numbers = #tpu.dot_dimension_numbers<[1], [0], [0], [1], [0, 0, 1, 1], [], []>} : vector<4x4xbf16>, vector<4x128xbf16>, vector<4x128xf32> -> vector<4x128xf32>
    %332 = arith.truncf %331 : vector<4x128xf32> to vector<4x128xbf16>
    %333 = vector.extract_strided_slice %283 {offsets = [128, 0], sizes = [128, 16], strides = [1, 1]} : vector<256x16xbf16> to vector<128x16xbf16>
    %cst_118 = arith.constant dense<0.000000e+00> : vector<4x16xf32>
    %334 = tpu.matmul %332, %333, %cst_118 {dimension_numbers = #tpu.dot_dimension_numbers<[1], [0], [0], [1], [0, 0, 1, 1], [], []>} : vector<4x128xbf16>, vector<128x16xbf16>, vector<4x16xf32> -> vector<4x16xf32>
    %335 = arith.addf %312, %334 : vector<4x16xf32>
    %336 = vector.extract_strided_slice %285 {offsets = [1, 0], sizes = [1, 16], strides = [1, 1]} : vector<8x768xf32> to vector<1x16xf32>
    %337 = vector.broadcast %336 : vector<1x16xf32> to vector<4x16xf32>
    %338 = arith.addf %335, %337 : vector<4x16xf32>
    %339 = arith.addf %279, %338 : vector<4x16xf32>
    %340 = vector.extract_strided_slice %285 {offsets = [2, 0], sizes = [1, 16], strides = [1, 1]} : vector<8x768xf32> to vector<1x16xf32>
    %341 = vector.extract_strided_slice %285 {offsets = [3, 0], sizes = [1, 16], strides = [1, 1]} : vector<8x768xf32> to vector<1x16xf32>
    %cst_119 = arith.constant dense<0.000000e+00> : vector<4xf32>
    %342 = vector.multi_reduction <add>, %339, %cst_119 [1] : vector<4x16xf32> to vector<4xf32>
    %343 = vector.shape_cast %342 : vector<4xf32> to vector<4x1xf32>
    %cst_120 = arith.constant 1.600000e+01 : f32
    %344 = vector.broadcast %cst_120 : f32 to vector<4x1xf32>
    %345 = arith.divf %343, %344 : vector<4x1xf32>
    %346 = vector.broadcast %345 : vector<4x1xf32> to vector<4x16xf32>
    %347 = arith.subf %339, %346 : vector<4x16xf32>
    %348 = arith.mulf %347, %347 : vector<4x16xf32>
    %cst_121 = arith.constant dense<0.000000e+00> : vector<4xf32>
    %349 = vector.multi_reduction <add>, %348, %cst_121 [1] : vector<4x16xf32> to vector<4xf32>
    %350 = vector.shape_cast %349 : vector<4xf32> to vector<4x1xf32>
    %cst_122 = arith.constant 1.600000e+01 : f32
    %351 = vector.broadcast %cst_122 : f32 to vector<4x1xf32>
    %352 = arith.divf %350, %351 : vector<4x1xf32>
    %353 = vector.broadcast %345 : vector<4x1xf32> to vector<4x16xf32>
    %354 = arith.subf %339, %353 : vector<4x16xf32>
    %cst_123 = arith.constant 9.99999974E-6 : f32
    %355 = vector.broadcast %cst_123 : f32 to vector<4x1xf32>
    %356 = arith.addf %352, %355 : vector<4x1xf32>
    %357 = math.rsqrt %356 : vector<4x1xf32>
    %358 = vector.broadcast %357 : vector<4x1xf32> to vector<4x16xf32>
    %359 = arith.mulf %354, %358 : vector<4x16xf32>
    %360 = vector.broadcast %340 : vector<1x16xf32> to vector<4x16xf32>
    %361 = arith.mulf %359, %360 : vector<4x16xf32>
    %362 = vector.broadcast %341 : vector<1x16xf32> to vector<4x16xf32>
    %363 = arith.addf %361, %362 : vector<4x16xf32>
    %364 = arith.truncf %363 : vector<4x16xf32> to vector<4x16xbf16>
    %c2_124 = arith.constant 2 : index
    %c0_125 = arith.constant 0 : index
    %c0_126 = arith.constant 0 : index
    %365 = vector.load %arg3[%c2_124, %c0_125, %c0_126] : memref<4x16x32xbf16, #tpu.memory_space<vmem>>, vector<1x16x32xbf16>
    %366 = vector.shape_cast %365 : vector<1x16x32xbf16> to vector<16x32xbf16>
    %cst_127 = arith.constant dense<0.000000e+00> : vector<4x32xf32>
    %367 = tpu.matmul %364, %366, %cst_127 {dimension_numbers = #tpu.dot_dimension_numbers<[1], [0], [0], [1], [0, 0, 1, 1], [], []>} : vector<4x16xbf16>, vector<16x32xbf16>, vector<4x32xf32> -> vector<4x32xf32>
    %368 = vector.extract_strided_slice %285 {offsets = [4, 0], sizes = [1, 32], strides = [1, 1]} : vector<8x768xf32> to vector<1x32xf32>
    %369 = vector.broadcast %368 : vector<1x32xf32> to vector<4x32xf32>
    %370 = arith.addf %367, %369 : vector<4x32xf32>
    %cst_128 = arith.constant 0.000000e+00 : f32
    %371 = vector.broadcast %cst_128 : f32 to vector<4x32xf32>
    %372 = arith.maximumf %370, %371 : vector<4x32xf32>
    %373 = arith.truncf %372 : vector<4x32xf32> to vector<4x32xbf16>
    %c2_129 = arith.constant 2 : index
    %c0_130 = arith.constant 0 : index
    %c0_131 = arith.constant 0 : index
    %374 = vector.load %arg4[%c2_129, %c0_130, %c0_131] : memref<4x32x16xbf16, #tpu.memory_space<vmem>>, vector<1x32x16xbf16>
    %375 = vector.shape_cast %374 : vector<1x32x16xbf16> to vector<32x16xbf16>
    %cst_132 = arith.constant dense<0.000000e+00> : vector<4x16xf32>
    %376 = tpu.matmul %373, %375, %cst_132 {dimension_numbers = #tpu.dot_dimension_numbers<[1], [0], [0], [1], [0, 0, 1, 1], [], []>} : vector<4x32xbf16>, vector<32x16xbf16>, vector<4x16xf32> -> vector<4x16xf32>
    %377 = vector.extract_strided_slice %285 {offsets = [5, 0], sizes = [1, 16], strides = [1, 1]} : vector<8x768xf32> to vector<1x16xf32>
    %378 = vector.broadcast %377 : vector<1x16xf32> to vector<4x16xf32>
    %379 = arith.addf %376, %378 : vector<4x16xf32>
    %380 = arith.addf %363, %379 : vector<4x16xf32>
    %381 = vector.extract_strided_slice %285 {offsets = [6, 0], sizes = [1, 16], strides = [1, 1]} : vector<8x768xf32> to vector<1x16xf32>
    %382 = vector.extract_strided_slice %285 {offsets = [7, 0], sizes = [1, 16], strides = [1, 1]} : vector<8x768xf32> to vector<1x16xf32>
    %cst_133 = arith.constant dense<0.000000e+00> : vector<4xf32>
    %383 = vector.multi_reduction <add>, %380, %cst_133 [1] : vector<4x16xf32> to vector<4xf32>
    %384 = vector.shape_cast %383 : vector<4xf32> to vector<4x1xf32>
    %cst_134 = arith.constant 1.600000e+01 : f32
    %385 = vector.broadcast %cst_134 : f32 to vector<4x1xf32>
    %386 = arith.divf %384, %385 : vector<4x1xf32>
    %387 = vector.broadcast %386 : vector<4x1xf32> to vector<4x16xf32>
    %388 = arith.subf %380, %387 : vector<4x16xf32>
    %389 = arith.mulf %388, %388 : vector<4x16xf32>
    %cst_135 = arith.constant dense<0.000000e+00> : vector<4xf32>
    %390 = vector.multi_reduction <add>, %389, %cst_135 [1] : vector<4x16xf32> to vector<4xf32>
    %391 = vector.shape_cast %390 : vector<4xf32> to vector<4x1xf32>
    %cst_136 = arith.constant 1.600000e+01 : f32
    %392 = vector.broadcast %cst_136 : f32 to vector<4x1xf32>
    %393 = arith.divf %391, %392 : vector<4x1xf32>
    %394 = vector.broadcast %386 : vector<4x1xf32> to vector<4x16xf32>
    %395 = arith.subf %380, %394 : vector<4x16xf32>
    %cst_137 = arith.constant 9.99999974E-6 : f32
    %396 = vector.broadcast %cst_137 : f32 to vector<4x1xf32>
    %397 = arith.addf %393, %396 : vector<4x1xf32>
    %398 = math.rsqrt %397 : vector<4x1xf32>
    %399 = vector.broadcast %398 : vector<4x1xf32> to vector<4x16xf32>
    %400 = arith.mulf %395, %399 : vector<4x16xf32>
    %401 = vector.broadcast %381 : vector<1x16xf32> to vector<4x16xf32>
    %402 = arith.mulf %400, %401 : vector<4x16xf32>
    %403 = vector.broadcast %382 : vector<1x16xf32> to vector<4x16xf32>
    %404 = arith.addf %402, %403 : vector<4x16xf32>
    %c3 = arith.constant 3 : index
    %c0_138 = arith.constant 0 : index
    %c0_139 = arith.constant 0 : index
    %405 = vector.load %arg1[%c3, %c0_138, %c0_139] : memref<4x16x768xbf16, #tpu.memory_space<vmem>>, vector<1x16x768xbf16>
    %406 = vector.shape_cast %405 : vector<1x16x768xbf16> to vector<16x768xbf16>
    %c3_140 = arith.constant 3 : index
    %c0_141 = arith.constant 0 : index
    %c0_142 = arith.constant 0 : index
    %407 = vector.load %arg2[%c3_140, %c0_141, %c0_142] : memref<4x256x16xbf16, #tpu.memory_space<vmem>>, vector<1x256x16xbf16>
    %408 = vector.shape_cast %407 : vector<1x256x16xbf16> to vector<256x16xbf16>
    %c3_143 = arith.constant 3 : index
    %c0_144 = arith.constant 0 : index
    %c0_145 = arith.constant 0 : index
    %409 = vector.load %arg5[%c3_143, %c0_144, %c0_145] : memref<4x8x768xf32, #tpu.memory_space<vmem>>, vector<1x8x768xf32>
    %410 = vector.shape_cast %409 : vector<1x8x768xf32> to vector<8x768xf32>
    %411 = arith.truncf %404 : vector<4x16xf32> to vector<4x16xbf16>
    %cst_146 = arith.constant dense<0.000000e+00> : vector<4x768xf32>
    %412 = tpu.matmul %411, %406, %cst_146 {dimension_numbers = #tpu.dot_dimension_numbers<[1], [0], [0], [1], [0, 0, 1, 1], [], []>} : vector<4x16xbf16>, vector<16x768xbf16>, vector<4x768xf32> -> vector<4x768xf32>
    %413 = vector.extract_strided_slice %410 {offsets = [0, 0], sizes = [1, 768], strides = [1, 1]} : vector<8x768xf32> to vector<1x768xf32>
    %414 = vector.broadcast %413 : vector<1x768xf32> to vector<4x768xf32>
    %415 = arith.addf %412, %414 : vector<4x768xf32>
    %416 = vector.extract_strided_slice %415 {offsets = [0, 0], sizes = [4, 128], strides = [1, 1]} : vector<4x768xf32> to vector<4x128xf32>
    %417 = vector.extract_strided_slice %415 {offsets = [0, 128], sizes = [4, 128], strides = [1, 1]} : vector<4x768xf32> to vector<4x128xf32>
    %418 = vector.extract_strided_slice %415 {offsets = [0, 256], sizes = [4, 128], strides = [1, 1]} : vector<4x768xf32> to vector<4x128xf32>
    %419 = arith.truncf %416 : vector<4x128xf32> to vector<4x128xbf16>
    %420 = arith.truncf %417 : vector<4x128xf32> to vector<4x128xbf16>
    %cst_147 = arith.constant dense<0.000000e+00> : vector<4x4xf32>
    %421 = tpu.matmul %419, %420, %cst_147 {dimension_numbers = #tpu.dot_dimension_numbers<[1], [1], [0], [0], [0, 0, 1, 0], [], []>} : vector<4x128xbf16>, vector<4x128xbf16>, vector<4x4xf32> -> vector<4x4xf32>
    %cst_148 = arith.constant dense<0xFF800000> : vector<4xf32>
    %422 = vector.multi_reduction <maximumf>, %421, %cst_148 [1] : vector<4x4xf32> to vector<4xf32>
    %423 = vector.shape_cast %422 : vector<4xf32> to vector<4x1xf32>
    %424 = vector.broadcast %423 : vector<4x1xf32> to vector<4x4xf32>
    %425 = arith.subf %421, %424 : vector<4x4xf32>
    %426 = math.exp %425 : vector<4x4xf32>
    %cst_149 = arith.constant dense<0.000000e+00> : vector<4xf32>
    %427 = vector.multi_reduction <add>, %426, %cst_149 [1] : vector<4x4xf32> to vector<4xf32>
    %428 = vector.shape_cast %427 : vector<4xf32> to vector<4x1xf32>
    %429 = tpu.reciprocal %428 {approx = true} : vector<4x1xf32> -> vector<4x1xf32>
    %430 = vector.broadcast %429 : vector<4x1xf32> to vector<4x4xf32>
    %431 = arith.mulf %426, %430 : vector<4x4xf32>
    %432 = arith.truncf %431 : vector<4x4xf32> to vector<4x4xbf16>
    %433 = arith.truncf %418 : vector<4x128xf32> to vector<4x128xbf16>
    %cst_150 = arith.constant dense<0.000000e+00> : vector<4x128xf32>
    %434 = tpu.matmul %432, %433, %cst_150 {dimension_numbers = #tpu.dot_dimension_numbers<[1], [0], [0], [1], [0, 0, 1, 1], [], []>} : vector<4x4xbf16>, vector<4x128xbf16>, vector<4x128xf32> -> vector<4x128xf32>
    %435 = arith.truncf %434 : vector<4x128xf32> to vector<4x128xbf16>
    %436 = vector.extract_strided_slice %408 {offsets = [0, 0], sizes = [128, 16], strides = [1, 1]} : vector<256x16xbf16> to vector<128x16xbf16>
    %cst_151 = arith.constant dense<0.000000e+00> : vector<4x16xf32>
    %437 = tpu.matmul %435, %436, %cst_151 {dimension_numbers = #tpu.dot_dimension_numbers<[1], [0], [0], [1], [0, 0, 1, 1], [], []>} : vector<4x128xbf16>, vector<128x16xbf16>, vector<4x16xf32> -> vector<4x16xf32>
    %438 = vector.extract_strided_slice %415 {offsets = [0, 384], sizes = [4, 128], strides = [1, 1]} : vector<4x768xf32> to vector<4x128xf32>
    %439 = vector.extract_strided_slice %415 {offsets = [0, 512], sizes = [4, 128], strides = [1, 1]} : vector<4x768xf32> to vector<4x128xf32>
    %440 = vector.extract_strided_slice %415 {offsets = [0, 640], sizes = [4, 128], strides = [1, 1]} : vector<4x768xf32> to vector<4x128xf32>
    %441 = arith.truncf %438 : vector<4x128xf32> to vector<4x128xbf16>
    %442 = arith.truncf %439 : vector<4x128xf32> to vector<4x128xbf16>
    %cst_152 = arith.constant dense<0.000000e+00> : vector<4x4xf32>
    %443 = tpu.matmul %441, %442, %cst_152 {dimension_numbers = #tpu.dot_dimension_numbers<[1], [1], [0], [0], [0, 0, 1, 0], [], []>} : vector<4x128xbf16>, vector<4x128xbf16>, vector<4x4xf32> -> vector<4x4xf32>
    %cst_153 = arith.constant dense<0xFF800000> : vector<4xf32>
    %444 = vector.multi_reduction <maximumf>, %443, %cst_153 [1] : vector<4x4xf32> to vector<4xf32>
    %445 = vector.shape_cast %444 : vector<4xf32> to vector<4x1xf32>
    %446 = vector.broadcast %445 : vector<4x1xf32> to vector<4x4xf32>
    %447 = arith.subf %443, %446 : vector<4x4xf32>
    %448 = math.exp %447 : vector<4x4xf32>
    %cst_154 = arith.constant dense<0.000000e+00> : vector<4xf32>
    %449 = vector.multi_reduction <add>, %448, %cst_154 [1] : vector<4x4xf32> to vector<4xf32>
    %450 = vector.shape_cast %449 : vector<4xf32> to vector<4x1xf32>
    %451 = tpu.reciprocal %450 {approx = true} : vector<4x1xf32> -> vector<4x1xf32>
    %452 = vector.broadcast %451 : vector<4x1xf32> to vector<4x4xf32>
    %453 = arith.mulf %448, %452 : vector<4x4xf32>
    %454 = arith.truncf %453 : vector<4x4xf32> to vector<4x4xbf16>
    %455 = arith.truncf %440 : vector<4x128xf32> to vector<4x128xbf16>
    %cst_155 = arith.constant dense<0.000000e+00> : vector<4x128xf32>
    %456 = tpu.matmul %454, %455, %cst_155 {dimension_numbers = #tpu.dot_dimension_numbers<[1], [0], [0], [1], [0, 0, 1, 1], [], []>} : vector<4x4xbf16>, vector<4x128xbf16>, vector<4x128xf32> -> vector<4x128xf32>
    %457 = arith.truncf %456 : vector<4x128xf32> to vector<4x128xbf16>
    %458 = vector.extract_strided_slice %408 {offsets = [128, 0], sizes = [128, 16], strides = [1, 1]} : vector<256x16xbf16> to vector<128x16xbf16>
    %cst_156 = arith.constant dense<0.000000e+00> : vector<4x16xf32>
    %459 = tpu.matmul %457, %458, %cst_156 {dimension_numbers = #tpu.dot_dimension_numbers<[1], [0], [0], [1], [0, 0, 1, 1], [], []>} : vector<4x128xbf16>, vector<128x16xbf16>, vector<4x16xf32> -> vector<4x16xf32>
    %460 = arith.addf %437, %459 : vector<4x16xf32>
    %461 = vector.extract_strided_slice %410 {offsets = [1, 0], sizes = [1, 16], strides = [1, 1]} : vector<8x768xf32> to vector<1x16xf32>
    %462 = vector.broadcast %461 : vector<1x16xf32> to vector<4x16xf32>
    %463 = arith.addf %460, %462 : vector<4x16xf32>
    %464 = arith.addf %404, %463 : vector<4x16xf32>
    %465 = vector.extract_strided_slice %410 {offsets = [2, 0], sizes = [1, 16], strides = [1, 1]} : vector<8x768xf32> to vector<1x16xf32>
    %466 = vector.extract_strided_slice %410 {offsets = [3, 0], sizes = [1, 16], strides = [1, 1]} : vector<8x768xf32> to vector<1x16xf32>
    %cst_157 = arith.constant dense<0.000000e+00> : vector<4xf32>
    %467 = vector.multi_reduction <add>, %464, %cst_157 [1] : vector<4x16xf32> to vector<4xf32>
    %468 = vector.shape_cast %467 : vector<4xf32> to vector<4x1xf32>
    %cst_158 = arith.constant 1.600000e+01 : f32
    %469 = vector.broadcast %cst_158 : f32 to vector<4x1xf32>
    %470 = arith.divf %468, %469 : vector<4x1xf32>
    %471 = vector.broadcast %470 : vector<4x1xf32> to vector<4x16xf32>
    %472 = arith.subf %464, %471 : vector<4x16xf32>
    %473 = arith.mulf %472, %472 : vector<4x16xf32>
    %cst_159 = arith.constant dense<0.000000e+00> : vector<4xf32>
    %474 = vector.multi_reduction <add>, %473, %cst_159 [1] : vector<4x16xf32> to vector<4xf32>
    %475 = vector.shape_cast %474 : vector<4xf32> to vector<4x1xf32>
    %cst_160 = arith.constant 1.600000e+01 : f32
    %476 = vector.broadcast %cst_160 : f32 to vector<4x1xf32>
    %477 = arith.divf %475, %476 : vector<4x1xf32>
    %478 = vector.broadcast %470 : vector<4x1xf32> to vector<4x16xf32>
    %479 = arith.subf %464, %478 : vector<4x16xf32>
    %cst_161 = arith.constant 9.99999974E-6 : f32
    %480 = vector.broadcast %cst_161 : f32 to vector<4x1xf32>
    %481 = arith.addf %477, %480 : vector<4x1xf32>
    %482 = math.rsqrt %481 : vector<4x1xf32>
    %483 = vector.broadcast %482 : vector<4x1xf32> to vector<4x16xf32>
    %484 = arith.mulf %479, %483 : vector<4x16xf32>
    %485 = vector.broadcast %465 : vector<1x16xf32> to vector<4x16xf32>
    %486 = arith.mulf %484, %485 : vector<4x16xf32>
    %487 = vector.broadcast %466 : vector<1x16xf32> to vector<4x16xf32>
    %488 = arith.addf %486, %487 : vector<4x16xf32>
    %489 = arith.truncf %488 : vector<4x16xf32> to vector<4x16xbf16>
    %c3_162 = arith.constant 3 : index
    %c0_163 = arith.constant 0 : index
    %c0_164 = arith.constant 0 : index
    %490 = vector.load %arg3[%c3_162, %c0_163, %c0_164] : memref<4x16x32xbf16, #tpu.memory_space<vmem>>, vector<1x16x32xbf16>
    %491 = vector.shape_cast %490 : vector<1x16x32xbf16> to vector<16x32xbf16>
    %cst_165 = arith.constant dense<0.000000e+00> : vector<4x32xf32>
    %492 = tpu.matmul %489, %491, %cst_165 {dimension_numbers = #tpu.dot_dimension_numbers<[1], [0], [0], [1], [0, 0, 1, 1], [], []>} : vector<4x16xbf16>, vector<16x32xbf16>, vector<4x32xf32> -> vector<4x32xf32>
    %493 = vector.extract_strided_slice %410 {offsets = [4, 0], sizes = [1, 32], strides = [1, 1]} : vector<8x768xf32> to vector<1x32xf32>
    %494 = vector.broadcast %493 : vector<1x32xf32> to vector<4x32xf32>
    %495 = arith.addf %492, %494 : vector<4x32xf32>
    %cst_166 = arith.constant 0.000000e+00 : f32
    %496 = vector.broadcast %cst_166 : f32 to vector<4x32xf32>
    %497 = arith.maximumf %495, %496 : vector<4x32xf32>
    %498 = arith.truncf %497 : vector<4x32xf32> to vector<4x32xbf16>
    %c3_167 = arith.constant 3 : index
    %c0_168 = arith.constant 0 : index
    %c0_169 = arith.constant 0 : index
    %499 = vector.load %arg4[%c3_167, %c0_168, %c0_169] : memref<4x32x16xbf16, #tpu.memory_space<vmem>>, vector<1x32x16xbf16>
    %500 = vector.shape_cast %499 : vector<1x32x16xbf16> to vector<32x16xbf16>
    %cst_170 = arith.constant dense<0.000000e+00> : vector<4x16xf32>
    %501 = tpu.matmul %498, %500, %cst_170 {dimension_numbers = #tpu.dot_dimension_numbers<[1], [0], [0], [1], [0, 0, 1, 1], [], []>} : vector<4x32xbf16>, vector<32x16xbf16>, vector<4x16xf32> -> vector<4x16xf32>
    %502 = vector.extract_strided_slice %410 {offsets = [5, 0], sizes = [1, 16], strides = [1, 1]} : vector<8x768xf32> to vector<1x16xf32>
    %503 = vector.broadcast %502 : vector<1x16xf32> to vector<4x16xf32>
    %504 = arith.addf %501, %503 : vector<4x16xf32>
    %505 = arith.addf %488, %504 : vector<4x16xf32>
    %506 = vector.extract_strided_slice %410 {offsets = [6, 0], sizes = [1, 16], strides = [1, 1]} : vector<8x768xf32> to vector<1x16xf32>
    %507 = vector.extract_strided_slice %410 {offsets = [7, 0], sizes = [1, 16], strides = [1, 1]} : vector<8x768xf32> to vector<1x16xf32>
    %cst_171 = arith.constant dense<0.000000e+00> : vector<4xf32>
    %508 = vector.multi_reduction <add>, %505, %cst_171 [1] : vector<4x16xf32> to vector<4xf32>
    %509 = vector.shape_cast %508 : vector<4xf32> to vector<4x1xf32>
    %cst_172 = arith.constant 1.600000e+01 : f32
    %510 = vector.broadcast %cst_172 : f32 to vector<4x1xf32>
    %511 = arith.divf %509, %510 : vector<4x1xf32>
    %512 = vector.broadcast %511 : vector<4x1xf32> to vector<4x16xf32>
    %513 = arith.subf %505, %512 : vector<4x16xf32>
    %514 = arith.mulf %513, %513 : vector<4x16xf32>
    %cst_173 = arith.constant dense<0.000000e+00> : vector<4xf32>
    %515 = vector.multi_reduction <add>, %514, %cst_173 [1] : vector<4x16xf32> to vector<4xf32>
    %516 = vector.shape_cast %515 : vector<4xf32> to vector<4x1xf32>
    %cst_174 = arith.constant 1.600000e+01 : f32
    %517 = vector.broadcast %cst_174 : f32 to vector<4x1xf32>
    %518 = arith.divf %516, %517 : vector<4x1xf32>
    %519 = vector.broadcast %511 : vector<4x1xf32> to vector<4x16xf32>
    %520 = arith.subf %505, %519 : vector<4x16xf32>
    %cst_175 = arith.constant 9.99999974E-6 : f32
    %521 = vector.broadcast %cst_175 : f32 to vector<4x1xf32>
    %522 = arith.addf %518, %521 : vector<4x1xf32>
    %523 = math.rsqrt %522 : vector<4x1xf32>
    %524 = vector.broadcast %523 : vector<4x1xf32> to vector<4x16xf32>
    %525 = arith.mulf %520, %524 : vector<4x16xf32>
    %526 = vector.broadcast %506 : vector<1x16xf32> to vector<4x16xf32>
    %527 = arith.mulf %525, %526 : vector<4x16xf32>
    %528 = vector.broadcast %507 : vector<1x16xf32> to vector<4x16xf32>
    %529 = arith.addf %527, %528 : vector<4x16xf32>
    %cst_176 = arith.constant 0.000000e+00 : f32
    %530 = vector.broadcast %cst_176 : f32 to vector<4x112xf32>
    %531 = tpu.concatenate %529, %530 in 1 : vector<4x16xf32>, vector<4x112xf32> -> vector<4x128xf32>
    %c1_177 = arith.constant 1 : index
    %c0_178 = arith.constant 0 : index
    %c0_179 = arith.constant 0 : index
    %532 = vector.load %arg9[%c1_177, %c0_178, %c0_179] : memref<2x4x128xf32, #tpu.memory_space<vmem>>, vector<1x4x128xf32>
    %533 = vector.shape_cast %532 : vector<1x4x128xf32> to vector<4x128xf32>
    %534 = vector.shape_cast %531 : vector<4x128xf32> to vector<1x4x128xf32>
    tpu.vector_store %arg9[%c1_177, %c0_178, %c0_179], %534 {strides = array<i32>} : memref<2x4x128xf32, #tpu.memory_space<vmem>>, vector<1x4x128xf32>,
    %c1_180 = arith.constant 1 : index
    %c0_181 = arith.constant 0 : index
    %c0_182 = arith.constant 0 : index
    %535 = vector.load %arg8[%c1_180, %c0_181, %c0_182] : memref<2x2x256xf32, #tpu.memory_space<vmem>>, vector<1x2x256xf32>
    %536 = vector.shape_cast %535 : vector<1x2x256xf32> to vector<2x256xf32>
    %537 = arith.truncf %529 : vector<4x16xf32> to vector<4x16xbf16>
    %c1_183 = arith.constant 1 : index
    %c0_184 = arith.constant 0 : index
    %c0_185 = arith.constant 0 : index
    %538 = vector.load %arg6[%c1_183, %c0_184, %c0_185] : memref<2x16x256xbf16, #tpu.memory_space<vmem>>, vector<1x16x256xbf16>
    %539 = vector.shape_cast %538 : vector<1x16x256xbf16> to vector<16x256xbf16>
    %cst_186 = arith.constant dense<0.000000e+00> : vector<4x256xf32>
    %540 = tpu.matmul %537, %539, %cst_186 {dimension_numbers = #tpu.dot_dimension_numbers<[1], [0], [0], [1], [0, 0, 1, 1], [], []>} : vector<4x16xbf16>, vector<16x256xbf16>, vector<4x256xf32> -> vector<4x256xf32>
    %541 = vector.extract_strided_slice %536 {offsets = [0, 0], sizes = [1, 256], strides = [1, 1]} : vector<2x256xf32> to vector<1x256xf32>
    %542 = vector.broadcast %541 : vector<1x256xf32> to vector<4x256xf32>
    %543 = arith.addf %540, %542 : vector<4x256xf32>
    %cst_187 = arith.constant 0.000000e+00 : f32
    %544 = vector.broadcast %cst_187 : f32 to vector<4x256xf32>
    %545 = arith.maximumf %543, %544 : vector<4x256xf32>
    %546 = arith.truncf %545 : vector<4x256xf32> to vector<4x256xbf16>
    %c1_188 = arith.constant 1 : index
    %c0_189 = arith.constant 0 : index
    %c0_190 = arith.constant 0 : index
    %547 = vector.load %arg7[%c1_188, %c0_189, %c0_190] : memref<2x256x128xbf16, #tpu.memory_space<vmem>>, vector<1x256x128xbf16>
    %548 = vector.shape_cast %547 : vector<1x256x128xbf16> to vector<256x128xbf16>
    %cst_191 = arith.constant dense<0.000000e+00> : vector<4x128xf32>
    %549 = tpu.matmul %546, %548, %cst_191 {dimension_numbers = #tpu.dot_dimension_numbers<[1], [0], [0], [1], [0, 0, 1, 1], [], []>} : vector<4x256xbf16>, vector<256x128xbf16>, vector<4x128xf32> -> vector<4x128xf32>
    %550 = vector.extract_strided_slice %536 {offsets = [1, 0], sizes = [1, 128], strides = [1, 1]} : vector<2x256xf32> to vector<1x128xf32>
    %551 = vector.broadcast %550 : vector<1x128xf32> to vector<4x128xf32>
    %552 = arith.addf %549, %551 : vector<4x128xf32>
    %c1_192 = arith.constant 1 : index
    %c0_193 = arith.constant 0 : index
    %c0_194 = arith.constant 0 : index
    %553 = vector.load %arg10[%c1_192, %c0_193, %c0_194] : memref<2x4x128xf32, #tpu.memory_space<vmem>>, vector<1x4x128xf32>
    %554 = vector.shape_cast %553 : vector<1x4x128xf32> to vector<4x128xf32>
    %555 = vector.shape_cast %552 : vector<4x128xf32> to vector<1x4x128xf32>
    tpu.vector_store %arg10[%c1_192, %c0_193, %c0_194], %555 {strides = array<i32>} : memref<2x4x128xf32, #tpu.memory_space<vmem>>, vector<1x4x128xf32>,
    return
  }
}

</mosaic_0001>

<llo_original>
// kernel: tfc_forward.1
$region0: #{tfc_forward.1}
  #allocation0 [shape = 'u32[]', space=smem, size = 0x4, offset = 0x4, fixed_abs, tag = 'smem constant byte address 0x4 - core index']
  #allocation1 [shape = 'u32[144,128]{1,0:T(1,128)}', space=vmem, size = 0x12000, scoped, tag = 'internal scratch']
  %s0 = inlined_call_operand.vmem [shape: f32[2,4,16], index: 0, kind: input, shape index: {}]
  %s1 = inlined_call_operand.vmem [shape: bf16[4,16,768], index: 1, kind: input, shape index: {}]
  %s2 = inlined_call_operand.vmem [shape: bf16[4,256,16], index: 2, kind: input, shape index: {}]
  %s3 = inlined_call_operand.hbm [shape: bf16[4,16,32], index: 3, kind: input, shape index: {}]
  %s4 = inlined_call_operand.vmem [shape: bf16[4,32,16], index: 4, kind: input, shape index: {}]
  %s5 = inlined_call_operand.vmem [shape: f32[4,8,768], index: 5, kind: input, shape index: {}]
  %s6 = inlined_call_operand.hbm [shape: bf16[2,16,256], index: 6, kind: input, shape index: {}]
  %s7 = inlined_call_operand.vmem [shape: bf16[2,256,128], index: 7, kind: input, shape index: {}]
  %s8 = inlined_call_operand.hbm [shape: f32[2,2,256], index: 8, kind: input, shape index: {}]
  %s9 = inlined_call_operand.vmem [shape: f32[2,4,128], index: 9, kind: output, shape index: {0}]
  %s10 = inlined_call_operand.vmem [shape: f32[2,4,128], index: 10, kind: output, shape index: {1}]
  %11 = xla_tuple %s9, %s10
  %s12 = sld [smem:[#allocation0]]
  $region66: #{tfc_forward.1} parent=0
    _
  %s14 = ssub.s32 1, %s12
  %s15 = scalar_select 0, %s14, %s12
  $region1: #{tfc_forward.1} parent=0
    #allocation2 [shape = 'u8[16384]{0}', space=vmem, size = 0x4000, scoped, tag = 'input window, operand 3, single buffered']
    #allocation3 [shape = 's32[1]{0}', space=sflag, size = 0x4, scoped, tag = 'scoped memory for tfc_forward.1']
    #allocation4 [shape = 'u8[16384]{0}', space=vmem, size = 0x4000, scoped, tag = 'input window, operand 6, single buffered']
    #allocation5 [shape = 's32[1]{0}', space=sflag, size = 0x4, scoped, tag = 'scoped memory for tfc_forward.1']
    #allocation6 [shape = 'u8[4096]{0}', space=vmem, size = 0x1000, scoped, tag = 'input window, operand 8, single buffered']
    %16 = vsyncpa [#allocation3], 0
    %17 = vsyncpa [#allocation5], 0
    // Predicated region
    $region2: #{tfc_forward.1} parent=1 // pred_check
      _
    $region3: #{tfc_forward.1} parent=1 // pred_check_branch
      %19 = sbr.rel (0) target = $region5
    $region4: #{tfc_forward.1} parent=1 // pred_region
      _
    $region5: #{tfc_forward.1} parent=1 // pred_fallthru
      _
    // Predicated region
    $region6: #{tfc_forward.1} parent=1 // pred_check
      _
    $region7: #{tfc_forward.1} parent=1 // pred_check_branch
      %21 = sbr.rel (0) target = $region9
    $region8: #{tfc_forward.1} parent=1 // pred_region
      _
    $region9: #{tfc_forward.1} parent=1 // pred_fallthru
      _
    // Predicated region
    $region10: #{tfc_forward.1} parent=1 // pred_check
      _
    $region11: #{tfc_forward.1} parent=1 // pred_check_branch
      %23 = sbr.rel (0) target = $region13
    $region12: #{tfc_forward.1} parent=1 // pred_region
      _
    $region13: #{tfc_forward.1} parent=1 // pred_fallthru
      _
    // Predicated region
    $region14: #{tfc_forward.1} parent=1 // pred_check
      _
    $region15: #{tfc_forward.1} parent=1 // pred_check_branch
      %25 = sbr.rel (0) target = $region17
    $region16: #{tfc_forward.1} parent=1 // pred_region
      %s27 = ssub.s32 512, 512
      %28 = vsyncadd [#allocation3], %s27
      %s29 = sshll.u32 [#allocation2], 4
      %s30 = int_to_ptr.vmem [resolvable:$true] %s29
      %35 = dma.hbm_to_vmem [thread:$0]  %s3, 512, %s30, [#allocation3], 64, 64, 4
    $region17: #{tfc_forward.1} parent=1 // pred_fallthru
      _
    // Predicated region
    $region18: #{tfc_forward.1} parent=1 // pred_check
      _
    $region19: #{tfc_forward.1} parent=1 // pred_check_branch
      %37 = sbr.rel (0) target = $region21
    $region20: #{tfc_forward.1} parent=1 // pred_region
      _
    $region21: #{tfc_forward.1} parent=1 // pred_fallthru
      _
    // Predicated region
    $region22: #{tfc_forward.1} parent=1 // pred_check
      _
    $region23: #{tfc_forward.1} parent=1 // pred_check_branch
      %39 = sbr.rel (0) target = $region25
    $region24: #{tfc_forward.1} parent=1 // pred_region
      _
    $region25: #{tfc_forward.1} parent=1 // pred_fallthru
      _
    // Predicated region
    $region26: #{tfc_forward.1} parent=1 // pred_check
      _
    $region27: #{tfc_forward.1} parent=1 // pred_check_branch
      %41 = sbr.rel (0) target = $region29
    $region28: #{tfc_forward.1} parent=1 // pred_region
      %s43 = ssub.s32 512, 512
      %44 = vsyncadd [#allocation5], %s43
      %s45 = sshll.u32 [#allocation4], 4
      %s46 = int_to_ptr.vmem [resolvable:$true] %s45
      %51 = dma.hbm_to_vmem [thread:$0]  %s6, 512, %s46, [#allocation5], 128, 128, 8
    $region29: #{tfc_forward.1} parent=1 // pred_fallthru
      _
    // Predicated region
    $region30: #{tfc_forward.1} parent=1 // pred_check
      _
    $region31: #{tfc_forward.1} parent=1 // pred_check_branch
      %53 = sbr.rel (0) target = $region33
    $region32: #{tfc_forward.1} parent=1 // pred_region
      _
    $region33: #{tfc_forward.1} parent=1 // pred_fallthru
      _
    // Predicated region
    $region34: #{tfc_forward.1} parent=1 // pred_check
      _
    $region35: #{tfc_forward.1} parent=1 // pred_check_branch
      %55 = sbr.rel (0) target = $region37
    $region36: #{tfc_forward.1} parent=1 // pred_region
      %s57 = ssub.s32 128, 128
      %58 = vsyncadd [#allocation5], %s57
      %s59 = sshll.u32 [#allocation6], 4
      %s60 = int_to_ptr.vmem [resolvable:$true] %s59
      %65 = dma.hbm_to_vmem [thread:$0]  %s8, 128, %s60, [#allocation5], 64, 64, 4
    $region37: #{tfc_forward.1} parent=1 // pred_fallthru
      _
    // Predicated region
    $region38: #{tfc_forward.1} parent=1 // pred_check
      _
    $region39: #{tfc_forward.1} parent=1 // pred_check_branch
      %67 = sbr.rel (0) target = $region41
    $region40: #{tfc_forward.1} parent=1 // pred_region
      %68 = dma.done [#allocation3], 512
    $region41: #{tfc_forward.1} parent=1 // pred_fallthru
      _
    // Predicated region
    $region42: #{tfc_forward.1} parent=1 // pred_check
      _
    $region43: #{tfc_forward.1} parent=1 // pred_check_branch
      %70 = sbr.rel (0) target = $region45
    $region44: #{tfc_forward.1} parent=1 // pred_region
      %71 = dma.done [#allocation5], 512
    $region45: #{tfc_forward.1} parent=1 // pred_fallthru
      _
    // Predicated region
    $region46: #{tfc_forward.1} parent=1 // pred_check
      _
    $region47: #{tfc_forward.1} parent=1 // pred_check_branch
      %73 = sbr.rel (0) target = $region49
    $region48: #{tfc_forward.1} parent=1 // pred_region
      %74 = dma.done [#allocation5], 128
    $region49: #{tfc_forward.1} parent=1 // pred_fallthru
      _
    %v76 = vld [vmem:[%s0] sm:$0xf]
    %v77 = vld [vmem:[%s1] sm:$0xff]
    %v78 = vld [vmem:[%s1 + $0x8] sm:$0xff]
    %v79 = vld [vmem:[%s1 + $0x10] sm:$0xff]
    %v80 = vld [vmem:[%s1 + $0x18] sm:$0xff]
    %v81 = vld [vmem:[%s1 + $0x20] sm:$0xff]
    %v82 = vld [vmem:[%s1 + $0x28] sm:$0xff]
    %v83 = vld [vmem:[%s2] sm:$0xf]
    %v84 = vld [vmem:[%s2 + $0x4] sm:$0xf]
    %v85 = vld [vmem:[%s2 + $0x8] sm:$0xf]
    %v86 = vld [vmem:[%s2 + $0xc] sm:$0xf]
    %v87 = vld [vmem:[%s2 + $0x10] sm:$0xf]
    %v88 = vld [vmem:[%s2 + $0x14] sm:$0xf]
    %v89 = vld [vmem:[%s2 + $0x18] sm:$0xf]
    %v90 = vld [vmem:[%s2 + $0x1c] sm:$0xf]
    %v91 = vld [vmem:[%s2 + $0x20] sm:$0xf]
    %v92 = vld [vmem:[%s2 + $0x24] sm:$0xf]
    %v93 = vld [vmem:[%s2 + $0x28] sm:$0xf]
    %v94 = vld [vmem:[%s2 + $0x2c] sm:$0xf]
    %v95 = vld [vmem:[%s2 + $0x30] sm:$0xf]
    %v96 = vld [vmem:[%s2 + $0x34] sm:$0xf]
    %v97 = vld [vmem:[%s2 + $0x38] sm:$0xf]
    %v98 = vld [vmem:[%s2 + $0x3c] sm:$0xf]
    %v99 = vld [vmem:[%s2 + $0x40] sm:$0xf]
    %v100 = vld [vmem:[%s2 + $0x44] sm:$0xf]
    %v101 = vld [vmem:[%s2 + $0x48] sm:$0xf]
    %v102 = vld [vmem:[%s2 + $0x4c] sm:$0xf]
    %v103 = vld [vmem:[%s2 + $0x50] sm:$0xf]
    %v104 = vld [vmem:[%s2 + $0x54] sm:$0xf]
    %v105 = vld [vmem:[%s2 + $0x58] sm:$0xf]
    %v106 = vld [vmem:[%s2 + $0x5c] sm:$0xf]
    %v107 = vld [vmem:[%s2 + $0x60] sm:$0xf]
    %v108 = vld [vmem:[%s2 + $0x64] sm:$0xf]
    %v109 = vld [vmem:[%s2 + $0x68] sm:$0xf]
    %v110 = vld [vmem:[%s2 + $0x6c] sm:$0xf]
    %v111 = vld [vmem:[%s2 + $0x70] sm:$0xf]
    %v112 = vld [vmem:[%s2 + $0x74] sm:$0xf]
    %v113 = vld [vmem:[%s2 + $0x78] sm:$0xf]
    %v114 = vld [vmem:[%s2 + $0x7c] sm:$0xf]
    %v115 = vld [vmem:[%s5] sm:$0xff]
    %v116 = vld [vmem:[%s5 + $0x8] sm:$0xff]
    %v117 = vld [vmem:[%s5 + $0x10] sm:$0xff]
    %v118 = vld [vmem:[%s5 + $0x18] sm:$0xff]
    %v119 = vld [vmem:[%s5 + $0x20] sm:$0xff]
    %v120 = vld [vmem:[%s5 + $0x28] sm:$0xff]
    %v121 = vpack.c.bf16 %v76, %v76
    %v122 = vlaneseq
    %v123 = vshrl.u32 %v122, 7
    %v124 = vsub.s32 0, %v123
    %v125 = vrot.slane %v115, %v124
    %v126 = vlaneseq
    %v127 = vshrl.u32 %v126, 7
    %v128 = vsub.s32 0, %v127
    %v129 = vrot.slane %v116, %v128
    %v130 = vlaneseq
    %v131 = vshrl.u32 %v130, 7
    %v132 = vsub.s32 0, %v131
    %v133 = vrot.slane %v117, %v132
    %v134 = vlaneseq
    %v135 = vshrl.u32 %v134, 7
    %v136 = vsub.s32 0, %v135
    %v137 = vrot.slane %v118, %v136
    %v138 = vlaneseq
    %v139 = vshrl.u32 %v138, 7
    %v140 = vsub.s32 0, %v139
    %v141 = vrot.slane %v119, %v140
    %v142 = vlaneseq
    %v143 = vshrl.u32 %v142, 7
    %v144 = vsub.s32 0, %v143
    %v145 = vrot.slane %v120, %v144
    %v152 = vunpack.c.l.b16 %v77
    %v153 = vunpack.c.h.b16 %v77
    %v154 = vunpack.c.l.b16 %v78
    %v155 = vunpack.c.h.b16 %v78
    %v156 = vunpack.c.l.b16 %v79
    %v157 = vunpack.c.h.b16 %v79
    %v158 = vunpack.c.l.b16 %v80
    %v159 = vunpack.c.h.b16 %v80
    %v160 = vunpack.c.l.b16 %v81
    %v161 = vunpack.c.h.b16 %v81
    %v162 = vunpack.c.l.b16 %v82
    %v163 = vunpack.c.h.b16 %v82
    %v164 = vpack.c.b16 %v158, %v152
    %v165 = vpack.c.b16 %v159, %v153
    %v166 = vpack.c.b16 %v160, %v154
    %v167 = vpack.c.b16 %v161, %v155
    %v168 = vpack.c.b16 %v162, %v156
    %v169 = vpack.c.b16 %v163, %v157
    %vm176 = vcmask 130048
    %v178 = vsel %vm176, %v121, 0
    %180 = vmatprep.subr.bf16.mxu0 %v165
    %181 = vmatpush1.bf16.msra.mxu0 %v164
    %182 = vmatprep.subr.bf16.mxu0 0
    %183 = vmatpush1.bf16.msra.mxu0 0
    %184 = vmatprep.subr.bf16.mxu0 0
    %185 = vmatpush1.bf16.msra.mxu0 0
    %186 = vmatprep.subr.bf16.mxu0 0
    %187 = vmatpush1.bf16.msra.mxu0 0
    %188 = vmatprep.subr.bf16.mxu0 0
    %189 = vmatpush1.bf16.msra.mxu0 0
    %190 = vmatprep.subr.bf16.mxu0 0
    %191 = vmatpush1.bf16.msra.mxu0 0
    %192 = vmatprep.subr.bf16.mxu0 0
    %193 = vmatpush1.bf16.msra.mxu0 0
    %194 = vmatprep.subr.bf16.mxu0 0
    %195 = vmatpush1.bf16.msra.mxu0 0
    %196 = vmatprep.subr.bf16.mxu0 0
    %197 = vmatpush1.bf16.msra.mxu0 0
    %198 = vmatprep.subr.bf16.mxu0 0
    %199 = vmatpush1.bf16.msra.mxu0 0
    %200 = vmatprep.subr.bf16.mxu0 0
    %201 = vmatpush1.bf16.msra.mxu0 0
    %202 = vmatprep.subr.bf16.mxu0 0
    %203 = vmatpush1.bf16.msra.mxu0 0
    %204 = vmatprep.subr.bf16.mxu0 0
    %205 = vmatpush1.bf16.msra.mxu0 0
    %206 = vmatprep.subr.bf16.mxu0 0
    %207 = vmatpush1.bf16.msra.mxu0 0
    %208 = vmatprep.subr.bf16.mxu0 0
    %209 = vmatpush1.bf16.msra.mxu0 0
    %210 = vmatprep.subr.bf16.mxu0 0
    %211 = vmatpush1.bf16.msra.mxu0 0
    %212 = vmatprep.mubr.bf16.mxu0 0
    %213 = vmatmul.mubr.bf16.gmra.mrb[0].mxu0 %v178
    %v214 = vpop.f32.mrb[0].mxu0
    %v215 = vadd.f32 %v125, %v214
    %v216 = vpop.f32.mrb[0].mxu0
    %v217 = vadd.f32 %v129, %v216
    %v218 = vpop.f32.mrb[0].mxu0
    %v219 = vpop.f32.mrb[0].mxu0
    %220 = vdwg.mxu0
    %221 = vmatprep.subr.bf16.mxu0 %v167
    %222 = vmatpush1.bf16.msra.mxu0 %v166
    %223 = vmatprep.subr.bf16.mxu0 0
    %224 = vmatpush1.bf16.msra.mxu0 0
    %225 = vmatprep.subr.bf16.mxu0 0
    %226 = vmatpush1.bf16.msra.mxu0 0
    %227 = vmatprep.subr.bf16.mxu0 0
    %228 = vmatpush1.bf16.msra.mxu0 0
    %229 = vmatprep.subr.bf16.mxu0 0
    %230 = vmatpush1.bf16.msra.mxu0 0
    %231 = vmatprep.subr.bf16.mxu0 0
    %232 = vmatpush1.bf16.msra.mxu0 0
    %233 = vmatprep.subr.bf16.mxu0 0
    %234 = vmatpush1.bf16.msra.mxu0 0
    %235 = vmatprep.subr.bf16.mxu0 0
    %236 = vmatpush1.bf16.msra.mxu0 0
    %237 = vmatprep.subr.bf16.mxu0 0
    %238 = vmatpush1.bf16.msra.mxu0 0
    %239 = vmatprep.subr.bf16.mxu0 0
    %240 = vmatpush1.bf16.msra.mxu0 0
    %241 = vmatprep.subr.bf16.mxu0 0
    %242 = vmatpush1.bf16.msra.mxu0 0
    %243 = vmatprep.subr.bf16.mxu0 0
    %244 = vmatpush1.bf16.msra.mxu0 0
    %245 = vmatprep.subr.bf16.mxu0 0
    %246 = vmatpush1.bf16.msra.mxu0 0
    %247 = vmatprep.subr.bf16.mxu0 0
    %248 = vmatpush1.bf16.msra.mxu0 0
    %249 = vmatprep.subr.bf16.mxu0 0
    %250 = vmatpush1.bf16.msra.mxu0 0
    %251 = vmatprep.subr.bf16.mxu0 0
    %252 = vmatpush1.bf16.msra.mxu0 0
    %253 = vmatprep.mubr.bf16.mxu0 0
    %254 = vmatmul.mubr.bf16.gmra.mrb[0].mxu0 %v178
    %v255 = vpop.f32.mrb[0].mxu0
    %v256 = vadd.f32 %v133, %v255
    %v257 = vpop.f32.mrb[0].mxu0
    %v258 = vadd.f32 %v137, %v257
    %v259 = vpop.f32.mrb[0].mxu0
    %v260 = vpop.f32.mrb[0].mxu0
    %261 = vdwg.mxu0
    %262 = vmatprep.subr.bf16.mxu0 %v169
    %263 = vmatpush1.bf16.msra.mxu0 %v168
    %264 = vmatprep.subr.bf16.mxu0 0
    %265 = vmatpush1.bf16.msra.mxu0 0
    %266 = vmatprep.subr.bf16.mxu0 0
    %267 = vmatpush1.bf16.msra.mxu0 0
    %268 = vmatprep.subr.bf16.mxu0 0
    %269 = vmatpush1.bf16.msra.mxu0 0
    %270 = vmatprep.subr.bf16.mxu0 0
    %271 = vmatpush1.bf16.msra.mxu0 0
    %272 = vmatprep.subr.bf16.mxu0 0
    %273 = vmatpush1.bf16.msra.mxu0 0
    %274 = vmatprep.subr.bf16.mxu0 0
    %275 = vmatpush1.bf16.msra.mxu0 0
    %276 = vmatprep.subr.bf16.mxu0 0
    %277 = vmatpush1.bf16.msra.mxu0 0
    %278 = vmatprep.subr.bf16.mxu0 0
    %279 = vmatpush1.bf16.msra.mxu0 0
    %280 = vmatprep.subr.bf16.mxu0 0
    %281 = vmatpush1.bf16.msra.mxu0 0
    %282 = vmatprep.subr.bf16.mxu0 0
    %283 = vmatpush1.bf16.msra.mxu0 0
    %284 = vmatprep.subr.bf16.mxu0 0
    %285 = vmatpush1.bf16.msra.mxu0 0
    %286 = vmatprep.subr.bf16.mxu0 0
    %287 = vmatpush1.bf16.msra.mxu0 0
    %288 = vmatprep.subr.bf16.mxu0 0
    %289 = vmatpush1.bf16.msra.mxu0 0
    %290 = vmatprep.subr.bf16.mxu0 0
    %291 = vmatpush1.bf16.msra.mxu0 0
    %292 = vmatprep.subr.bf16.mxu0 0
    %293 = vmatpush1.bf16.msra.mxu0 0
    %294 = vmatprep.mubr.bf16.mxu0 0
    %295 = vmatmul.mubr.bf16.gmra.mrb[0].mxu0 %v178
    %v296 = vpop.f32.mrb[0].mxu0
    %v297 = vadd.f32 %v141, %v296
    %v298 = vpop.f32.mrb[0].mxu0
    %v299 = vadd.f32 %v145, %v298
    %v300 = vpop.f32.mrb[0].mxu0
    %v301 = vpop.f32.mrb[0].mxu0
    %302 = vdwg.mxu0
    %v303 = vpack.c.bf16 %v215, %v215
    %v304 = vpack.c.bf16 %v217, %v217
    %305 = vmatprep.subr.bf16.mxu0 0
    %306 = vmatpush1.bf16.xpose.msra.mxu0 %v304
    %307 = vmatprep.subr.bf16.mxu0 0
    %308 = vmatpush1.bf16.xpose.msra.mxu0 0
    %309 = vmatprep.subr.bf16.mxu0 0
    %310 = vmatpush1.bf16.xpose.msra.mxu0 0
    %311 = vmatprep.subr.bf16.mxu0 0
    %312 = vmatpush1.bf16.xpose.msra.mxu0 0
    %313 = vmatprep.subr.bf16.mxu0 0
    %314 = vmatpush1.bf16.xpose.msra.mxu0 0
    %315 = vmatprep.subr.bf16.mxu0 0
    %316 = vmatpush1.bf16.xpose.msra.mxu0 0
    %317 = vmatprep.subr.bf16.mxu0 0
    %318 = vmatpush1.bf16.xpose.msra.mxu0 0
    %319 = vmatprep.subr.bf16.mxu0 0
    %320 = vmatpush1.bf16.xpose.msra.mxu0 0
    %321 = vmatprep.subr.bf16.mxu0 0
    %322 = vmatpush1.bf16.xpose.msra.mxu0 0
    %323 = vmatprep.subr.bf16.mxu0 0
    %324 = vmatpush1.bf16.xpose.msra.mxu0 0
    %325 = vmatprep.subr.bf16.mxu0 0
    %326 = vmatpush1.bf16.xpose.msra.mxu0 0
    %327 = vmatprep.subr.bf16.mxu0 0
    %328 = vmatpush1.bf16.xpose.msra.mxu0 0
    %329 = vmatprep.subr.bf16.mxu0 0
    %330 = vmatpush1.bf16.xpose.msra.mxu0 0
    %331 = vmatprep.subr.bf16.mxu0 0
    %332 = vmatpush1.bf16.xpose.msra.mxu0 0
    %333 = vmatprep.subr.bf16.mxu0 0
    %334 = vmatpush1.bf16.xpose.msra.mxu0 0
    %335 = vmatprep.subr.bf16.mxu0 0
    %336 = vmatpush1.bf16.xpose.msra.mxu0 0
    %337 = vmatprep.mubr.bf16.mxu0 0
    %338 = vmatmul.mubr.bf16.gmra.mrb[0].mxu0 %v303
    %v339 = vpop.f32.mrb[0].mxu0
    %v340 = vadd.f32 0.0, %v339
    %v341 = vpop.f32.mrb[0].mxu0
    %v342 = vpop.f32.mrb[0].mxu0
    %v343 = vpop.f32.mrb[0].mxu0
    %344 = vdwg.mxu0
    %vm345 = vcmask 27648
    %v346 = vsel %vm345, %v340, -inf
    %347 = vmax.xlane.f32.xlu0 %v346
    %v348 = vpop.xlane.xlu0 %347
    %v349 = vsub.f32 %v340, %v348
    %v350 = vmul.f32 %v349, 1.442695
    %v351 = vpow.pop %v350
    %v352 = vsel %vm345, %v351, 0.0
    %353 = vadd.xlane.f32.xlu0 %v352
    %v354 = vpop.xlane.xlu0 %353
    %v355 = vrcp.pop %v354
    %v356 = vmul.f32 %v351, %v355
    %v357 = vpack.c.bf16 %v356, %v356
    %v358 = vpack.c.bf16 %v256, %v256
    %vm359 = vcmask 31744
    %v361 = vsel %vm359, %v357, 0
    %vm363 = vcmask 1041408
    %v365 = vsel %vm363, %v358, 0
    %367 = vmatprep.subr.bf16.mxu0 0
    %368 = vmatpush1.bf16.msra.mxu0 %v365
    %369 = vmatprep.subr.bf16.mxu0 0
    %370 = vmatpush1.bf16.msra.mxu0 0
    %371 = vmatprep.subr.bf16.mxu0 0
    %372 = vmatpush1.bf16.msra.mxu0 0
    %373 = vmatprep.subr.bf16.mxu0 0
    %374 = vmatpush1.bf16.msra.mxu0 0
    %375 = vmatprep.subr.bf16.mxu0 0
    %376 = vmatpush1.bf16.msra.mxu0 0
    %377 = vmatprep.subr.bf16.mxu0 0
    %378 = vmatpush1.bf16.msra.mxu0 0
    %379 = vmatprep.subr.bf16.mxu0 0
    %380 = vmatpush1.bf16.msra.mxu0 0
    %381 = vmatprep.subr.bf16.mxu0 0
    %382 = vmatpush1.bf16.msra.mxu0 0
    %383 = vmatprep.subr.bf16.mxu0 0
    %384 = vmatpush1.bf16.msra.mxu0 0
    %385 = vmatprep.subr.bf16.mxu0 0
    %386 = vmatpush1.bf16.msra.mxu0 0
    %387 = vmatprep.subr.bf16.mxu0 0
    %388 = vmatpush1.bf16.msra.mxu0 0
    %389 = vmatprep.subr.bf16.mxu0 0
    %390 = vmatpush1.bf16.msra.mxu0 0
    %391 = vmatprep.subr.bf16.mxu0 0
    %392 = vmatpush1.bf16.msra.mxu0 0
    %393 = vmatprep.subr.bf16.mxu0 0
    %394 = vmatpush1.bf16.msra.mxu0 0
    %395 = vmatprep.subr.bf16.mxu0 0
    %396 = vmatpush1.bf16.msra.mxu0 0
    %397 = vmatprep.subr.bf16.mxu0 0
    %398 = vmatpush1.bf16.msra.mxu0 0
    %399 = vmatprep.mubr.bf16.mxu0 0
    %400 = vmatmul.mubr.bf16.gmra.mrb[0].mxu0 %v361
    %v401 = vpop.f32.mrb[0].mxu0
    %v402 = vadd.f32 0.0, %v401
    %v403 = vpop.f32.mrb[0].mxu0
    %v404 = vpop.f32.mrb[0].mxu0
    %v405 = vpop.f32.mrb[0].mxu0
    %406 = vdwg.mxu0
    %v407 = vpack.c.bf16 %v402, %v402
    %v408 = vpack.c.bf16 %v258, %v258
    %v409 = vpack.c.bf16 %v297, %v297
    %410 = vmatprep.subr.bf16.mxu0 0
    %411 = vmatpush1.bf16.xpose.msra.mxu0 %v409
    %412 = vmatprep.subr.bf16.mxu0 0
    %413 = vmatpush1.bf16.xpose.msra.mxu0 0
    %414 = vmatprep.subr.bf16.mxu0 0
    %415 = vmatpush1.bf16.xpose.msra.mxu0 0
    %416 = vmatprep.subr.bf16.mxu0 0
    %417 = vmatpush1.bf16.xpose.msra.mxu0 0
    %418 = vmatprep.subr.bf16.mxu0 0
    %419 = vmatpush1.bf16.xpose.msra.mxu0 0
    %420 = vmatprep.subr.bf16.mxu0 0
    %421 = vmatpush1.bf16.xpose.msra.mxu0 0
    %422 = vmatprep.subr.bf16.mxu0 0
    %423 = vmatpush1.bf16.xpose.msra.mxu0 0
    %424 = vmatprep.subr.bf16.mxu0 0
    %425 = vmatpush1.bf16.xpose.msra.mxu0 0
    %426 = vmatprep.subr.bf16.mxu0 0
    %427 = vmatpush1.bf16.xpose.msra.mxu0 0
    %428 = vmatprep.subr.bf16.mxu0 0
    %429 = vmatpush1.bf16.xpose.msra.mxu0 0
    %430 = vmatprep.subr.bf16.mxu0 0
    %431 = vmatpush1.bf16.xpose.msra.mxu0 0
    %432 = vmatprep.subr.bf16.mxu0 0
    %433 = vmatpush1.bf16.xpose.msra.mxu0 0
    %434 = vmatprep.subr.bf16.mxu0 0
    %435 = vmatpush1.bf16.xpose.msra.mxu0 0
    %436 = vmatprep.subr.bf16.mxu0 0
    %437 = vmatpush1.bf16.xpose.msra.mxu0 0
    %438 = vmatprep.subr.bf16.mxu0 0
    %439 = vmatpush1.bf16.xpose.msra.mxu0 0
    %440 = vmatprep.subr.bf16.mxu0 0
    %441 = vmatpush1.bf16.xpose.msra.mxu0 0
    %442 = vmatprep.mubr.bf16.mxu0 0
    %443 = vmatmul.mubr.bf16.gmra.mrb[0].mxu0 %v408
    %v444 = vpop.f32.mrb[0].mxu0
    %v445 = vadd.f32 0.0, %v444
    %v446 = vpop.f32.mrb[0].mxu0
    %v447 = vpop.f32.mrb[0].mxu0
    %v448 = vpop.f32.mrb[0].mxu0
    %449 = vdwg.mxu0
    %v450 = vsel %vm345, %v445, -inf
    %451 = vmax.xlane.f32.xlu0 %v450
    %v452 = vpop.xlane.xlu0 %451
    %v453 = vsub.f32 %v445, %v452
    %v454 = vmul.f32 %v453, 1.442695
    %v455 = vpow.pop %v454
    %v456 = vsel %vm345, %v455, 0.0
    %457 = vadd.xlane.f32.xlu0 %v456
    %v458 = vpop.xlane.xlu0 %457
    %v459 = vrcp.pop %v458
    %v460 = vmul.f32 %v455, %v459
    %v461 = vpack.c.bf16 %v460, %v460
    %v462 = vpack.c.bf16 %v299, %v299
    %v464 = vsel %vm359, %v461, 0
    %v467 = vsel %vm363, %v462, 0
    %469 = vmatprep.subr.bf16.mxu0 0
    %470 = vmatpush1.bf16.msra.mxu0 %v467
    %471 = vmatprep.subr.bf16.mxu0 0
    %472 = vmatpush1.bf16.msra.mxu0 0
    %473 = vmatprep.subr.bf16.mxu0 0
    %474 = vmatpush1.bf16.msra.mxu0 0
    %475 = vmatprep.subr.bf16.mxu0 0
    %476 = vmatpush1.bf16.msra.mxu0 0
    %477 = vmatprep.subr.bf16.mxu0 0
    %478 = vmatpush1.bf16.msra.mxu0 0
    %479 = vmatprep.subr.bf16.mxu0 0
    %480 = vmatpush1.bf16.msra.mxu0 0
    %481 = vmatprep.subr.bf16.mxu0 0
    %482 = vmatpush1.bf16.msra.mxu0 0
    %483 = vmatprep.subr.bf16.mxu0 0
    %484 = vmatpush1.bf16.msra.mxu0 0
    %485 = vmatprep.subr.bf16.mxu0 0
    %486 = vmatpush1.bf16.msra.mxu0 0
    %487 = vmatprep.subr.bf16.mxu0 0
    %488 = vmatpush1.bf16.msra.mxu0 0
    %489 = vmatprep.subr.bf16.mxu0 0
    %490 = vmatpush1.bf16.msra.mxu0 0
    %491 = vmatprep.subr.bf16.mxu0 0
    %492 = vmatpush1.bf16.msra.mxu0 0
    %493 = vmatprep.subr.bf16.mxu0 0
    %494 = vmatpush1.bf16.msra.mxu0 0
    %495 = vmatprep.subr.bf16.mxu0 0
    %496 = vmatpush1.bf16.msra.mxu0 0
    %497 = vmatprep.subr.bf16.mxu0 0
    %498 = vmatpush1.bf16.msra.mxu0 0
    %499 = vmatprep.subr.bf16.mxu0 0
    %500 = vmatpush1.bf16.msra.mxu0 0
    %501 = vmatprep.mubr.bf16.mxu0 0
    %502 = vmatmul.mubr.bf16.gmra.mrb[0].mxu0 %v464
    %v503 = vpop.f32.mrb[0].mxu0
    %v504 = vadd.f32 0.0, %v503
    %v505 = vpop.f32.mrb[0].mxu0
    %v506 = vpop.f32.mrb[0].mxu0
    %v507 = vpop.f32.mrb[0].mxu0
    %508 = vdwg.mxu0
    %v509 = vpack.c.bf16 %v504, %v504
    %v526 = vunpack.c.l.b16 %v99
    %v527 = vunpack.c.l.b16 %v100
    %v528 = vunpack.c.l.b16 %v101
    %v529 = vunpack.c.l.b16 %v102
    %v530 = vunpack.c.l.b16 %v103
    %v531 = vunpack.c.l.b16 %v104
    %v532 = vunpack.c.l.b16 %v105
    %v533 = vunpack.c.l.b16 %v106
    %v534 = vunpack.c.l.b16 %v107
    %v535 = vunpack.c.l.b16 %v108
    %v536 = vunpack.c.l.b16 %v109
    %v537 = vunpack.c.l.b16 %v110
    %v538 = vunpack.c.l.b16 %v111
    %v539 = vunpack.c.l.b16 %v112
    %v540 = vunpack.c.l.b16 %v113
    %v541 = vunpack.c.l.b16 %v114
    %v542 = vpack.c.b16 %v527, %v526
    %v543 = vpack.c.b16 %v529, %v528
    %v544 = vpack.c.b16 %v531, %v530
    %v545 = vpack.c.b16 %v533, %v532
    %v546 = vpack.c.b16 %v535, %v534
    %v547 = vpack.c.b16 %v537, %v536
    %v548 = vpack.c.b16 %v539, %v538
    %v549 = vpack.c.b16 %v541, %v540
    %558 = vmatprep.subr.bf16.mxu0 0
    %559 = vmatpush1.bf16.msra.mxu0 %v542
    %560 = vmatprep.subr.bf16.mxu0 0
    %561 = vmatpush1.bf16.msra.mxu0 %v543
    %562 = vmatprep.subr.bf16.mxu0 0
    %563 = vmatpush1.bf16.msra.mxu0 %v544
    %564 = vmatprep.subr.bf16.mxu0 0
    %565 = vmatpush1.bf16.msra.mxu0 %v545
    %566 = vmatprep.subr.bf16.mxu0 0
    %567 = vmatpush1.bf16.msra.mxu0 %v546
    %568 = vmatprep.subr.bf16.mxu0 0
    %569 = vmatpush1.bf16.msra.mxu0 %v547
    %570 = vmatprep.subr.bf16.mxu0 0
    %571 = vmatpush1.bf16.msra.mxu0 %v548
    %572 = vmatprep.subr.bf16.mxu0 0
    %573 = vmatpush1.bf16.msra.mxu0 %v549
    %574 = vmatprep.subr.bf16.mxu0 0
    %575 = vmatpush1.bf16.msra.mxu0 0
    %576 = vmatprep.subr.bf16.mxu0 0
    %577 = vmatpush1.bf16.msra.mxu0 0
    %578 = vmatprep.subr.bf16.mxu0 0
    %579 = vmatpush1.bf16.msra.mxu0 0
    %580 = vmatprep.subr.bf16.mxu0 0
    %581 = vmatpush1.bf16.msra.mxu0 0
    %582 = vmatprep.subr.bf16.mxu0 0
    %583 = vmatpush1.bf16.msra.mxu0 0
    %584 = vmatprep.subr.bf16.mxu0 0
    %585 = vmatpush1.bf16.msra.mxu0 0
    %586 = vmatprep.subr.bf16.mxu0 0
    %587 = vmatpush1.bf16.msra.mxu0 0
    %588 = vmatprep.subr.bf16.mxu0 0
    %589 = vmatpush1.bf16.msra.mxu0 0
    %590 = vmatprep.mubr.bf16.mxu0 0
    %591 = vmatmul.mubr.bf16.gmra.mrb[0].mxu0 %v509
    %v592 = vpop.f32.mrb[0].mxu0
    %v593 = vadd.f32 0.0, %v592
    %v594 = vpop.f32.mrb[0].mxu0
    %v595 = vpop.f32.mrb[0].mxu0
    %v596 = vpop.f32.mrb[0].mxu0
    %597 = vdwg.mxu0
    %v614 = vunpack.c.l.b16 %v83
    %v615 = vunpack.c.l.b16 %v84
    %v616 = vunpack.c.l.b16 %v85
    %v617 = vunpack.c.l.b16 %v86
    %v618 = vunpack.c.l.b16 %v87
    %v619 = vunpack.c.l.b16 %v88
    %v620 = vunpack.c.l.b16 %v89
    %v621 = vunpack.c.l.b16 %v90
    %v622 = vunpack.c.l.b16 %v91
    %v623 = vunpack.c.l.b16 %v92
    %v624 = vunpack.c.l.b16 %v93
    %v625 = vunpack.c.l.b16 %v94
    %v626 = vunpack.c.l.b16 %v95
    %v627 = vunpack.c.l.b16 %v96
    %v628 = vunpack.c.l.b16 %v97
    %v629 = vunpack.c.l.b16 %v98
    %v630 = vpack.c.b16 %v615, %v614
    %v631 = vpack.c.b16 %v617, %v616
    %v632 = vpack.c.b16 %v619, %v618
    %v633 = vpack.c.b16 %v621, %v620
    %v634 = vpack.c.b16 %v623, %v622
    %v635 = vpack.c.b16 %v625, %v624
    %v636 = vpack.c.b16 %v627, %v626
    %v637 = vpack.c.b16 %v629, %v628
    %646 = vmatprep.subr.bf16.mxu0 0
    %647 = vmatpush1.bf16.msra.mxu0 %v630
    %648 = vmatprep.subr.bf16.mxu0 0
    %649 = vmatpush1.bf16.msra.mxu0 %v631
    %650 = vmatprep.subr.bf16.mxu0 0
    %651 = vmatpush1.bf16.msra.mxu0 %v632
    %652 = vmatprep.subr.bf16.mxu0 0
    %653 = vmatpush1.bf16.msra.mxu0 %v633
    %654 = vmatprep.subr.bf16.mxu0 0
    %655 = vmatpush1.bf16.msra.mxu0 %v634
    %656 = vmatprep.subr.bf16.mxu0 0
    %657 = vmatpush1.bf16.msra.mxu0 %v635
    %658 = vmatprep.subr.bf16.mxu0 0
    %659 = vmatpush1.bf16.msra.mxu0 %v636
    %660 = vmatprep.subr.bf16.mxu0 0
    %661 = vmatpush1.bf16.msra.mxu0 %v637
    %662 = vmatprep.subr.bf16.mxu0 0
    %663 = vmatpush1.bf16.msra.mxu0 0
    %664 = vmatprep.subr.bf16.mxu0 0
    %665 = vmatpush1.bf16.msra.mxu0 0
    %666 = vmatprep.subr.bf16.mxu0 0
    %667 = vmatpush1.bf16.msra.mxu0 0
    %668 = vmatprep.subr.bf16.mxu0 0
    %669 = vmatpush1.bf16.msra.mxu0 0
    %670 = vmatprep.subr.bf16.mxu0 0
    %671 = vmatpush1.bf16.msra.mxu0 0
    %672 = vmatprep.subr.bf16.mxu0 0
    %673 = vmatpush1.bf16.msra.mxu0 0
    %674 = vmatprep.subr.bf16.mxu0 0
    %675 = vmatpush1.bf16.msra.mxu0 0
    %676 = vmatprep.subr.bf16.mxu0 0
    %677 = vmatpush1.bf16.msra.mxu0 0
    %678 = vmatprep.mubr.bf16.mxu0 0
    %679 = vmatmul.mubr.bf16.gmra.mrb[0].mxu0 %v407
    %v680 = vpop.f32.mrb[0].mxu0
    %v681 = vadd.f32 %v593, %v680
    %v682 = vpop.f32.mrb[0].mxu0
    %v683 = vpop.f32.mrb[0].mxu0
    %v684 = vpop.f32.mrb[0].mxu0
    %685 = vdwg.mxu0
    %v686 = vlaneseq
    %v687 = vshrl.u32 %v686, 7
    %v688 = vsub.s32 1, %v687
    %v689 = vrot.slane %v115, %v688
    %v690 = vadd.f32 %v681, %v689
    %v691 = vadd.f32 %v76, %v690
    %vm692 = vcmask 125952
    %v693 = vsel %vm692, %v691, 0.0
    %694 = vadd.xlane.f32.xlu0 %v693
    %v695 = vpop.xlane.xlu0 %694
    %v696 = vrcp.pop 16.0
    %v697 = vmul.f32 %v695, %v696
    %v698 = vsub.f32 %v691, %v697
    %v699 = vmul.f32 %v698, %v698
    %v700 = vsel %vm692, %v699, 0.0
    %701 = vadd.xlane.f32.xlu0 %v700
    %v702 = vpop.xlane.xlu0 %701
    %v703 = vmul.f32 %v702, %v696
    %v704 = vadd.f32 %v703, 1e-05
    %v705 = vrsqrt.pop %v704
    %v706 = vmul.f32 %v698, %v705
    %v707 = vlaneseq
    %v708 = vshrl.u32 %v707, 7
    %v709 = vsub.s32 2, %v708
    %v710 = vrot.slane %v115, %v709
    %v711 = vmul.f32 %v706, %v710
    %v712 = vlaneseq
    %v713 = vshrl.u32 %v712, 7
    %v714 = vsub.s32 3, %v713
    %v715 = vrot.slane %v115, %v714
    %v716 = vadd.f32 %v711, %v715
    %v717 = vpack.c.bf16 %v716, %v716
    %v718 = vld [vmem:[#allocation2] sm:$0xf]
    %v719 = vld [vmem:[#allocation2 + $0x4] sm:$0xf]
    %v720 = vlaneseq
    %v721 = vshrl.u32 %v720, 7
    %v722 = vsub.s32 4, %v721
    %v723 = vrot.slane %v115, %v722
    %v726 = vunpack.c.l.b16 %v718
    %v727 = vunpack.c.l.b16 %v719
    %v728 = vpack.c.b16 %v727, %v726
    %v731 = vsel %vm176, %v717, 0
    %733 = vmatprep.subr.bf16.mxu0 0
    %734 = vmatpush1.bf16.msra.mxu0 %v728
    %735 = vmatprep.subr.bf16.mxu0 0
    %736 = vmatpush1.bf16.msra.mxu0 0
    %737 = vmatprep.subr.bf16.mxu0 0
    %738 = vmatpush1.bf16.msra.mxu0 0
    %739 = vmatprep.subr.bf16.mxu0 0
    %740 = vmatpush1.bf16.msra.mxu0 0
    %741 = vmatprep.subr.bf16.mxu0 0
    %742 = vmatpush1.bf16.msra.mxu0 0
    %743 = vmatprep.subr.bf16.mxu0 0
    %744 = vmatpush1.bf16.msra.mxu0 0
    %745 = vmatprep.subr.bf16.mxu0 0
    %746 = vmatpush1.bf16.msra.mxu0 0
    %747 = vmatprep.subr.bf16.mxu0 0
    %748 = vmatpush1.bf16.msra.mxu0 0
    %749 = vmatprep.subr.bf16.mxu0 0
    %750 = vmatpush1.bf16.msra.mxu0 0
    %751 = vmatprep.subr.bf16.mxu0 0
    %752 = vmatpush1.bf16.msra.mxu0 0
    %753 = vmatprep.subr.bf16.mxu0 0
    %754 = vmatpush1.bf16.msra.mxu0 0
    %755 = vmatprep.subr.bf16.mxu0 0
    %756 = vmatpush1.bf16.msra.mxu0 0
    %757 = vmatprep.subr.bf16.mxu0 0
    %758 = vmatpush1.bf16.msra.mxu0 0
    %759 = vmatprep.subr.bf16.mxu0 0
    %760 = vmatpush1.bf16.msra.mxu0 0
    %761 = vmatprep.subr.bf16.mxu0 0
    %762 = vmatpush1.bf16.msra.mxu0 0
    %763 = vmatprep.subr.bf16.mxu0 0
    %764 = vmatpush1.bf16.msra.mxu0 0
    %765 = vmatprep.mubr.bf16.mxu0 0
    %766 = vmatmul.mubr.bf16.gmra.mrb[0].mxu0 %v731
    %v767 = vpop.f32.mrb[0].mxu0
    %v768 = vadd.f32 %v723, %v767
    %v769 = vpop.f32.mrb[0].mxu0
    %v770 = vpop.f32.mrb[0].mxu0
    %v771 = vpop.f32.mrb[0].mxu0
    %772 = vdwg.mxu0
    %v773 = vmax.f32 %v768, 0.0
    %v774 = vpack.c.bf16 %v773, %v773
    %v775 = vld [vmem:[%s4] sm:$0xf]
    %v776 = vld [vmem:[%s4 + $0x4] sm:$0xf]
    %v777 = vld [vmem:[%s4 + $0x8] sm:$0xf]
    %v778 = vld [vmem:[%s4 + $0xc] sm:$0xf]
    %v779 = vlaneseq
    %v780 = vshrl.u32 %v779, 7
    %v781 = vsub.s32 5, %v780
    %v782 = vrot.slane %v115, %v781
    %v787 = vunpack.c.l.b16 %v775
    %v788 = vunpack.c.l.b16 %v776
    %v789 = vunpack.c.l.b16 %v777
    %v790 = vunpack.c.l.b16 %v778
    %v791 = vpack.c.b16 %v788, %v787
    %v792 = vpack.c.b16 %v790, %v789
    %vm795 = vcmask 261120
    %v797 = vsel %vm795, %v774, 0
    %799 = vmatprep.subr.bf16.mxu0 0
    %800 = vmatpush1.bf16.msra.mxu0 %v791
    %801 = vmatprep.subr.bf16.mxu0 0
    %802 = vmatpush1.bf16.msra.mxu0 %v792
    %803 = vmatprep.subr.bf16.mxu0 0
    %804 = vmatpush1.bf16.msra.mxu0 0
    %805 = vmatprep.subr.bf16.mxu0 0
    %806 = vmatpush1.bf16.msra.mxu0 0
    %807 = vmatprep.subr.bf16.mxu0 0
    %808 = vmatpush1.bf16.msra.mxu0 0
    %809 = vmatprep.subr.bf16.mxu0 0
    %810 = vmatpush1.bf16.msra.mxu0 0
    %811 = vmatprep.subr.bf16.mxu0 0
    %812 = vmatpush1.bf16.msra.mxu0 0
    %813 = vmatprep.subr.bf16.mxu0 0
    %814 = vmatpush1.bf16.msra.mxu0 0
    %815 = vmatprep.subr.bf16.mxu0 0
    %816 = vmatpush1.bf16.msra.mxu0 0
    %817 = vmatprep.subr.bf16.mxu0 0
    %818 = vmatpush1.bf16.msra.mxu0 0
    %819 = vmatprep.subr.bf16.mxu0 0
    %820 = vmatpush1.bf16.msra.mxu0 0
    %821 = vmatprep.subr.bf16.mxu0 0
    %822 = vmatpush1.bf16.msra.mxu0 0
    %823 = vmatprep.subr.bf16.mxu0 0
    %824 = vmatpush1.bf16.msra.mxu0 0
    %825 = vmatprep.subr.bf16.mxu0 0
    %826 = vmatpush1.bf16.msra.mxu0 0
    %827 = vmatprep.subr.bf16.mxu0 0
    %828 = vmatpush1.bf16.msra.mxu0 0
    %829 = vmatprep.subr.bf16.mxu0 0
    %830 = vmatpush1.bf16.msra.mxu0 0
    %831 = vmatprep.mubr.bf16.mxu0 0
    %832 = vmatmul.mubr.bf16.gmra.mrb[0].mxu0 %v797
    %v833 = vpop.f32.mrb[0].mxu0
    %v834 = vadd.f32 %v782, %v833
    %v835 = vpop.f32.mrb[0].mxu0
    %v836 = vpop.f32.mrb[0].mxu0
    %v837 = vpop.f32.mrb[0].mxu0
    %838 = vdwg.mxu0
    %v839 = vadd.f32 %v716, %v834
    %v840 = vsel %vm692, %v839, 0.0
    %841 = vadd.xlane.f32.xlu0 %v840
    %v842 = vpop.xlane.xlu0 %841
    %v843 = vmul.f32 %v842, %v696
    %v844 = vsub.f32 %v839, %v843
    %v845 = vmul.f32 %v844, %v844
    %v846 = vsel %vm692, %v845, 0.0
    %847 = vadd.xlane.f32.xlu0 %v846
    %v848 = vpop.xlane.xlu0 %847
    %v849 = vmul.f32 %v848, %v696
    %v850 = vadd.f32 %v849, 1e-05
    %v851 = vrsqrt.pop %v850
    %v852 = vmul.f32 %v844, %v851
    %v853 = vlaneseq
    %v854 = vshrl.u32 %v853, 7
    %v855 = vsub.s32 6, %v854
    %v856 = vrot.slane %v115, %v855
    %v857 = vmul.f32 %v852, %v856
    %v858 = vlaneseq
    %v859 = vshrl.u32 %v858, 7
    %v860 = vsub.s32 7, %v859
    %v861 = vrot.slane %v115, %v860
    %v862 = vadd.f32 %v857, %v861
    %s863 = scalar_lea.vmem %s1, 48
    %v864 = vld [vmem:[%s863] sm:$0xff]
    %v865 = vld [vmem:[%s863 + $0x8] sm:$0xff]
    %v866 = vld [vmem:[%s863 + $0x10] sm:$0xff]
    %v867 = vld [vmem:[%s863 + $0x18] sm:$0xff]
    %v868 = vld [vmem:[%s863 + $0x20] sm:$0xff]
    %v869 = vld [vmem:[%s863 + $0x28] sm:$0xff]
    %s870 = scalar_lea.vmem %s2, 128
    %v871 = vld [vmem:[%s870] sm:$0xf]
    %v872 = vld [vmem:[%s870 + $0x4] sm:$0xf]
    %v873 = vld [vmem:[%s870 + $0x8] sm:$0xf]
    %v874 = vld [vmem:[%s870 + $0xc] sm:$0xf]
    %v875 = vld [vmem:[%s870 + $0x10] sm:$0xf]
    %v876 = vld [vmem:[%s870 + $0x14] sm:$0xf]
    %v877 = vld [vmem:[%s870 + $0x18] sm:$0xf]
    %v878 = vld [vmem:[%s870 + $0x1c] sm:$0xf]
    %v879 = vld [vmem:[%s870 + $0x20] sm:$0xf]
    %v880 = vld [vmem:[%s870 + $0x24] sm:$0xf]
    %v881 = vld [vmem:[%s870 + $0x28] sm:$0xf]
    %v882 = vld [vmem:[%s870 + $0x2c] sm:$0xf]
    %v883 = vld [vmem:[%s870 + $0x30] sm:$0xf]
    %v884 = vld [vmem:[%s870 + $0x34] sm:$0xf]
    %v885 = vld [vmem:[%s870 + $0x38] sm:$0xf]
    %v886 = vld [vmem:[%s870 + $0x3c] sm:$0xf]
    %v887 = vld [vmem:[%s870 + $0x40] sm:$0xf]
    %v888 = vld [vmem:[%s870 + $0x44] sm:$0xf]
    %v889 = vld [vmem:[%s870 + $0x48] sm:$0xf]
    %v890 = vld [vmem:[%s870 + $0x4c] sm:$0xf]
    %v891 = vld [vmem:[%s870 + $0x50] sm:$0xf]
    %v892 = vld [vmem:[%s870 + $0x54] sm:$0xf]
    %v893 = vld [vmem:[%s870 + $0x58] sm:$0xf]
    %v894 = vld [vmem:[%s870 + $0x5c] sm:$0xf]
    %v895 = vld [vmem:[%s870 + $0x60] sm:$0xf]
    %v896 = vld [vmem:[%s870 + $0x64] sm:$0xf]
    %v897 = vld [vmem:[%s870 + $0x68] sm:$0xf]
    %v898 = vld [vmem:[%s870 + $0x6c] sm:$0xf]
    %v899 = vld [vmem:[%s870 + $0x70] sm:$0xf]
    %v900 = vld [vmem:[%s870 + $0x74] sm:$0xf]
    %v901 = vld [vmem:[%s870 + $0x78] sm:$0xf]
    %v902 = vld [vmem:[%s870 + $0x7c] sm:$0xf]
    %s903 = scalar_lea.vmem %s5, 48
    %v904 = vld [vmem:[%s903] sm:$0xff]
    %v905 = vld [vmem:[%s903 + $0x8] sm:$0xff]
    %v906 = vld [vmem:[%s903 + $0x10] sm:$0xff]
    %v907 = vld [vmem:[%s903 + $0x18] sm:$0xff]
    %v908 = vld [vmem:[%s903 + $0x20] sm:$0xff]
    %v909 = vld [vmem:[%s903 + $0x28] sm:$0xff]
    %v910 = vpack.c.bf16 %v862, %v862
    %v911 = vlaneseq
    %v912 = vshrl.u32 %v911, 7
    %v913 = vsub.s32 0, %v912
    %v914 = vrot.slane %v904, %v913
    %v915 = vlaneseq
    %v916 = vshrl.u32 %v915, 7
    %v917 = vsub.s32 0, %v916
    %v918 = vrot.slane %v905, %v917
    %v919 = vlaneseq
    %v920 = vshrl.u32 %v919, 7
    %v921 = vsub.s32 0, %v920
    %v922 = vrot.slane %v906, %v921
    %v923 = vlaneseq
    %v924 = vshrl.u32 %v923, 7
    %v925 = vsub.s32 0, %v924
    %v926 = vrot.slane %v907, %v925
    %v927 = vlaneseq
    %v928 = vshrl.u32 %v927, 7
    %v929 = vsub.s32 0, %v928
    %v930 = vrot.slane %v908, %v929
    %v931 = vlaneseq
    %v932 = vshrl.u32 %v931, 7
    %v933 = vsub.s32 0, %v932
    %v934 = vrot.slane %v909, %v933
    %v941 = vunpack.c.l.b16 %v864
    %v942 = vunpack.c.h.b16 %v864
    %v943 = vunpack.c.l.b16 %v865
    %v944 = vunpack.c.h.b16 %v865
    %v945 = vunpack.c.l.b16 %v866
    %v946 = vunpack.c.h.b16 %v866
    %v947 = vunpack.c.l.b16 %v867
    %v948 = vunpack.c.h.b16 %v867
    %v949 = vunpack.c.l.b16 %v868
    %v950 = vunpack.c.h.b16 %v868
    %v951 = vunpack.c.l.b16 %v869
    %v952 = vunpack.c.h.b16 %v869
    %v953 = vpack.c.b16 %v947, %v941
    %v954 = vpack.c.b16 %v948, %v942
    %v955 = vpack.c.b16 %v949, %v943
    %v956 = vpack.c.b16 %v950, %v944
    %v957 = vpack.c.b16 %v951, %v945
    %v958 = vpack.c.b16 %v952, %v946
    %v966 = vsel %vm176, %v910, 0
    %968 = vmatprep.subr.bf16.mxu0 %v954
    %969 = vmatpush1.bf16.msra.mxu0 %v953
    %970 = vmatprep.subr.bf16.mxu0 0
    %971 = vmatpush1.bf16.msra.mxu0 0
    %972 = vmatprep.subr.bf16.mxu0 0
    %973 = vmatpush1.bf16.msra.mxu0 0
    %974 = vmatprep.subr.bf16.mxu0 0
    %975 = vmatpush1.bf16.msra.mxu0 0
    %976 = vmatprep.subr.bf16.mxu0 0
    %977 = vmatpush1.bf16.msra.mxu0 0
    %978 = vmatprep.subr.bf16.mxu0 0
    %979 = vmatpush1.bf16.msra.mxu0 0
    %980 = vmatprep.subr.bf16.mxu0 0
    %981 = vmatpush1.bf16.msra.mxu0 0
    %982 = vmatprep.subr.bf16.mxu0 0
    %983 = vmatpush1.bf16.msra.mxu0 0
    %984 = vmatprep.subr.bf16.mxu0 0
    %985 = vmatpush1.bf16.msra.mxu0 0
    %986 = vmatprep.subr.bf16.mxu0 0
    %987 = vmatpush1.bf16.msra.mxu0 0
    %988 = vmatprep.subr.bf16.mxu0 0
    %989 = vmatpush1.bf16.msra.mxu0 0
    %990 = vmatprep.subr.bf16.mxu0 0
    %991 = vmatpush1.bf16.msra.mxu0 0
    %992 = vmatprep.subr.bf16.mxu0 0
    %993 = vmatpush1.bf16.msra.mxu0 0
    %994 = vmatprep.subr.bf16.mxu0 0
    %995 = vmatpush1.bf16.msra.mxu0 0
    %996 = vmatprep.subr.bf16.mxu0 0
    %997 = vmatpush1.bf16.msra.mxu0 0
    %998 = vmatprep.subr.bf16.mxu0 0
    %999 = vmatpush1.bf16.msra.mxu0 0
    %1000 = vmatprep.mubr.bf16.mxu0 0
    %1001 = vmatmul.mubr.bf16.gmra.mrb[0].mxu0 %v966
    %v1002 = vpop.f32.mrb[0].mxu0
    %v1003 = vadd.f32 %v914, %v1002
    %v1004 = vpop.f32.mrb[0].mxu0
    %v1005 = vadd.f32 %v918, %v1004
    %v1006 = vpop.f32.mrb[0].mxu0
    %v1007 = vpop.f32.mrb[0].mxu0
    %1008 = vdwg.mxu0
    %1009 = vmatprep.subr.bf16.mxu0 %v956
    %1010 = vmatpush1.bf16.msra.mxu0 %v955
    %1011 = vmatprep.subr.bf16.mxu0 0
    %1012 = vmatpush1.bf16.msra.mxu0 0
    %1013 = vmatprep.subr.bf16.mxu0 0
    %1014 = vmatpush1.bf16.msra.mxu0 0
    %1015 = vmatprep.subr.bf16.mxu0 0
    %1016 = vmatpush1.bf16.msra.mxu0 0
    %1017 = vmatprep.subr.bf16.mxu0 0
    %1018 = vmatpush1.bf16.msra.mxu0 0
    %1019 = vmatprep.subr.bf16.mxu0 0
    %1020 = vmatpush1.bf16.msra.mxu0 0
    %1021 = vmatprep.subr.bf16.mxu0 0
    %1022 = vmatpush1.bf16.msra.mxu0 0
    %1023 = vmatprep.subr.bf16.mxu0 0
    %1024 = vmatpush1.bf16.msra.mxu0 0
    %1025 = vmatprep.subr.bf16.mxu0 0
    %1026 = vmatpush1.bf16.msra.mxu0 0
    %1027 = vmatprep.subr.bf16.mxu0 0
    %1028 = vmatpush1.bf16.msra.mxu0 0
    %1029 = vmatprep.subr.bf16.mxu0 0
    %1030 = vmatpush1.bf16.msra.mxu0 0
    %1031 = vmatprep.subr.bf16.mxu0 0
    %1032 = vmatpush1.bf16.msra.mxu0 0
    %1033 = vmatprep.subr.bf16.mxu0 0
    %1034 = vmatpush1.bf16.msra.mxu0 0
    %1035 = vmatprep.subr.bf16.mxu0 0
    %1036 = vmatpush1.bf16.msra.mxu0 0
    %1037 = vmatprep.subr.bf16.mxu0 0
    %1038 = vmatpush1.bf16.msra.mxu0 0
    %1039 = vmatprep.subr.bf16.mxu0 0
    %1040 = vmatpush1.bf16.msra.mxu0 0
    %1041 = vmatprep.mubr.bf16.mxu0 0
    %1042 = vmatmul.mubr.bf16.gmra.mrb[0].mxu0 %v966
    %v1043 = vpop.f32.mrb[0].mxu0
    %v1044 = vadd.f32 %v922, %v1043
    %v1045 = vpop.f32.mrb[0].mxu0
    %v1046 = vadd.f32 %v926, %v1045
    %v1047 = vpop.f32.mrb[0].mxu0
    %v1048 = vpop.f32.mrb[0].mxu0
    %1049 = vdwg.mxu0
    %1050 = vmatprep.subr.bf16.mxu0 %v958
    %1051 = vmatpush1.bf16.msra.mxu0 %v957
    %1052 = vmatprep.subr.bf16.mxu0 0
    %1053 = vmatpush1.bf16.msra.mxu0 0
    %1054 = vmatprep.subr.bf16.mxu0 0
    %1055 = vmatpush1.bf16.msra.mxu0 0
    %1056 = vmatprep.subr.bf16.mxu0 0
    %1057 = vmatpush1.bf16.msra.mxu0 0
    %1058 = vmatprep.subr.bf16.mxu0 0
    %1059 = vmatpush1.bf16.msra.mxu0 0
    %1060 = vmatprep.subr.bf16.mxu0 0
    %1061 = vmatpush1.bf16.msra.mxu0 0
    %1062 = vmatprep.subr.bf16.mxu0 0
    %1063 = vmatpush1.bf16.msra.mxu0 0
    %1064 = vmatprep.subr.bf16.mxu0 0
    %1065 = vmatpush1.bf16.msra.mxu0 0
    %1066 = vmatprep.subr.bf16.mxu0 0
    %1067 = vmatpush1.bf16.msra.mxu0 0
    %1068 = vmatprep.subr.bf16.mxu0 0
    %1069 = vmatpush1.bf16.msra.mxu0 0
    %1070 = vmatprep.subr.bf16.mxu0 0
    %1071 = vmatpush1.bf16.msra.mxu0 0
    %1072 = vmatprep.subr.bf16.mxu0 0
    %1073 = vmatpush1.bf16.msra.mxu0 0
    %1074 = vmatprep.subr.bf16.mxu0 0
    %1075 = vmatpush1.bf16.msra.mxu0 0
    %1076 = vmatprep.subr.bf16.mxu0 0
    %1077 = vmatpush1.bf16.msra.mxu0 0
    %1078 = vmatprep.subr.bf16.mxu0 0
    %1079 = vmatpush1.bf16.msra.mxu0 0
    %1080 = vmatprep.subr.bf16.mxu0 0
    %1081 = vmatpush1.bf16.msra.mxu0 0
    %1082 = vmatprep.mubr.bf16.mxu0 0
    %1083 = vmatmul.mubr.bf16.gmra.mrb[0].mxu0 %v966
    %v1084 = vpop.f32.mrb[0].mxu0
    %v1085 = vadd.f32 %v930, %v1084
    %v1086 = vpop.f32.mrb[0].mxu0
    %v1087 = vadd.f32 %v934, %v1086
    %v1088 = vpop.f32.mrb[0].mxu0
    %v1089 = vpop.f32.mrb[0].mxu0
    %1090 = vdwg.mxu0
    %v1091 = vpack.c.bf16 %v1003, %v1003
    %v1092 = vpack.c.bf16 %v1005, %v1005
    %1093 = vmatprep.subr.bf16.mxu0 0
    %1094 = vmatpush1.bf16.xpose.msra.mxu0 %v1092
    %1095 = vmatprep.subr.bf16.mxu0 0
    %1096 = vmatpush1.bf16.xpose.msra.mxu0 0
    %1097 = vmatprep.subr.bf16.mxu0 0
    %1098 = vmatpush1.bf16.xpose.msra.mxu0 0
    %1099 = vmatprep.subr.bf16.mxu0 0
    %1100 = vmatpush1.bf16.xpose.msra.mxu0 0
    %1101 = vmatprep.subr.bf16.mxu0 0
    %1102 = vmatpush1.bf16.xpose.msra.mxu0 0
    %1103 = vmatprep.subr.bf16.mxu0 0
    %1104 = vmatpush1.bf16.xpose.msra.mxu0 0
    %1105 = vmatprep.subr.bf16.mxu0 0
    %1106 = vmatpush1.bf16.xpose.msra.mxu0 0
    %1107 = vmatprep.subr.bf16.mxu0 0
    %1108 = vmatpush1.bf16.xpose.msra.mxu0 0
    %1109 = vmatprep.subr.bf16.mxu0 0
    %1110 = vmatpush1.bf16.xpose.msra.mxu0 0
    %1111 = vmatprep.subr.bf16.mxu0 0
    %1112 = vmatpush1.bf16.xpose.msra.mxu0 0
    %1113 = vmatprep.subr.bf16.mxu0 0
    %1114 = vmatpush1.bf16.xpose.msra.mxu0 0
    %1115 = vmatprep.subr.bf16.mxu0 0
    %1116 = vmatpush1.bf16.xpose.msra.mxu0 0
    %1117 = vmatprep.subr.bf16.mxu0 0
    %1118 = vmatpush1.bf16.xpose.msra.mxu0 0
    %1119 = vmatprep.subr.bf16.mxu0 0
    %1120 = vmatpush1.bf16.xpose.msra.mxu0 0
    %1121 = vmatprep.subr.bf16.mxu0 0
    %1122 = vmatpush1.bf16.xpose.msra.mxu0 0
    %1123 = vmatprep.subr.bf16.mxu0 0
    %1124 = vmatpush1.bf16.xpose.msra.mxu0 0
    %1125 = vmatprep.mubr.bf16.mxu0 0
    %1126 = vmatmul.mubr.bf16.gmra.mrb[0].mxu0 %v1091
    %v1127 = vpop.f32.mrb[0].mxu0
    %v1128 = vadd.f32 0.0, %v1127
    %v1129 = vpop.f32.mrb[0].mxu0
    %v1130 = vpop.f32.mrb[0].mxu0
    %v1131 = vpop.f32.mrb[0].mxu0
    %1132 = vdwg.mxu0
    %v1133 = vsel %vm345, %v1128, -inf
    %1134 = vmax.xlane.f32.xlu0 %v1133
    %v1135 = vpop.xlane.xlu0 %1134
    %v1136 = vsub.f32 %v1128, %v1135
    %v1137 = vmul.f32 %v1136, 1.442695
    %v1138 = vpow.pop %v1137
    %v1139 = vsel %vm345, %v1138, 0.0
    %1140 = vadd.xlane.f32.xlu0 %v1139
    %v1141 = vpop.xlane.xlu0 %1140
    %v1142 = vrcp.pop %v1141
    %v1143 = vmul.f32 %v1138, %v1142
    %v1144 = vpack.c.bf16 %v1143, %v1143
    %v1145 = vpack.c.bf16 %v1044, %v1044
    %v1147 = vsel %vm359, %v1144, 0
    %v1150 = vsel %vm363, %v1145, 0
    %1152 = vmatprep.subr.bf16.mxu0 0
    %1153 = vmatpush1.bf16.msra.mxu0 %v1150
    %1154 = vmatprep.subr.bf16.mxu0 0
    %1155 = vmatpush1.bf16.msra.mxu0 0
    %1156 = vmatprep.subr.bf16.mxu0 0
    %1157 = vmatpush1.bf16.msra.mxu0 0
    %1158 = vmatprep.subr.bf16.mxu0 0
    %1159 = vmatpush1.bf16.msra.mxu0 0
    %1160 = vmatprep.subr.bf16.mxu0 0
    %1161 = vmatpush1.bf16.msra.mxu0 0
    %1162 = vmatprep.subr.bf16.mxu0 0
    %1163 = vmatpush1.bf16.msra.mxu0 0
    %1164 = vmatprep.subr.bf16.mxu0 0
    %1165 = vmatpush1.bf16.msra.mxu0 0
    %1166 = vmatprep.subr.bf16.mxu0 0
    %1167 = vmatpush1.bf16.msra.mxu0 0
    %1168 = vmatprep.subr.bf16.mxu0 0
    %1169 = vmatpush1.bf16.msra.mxu0 0
    %1170 = vmatprep.subr.bf16.mxu0 0
    %1171 = vmatpush1.bf16.msra.mxu0 0
    %1172 = vmatprep.subr.bf16.mxu0 0
    %1173 = vmatpush1.bf16.msra.mxu0 0
    %1174 = vmatprep.subr.bf16.mxu0 0
    %1175 = vmatpush1.bf16.msra.mxu0 0
    %1176 = vmatprep.subr.bf16.mxu0 0
    %1177 = vmatpush1.bf16.msra.mxu0 0
    %1178 = vmatprep.subr.bf16.mxu0 0
    %1179 = vmatpush1.bf16.msra.mxu0 0
    %1180 = vmatprep.subr.bf16.mxu0 0
    %1181 = vmatpush1.bf16.msra.mxu0 0
    %1182 = vmatprep.subr.bf16.mxu0 0
    %1183 = vmatpush1.bf16.msra.mxu0 0
    %1184 = vmatprep.mubr.bf16.mxu0 0
    %1185 = vmatmul.mubr.bf16.gmra.mrb[0].mxu0 %v1147
    %v1186 = vpop.f32.mrb[0].mxu0
    %v1187 = vadd.f32 0.0, %v1186
    %v1188 = vpop.f32.mrb[0].mxu0
    %v1189 = vpop.f32.mrb[0].mxu0
    %v1190 = vpop.f32.mrb[0].mxu0
    %1191 = vdwg.mxu0
    %v1192 = vpack.c.bf16 %v1187, %v1187
    %v1193 = vpack.c.bf16 %v1046, %v1046
    %v1194 = vpack.c.bf16 %v1085, %v1085
    %1195 = vmatprep.subr.bf16.mxu0 0
    %1196 = vmatpush1.bf16.xpose.msra.mxu0 %v1194
    %1197 = vmatprep.subr.bf16.mxu0 0
    %1198 = vmatpush1.bf16.xpose.msra.mxu0 0
    %1199 = vmatprep.subr.bf16.mxu0 0
    %1200 = vmatpush1.bf16.xpose.msra.mxu0 0
    %1201 = vmatprep.subr.bf16.mxu0 0
    %1202 = vmatpush1.bf16.xpose.msra.mxu0 0
    %1203 = vmatprep.subr.bf16.mxu0 0
    %1204 = vmatpush1.bf16.xpose.msra.mxu0 0
    %1205 = vmatprep.subr.bf16.mxu0 0
    %1206 = vmatpush1.bf16.xpose.msra.mxu0 0
    %1207 = vmatprep.subr.bf16.mxu0 0
    %1208 = vmatpush1.bf16.xpose.msra.mxu0 0
    %1209 = vmatprep.subr.bf16.mxu0 0
    %1210 = vmatpush1.bf16.xpose.msra.mxu0 0
    %1211 = vmatprep.subr.bf16.mxu0 0
    %1212 = vmatpush1.bf16.xpose.msra.mxu0 0
    %1213 = vmatprep.subr.bf16.mxu0 0
    %1214 = vmatpush1.bf16.xpose.msra.mxu0 0
    %1215 = vmatprep.subr.bf16.mxu0 0
    %1216 = vmatpush1.bf16.xpose.msra.mxu0 0
    %1217 = vmatprep.subr.bf16.mxu0 0
    %1218 = vmatpush1.bf16.xpose.msra.mxu0 0
    %1219 = vmatprep.subr.bf16.mxu0 0
    %1220 = vmatpush1.bf16.xpose.msra.mxu0 0
    %1221 = vmatprep.subr.bf16.mxu0 0
    %1222 = vmatpush1.bf16.xpose.msra.mxu0 0
    %1223 = vmatprep.subr.bf16.mxu0 0
    %1224 = vmatpush1.bf16.xpose.msra.mxu0 0
    %1225 = vmatprep.subr.bf16.mxu0 0
    %1226 = vmatpush1.bf16.xpose.msra.mxu0 0
    %1227 = vmatprep.mubr.bf16.mxu0 0
    %1228 = vmatmul.mubr.bf16.gmra.mrb[0].mxu0 %v1193
    %v1229 = vpop.f32.mrb[0].mxu0
    %v1230 = vadd.f32 0.0, %v1229
    %v1231 = vpop.f32.mrb[0].mxu0
    %v1232 = vpop.f32.mrb[0].mxu0
    %v1233 = vpop.f32.mrb[0].mxu0
    %1234 = vdwg.mxu0
    %v1235 = vsel %vm345, %v1230, -inf
    %1236 = vmax.xlane.f32.xlu0 %v1235
    %v1237 = vpop.xlane.xlu0 %1236
    %v1238 = vsub.f32 %v1230, %v1237
    %v1239 = vmul.f32 %v1238, 1.442695
    %v1240 = vpow.pop %v1239
    %v1241 = vsel %vm345, %v1240, 0.0
    %1242 = vadd.xlane.f32.xlu0 %v1241
    %v1243 = vpop.xlane.xlu0 %1242
    %v1244 = vrcp.pop %v1243
    %v1245 = vmul.f32 %v1240, %v1244
    %v1246 = vpack.c.bf16 %v1245, %v1245
    %v1247 = vpack.c.bf16 %v1087, %v1087
    %v1249 = vsel %vm359, %v1246, 0
    %v1252 = vsel %vm363, %v1247, 0
    %1254 = vmatprep.subr.bf16.mxu0 0
    %1255 = vmatpush1.bf16.msra.mxu0 %v1252
    %1256 = vmatprep.subr.bf16.mxu0 0
    %1257 = vmatpush1.bf16.msra.mxu0 0
    %1258 = vmatprep.subr.bf16.mxu0 0
    %1259 = vmatpush1.bf16.msra.mxu0 0
    %1260 = vmatprep.subr.bf16.mxu0 0
    %1261 = vmatpush1.bf16.msra.mxu0 0
    %1262 = vmatprep.subr.bf16.mxu0 0
    %1263 = vmatpush1.bf16.msra.mxu0 0
    %1264 = vmatprep.subr.bf16.mxu0 0
    %1265 = vmatpush1.bf16.msra.mxu0 0
    %1266 = vmatprep.subr.bf16.mxu0 0
    %1267 = vmatpush1.bf16.msra.mxu0 0
    %1268 = vmatprep.subr.bf16.mxu0 0
    %1269 = vmatpush1.bf16.msra.mxu0 0
    %1270 = vmatprep.subr.bf16.mxu0 0
    %1271 = vmatpush1.bf16.msra.mxu0 0
    %1272 = vmatprep.subr.bf16.mxu0 0
    %1273 = vmatpush1.bf16.msra.mxu0 0
    %1274 = vmatprep.subr.bf16.mxu0 0
    %1275 = vmatpush1.bf16.msra.mxu0 0
    %1276 = vmatprep.subr.bf16.mxu0 0
    %1277 = vmatpush1.bf16.msra.mxu0 0
    %1278 = vmatprep.subr.bf16.mxu0 0
    %1279 = vmatpush1.bf16.msra.mxu0 0
    %1280 = vmatprep.subr.bf16.mxu0 0
    %1281 = vmatpush1.bf16.msra.mxu0 0
    %1282 = vmatprep.subr.bf16.mxu0 0
    %1283 = vmatpush1.bf16.msra.mxu0 0
    %1284 = vmatprep.subr.bf16.mxu0 0
    %1285 = vmatpush1.bf16.msra.mxu0 0
    %1286 = vmatprep.mubr.bf16.mxu0 0
    %1287 = vmatmul.mubr.bf16.gmra.mrb[0].mxu0 %v1249
    %v1288 = vpop.f32.mrb[0].mxu0
    %v1289 = vadd.f32 0.0, %v1288
    %v1290 = vpop.f32.mrb[0].mxu0
    %v1291 = vpop.f32.mrb[0].mxu0
    %v1292 = vpop.f32.mrb[0].mxu0
    %1293 = vdwg.mxu0
    %v1294 = vpack.c.bf16 %v1289, %v1289
    %v1311 = vunpack.c.l.b16 %v887
    %v1312 = vunpack.c.l.b16 %v888
    %v1313 = vunpack.c.l.b16 %v889
    %v1314 = vunpack.c.l.b16 %v890
    %v1315 = vunpack.c.l.b16 %v891
    %v1316 = vunpack.c.l.b16 %v892
    %v1317 = vunpack.c.l.b16 %v893
    %v1318 = vunpack.c.l.b16 %v894
    %v1319 = vunpack.c.l.b16 %v895
    %v1320 = vunpack.c.l.b16 %v896
    %v1321 = vunpack.c.l.b16 %v897
    %v1322 = vunpack.c.l.b16 %v898
    %v1323 = vunpack.c.l.b16 %v899
    %v1324 = vunpack.c.l.b16 %v900
    %v1325 = vunpack.c.l.b16 %v901
    %v1326 = vunpack.c.l.b16 %v902
    %v1327 = vpack.c.b16 %v1312, %v1311
    %v1328 = vpack.c.b16 %v1314, %v1313
    %v1329 = vpack.c.b16 %v1316, %v1315
    %v1330 = vpack.c.b16 %v1318, %v1317
    %v1331 = vpack.c.b16 %v1320, %v1319
    %v1332 = vpack.c.b16 %v1322, %v1321
    %v1333 = vpack.c.b16 %v1324, %v1323
    %v1334 = vpack.c.b16 %v1326, %v1325
    %1343 = vmatprep.subr.bf16.mxu0 0
    %1344 = vmatpush1.bf16.msra.mxu0 %v1327
    %1345 = vmatprep.subr.bf16.mxu0 0
    %1346 = vmatpush1.bf16.msra.mxu0 %v1328
    %1347 = vmatprep.subr.bf16.mxu0 0
    %1348 = vmatpush1.bf16.msra.mxu0 %v1329
    %1349 = vmatprep.subr.bf16.mxu0 0
    %1350 = vmatpush1.bf16.msra.mxu0 %v1330
    %1351 = vmatprep.subr.bf16.mxu0 0
    %1352 = vmatpush1.bf16.msra.mxu0 %v1331
    %1353 = vmatprep.subr.bf16.mxu0 0
    %1354 = vmatpush1.bf16.msra.mxu0 %v1332
    %1355 = vmatprep.subr.bf16.mxu0 0
    %1356 = vmatpush1.bf16.msra.mxu0 %v1333
    %1357 = vmatprep.subr.bf16.mxu0 0
    %1358 = vmatpush1.bf16.msra.mxu0 %v1334
    %1359 = vmatprep.subr.bf16.mxu0 0
    %1360 = vmatpush1.bf16.msra.mxu0 0
    %1361 = vmatprep.subr.bf16.mxu0 0
    %1362 = vmatpush1.bf16.msra.mxu0 0
    %1363 = vmatprep.subr.bf16.mxu0 0
    %1364 = vmatpush1.bf16.msra.mxu0 0
    %1365 = vmatprep.subr.bf16.mxu0 0
    %1366 = vmatpush1.bf16.msra.mxu0 0
    %1367 = vmatprep.subr.bf16.mxu0 0
    %1368 = vmatpush1.bf16.msra.mxu0 0
    %1369 = vmatprep.subr.bf16.mxu0 0
    %1370 = vmatpush1.bf16.msra.mxu0 0
    %1371 = vmatprep.subr.bf16.mxu0 0
    %1372 = vmatpush1.bf16.msra.mxu0 0
    %1373 = vmatprep.subr.bf16.mxu0 0
    %1374 = vmatpush1.bf16.msra.mxu0 0
    %1375 = vmatprep.mubr.bf16.mxu0 0
    %1376 = vmatmul.mubr.bf16.gmra.mrb[0].mxu0 %v1294
    %v1377 = vpop.f32.mrb[0].mxu0
    %v1378 = vadd.f32 0.0, %v1377
    %v1379 = vpop.f32.mrb[0].mxu0
    %v1380 = vpop.f32.mrb[0].mxu0
    %v1381 = vpop.f32.mrb[0].mxu0
    %1382 = vdwg.mxu0
    %v1399 = vunpack.c.l.b16 %v871
    %v1400 = vunpack.c.l.b16 %v872
    %v1401 = vunpack.c.l.b16 %v873
    %v1402 = vunpack.c.l.b16 %v874
    %v1403 = vunpack.c.l.b16 %v875
    %v1404 = vunpack.c.l.b16 %v876
    %v1405 = vunpack.c.l.b16 %v877
    %v1406 = vunpack.c.l.b16 %v878
    %v1407 = vunpack.c.l.b16 %v879
    %v1408 = vunpack.c.l.b16 %v880
    %v1409 = vunpack.c.l.b16 %v881
    %v1410 = vunpack.c.l.b16 %v882
    %v1411 = vunpack.c.l.b16 %v883
    %v1412 = vunpack.c.l.b16 %v884
    %v1413 = vunpack.c.l.b16 %v885
    %v1414 = vunpack.c.l.b16 %v886
    %v1415 = vpack.c.b16 %v1400, %v1399
    %v1416 = vpack.c.b16 %v1402, %v1401
    %v1417 = vpack.c.b16 %v1404, %v1403
    %v1418 = vpack.c.b16 %v1406, %v1405
    %v1419 = vpack.c.b16 %v1408, %v1407
    %v1420 = vpack.c.b16 %v1410, %v1409
    %v1421 = vpack.c.b16 %v1412, %v1411
    %v1422 = vpack.c.b16 %v1414, %v1413
    %1431 = vmatprep.subr.bf16.mxu0 0
    %1432 = vmatpush1.bf16.msra.mxu0 %v1415
    %1433 = vmatprep.subr.bf16.mxu0 0
    %1434 = vmatpush1.bf16.msra.mxu0 %v1416
    %1435 = vmatprep.subr.bf16.mxu0 0
    %1436 = vmatpush1.bf16.msra.mxu0 %v1417
    %1437 = vmatprep.subr.bf16.mxu0 0
    %1438 = vmatpush1.bf16.msra.mxu0 %v1418
    %1439 = vmatprep.subr.bf16.mxu0 0
    %1440 = vmatpush1.bf16.msra.mxu0 %v1419
    %1441 = vmatprep.subr.bf16.mxu0 0
    %1442 = vmatpush1.bf16.msra.mxu0 %v1420
    %1443 = vmatprep.subr.bf16.mxu0 0
    %1444 = vmatpush1.bf16.msra.mxu0 %v1421
    %1445 = vmatprep.subr.bf16.mxu0 0
    %1446 = vmatpush1.bf16.msra.mxu0 %v1422
    %1447 = vmatprep.subr.bf16.mxu0 0
    %1448 = vmatpush1.bf16.msra.mxu0 0
    %1449 = vmatprep.subr.bf16.mxu0 0
    %1450 = vmatpush1.bf16.msra.mxu0 0
    %1451 = vmatprep.subr.bf16.mxu0 0
    %1452 = vmatpush1.bf16.msra.mxu0 0
    %1453 = vmatprep.subr.bf16.mxu0 0
    %1454 = vmatpush1.bf16.msra.mxu0 0
    %1455 = vmatprep.subr.bf16.mxu0 0
    %1456 = vmatpush1.bf16.msra.mxu0 0
    %1457 = vmatprep.subr.bf16.mxu0 0
    %1458 = vmatpush1.bf16.msra.mxu0 0
    %1459 = vmatprep.subr.bf16.mxu0 0
    %1460 = vmatpush1.bf16.msra.mxu0 0
    %1461 = vmatprep.subr.bf16.mxu0 0
    %1462 = vmatpush1.bf16.msra.mxu0 0
    %1463 = vmatprep.mubr.bf16.mxu0 0
    %1464 = vmatmul.mubr.bf16.gmra.mrb[0].mxu0 %v1192
    %v1465 = vpop.f32.mrb[0].mxu0
    %v1466 = vadd.f32 %v1378, %v1465
    %v1467 = vpop.f32.mrb[0].mxu0
    %v1468 = vpop.f32.mrb[0].mxu0
    %v1469 = vpop.f32.mrb[0].mxu0
    %1470 = vdwg.mxu0
    %v1471 = vlaneseq
    %v1472 = vshrl.u32 %v1471, 7
    %v1473 = vsub.s32 1, %v1472
    %v1474 = vrot.slane %v904, %v1473
    %v1475 = vadd.f32 %v1466, %v1474
    %v1476 = vadd.f32 %v862, %v1475
    %v1477 = vsel %vm692, %v1476, 0.0
    %1478 = vadd.xlane.f32.xlu0 %v1477
    %v1479 = vpop.xlane.xlu0 %1478
    %v1480 = vmul.f32 %v1479, %v696
    %v1481 = vsub.f32 %v1476, %v1480
    %v1482 = vmul.f32 %v1481, %v1481
    %v1483 = vsel %vm692, %v1482, 0.0
    %1484 = vadd.xlane.f32.xlu0 %v1483
    %v1485 = vpop.xlane.xlu0 %1484
    %v1486 = vmul.f32 %v1485, %v696
    %v1487 = vadd.f32 %v1486, 1e-05
    %v1488 = vrsqrt.pop %v1487
    %v1489 = vmul.f32 %v1481, %v1488
    %v1490 = vlaneseq
    %v1491 = vshrl.u32 %v1490, 7
    %v1492 = vsub.s32 2, %v1491
    %v1493 = vrot.slane %v904, %v1492
    %v1494 = vmul.f32 %v1489, %v1493
    %v1495 = vlaneseq
    %v1496 = vshrl.u32 %v1495, 7
    %v1497 = vsub.s32 3, %v1496
    %v1498 = vrot.slane %v904, %v1497
    %v1499 = vadd.f32 %v1494, %v1498
    %v1500 = vpack.c.bf16 %v1499, %v1499
    %s1501 = scalar_lea.vmem [#allocation2], 8
    %v1502 = vld [vmem:[%s1501] sm:$0xf]
    %v1503 = vld [vmem:[%s1501 + $0x4] sm:$0xf]
    %v1504 = vlaneseq
    %v1505 = vshrl.u32 %v1504, 7
    %v1506 = vsub.s32 4, %v1505
    %v1507 = vrot.slane %v904, %v1506
    %v1510 = vunpack.c.l.b16 %v1502
    %v1511 = vunpack.c.l.b16 %v1503
    %v1512 = vpack.c.b16 %v1511, %v1510
    %v1515 = vsel %vm176, %v1500, 0
    %1517 = vmatprep.subr.bf16.mxu0 0
    %1518 = vmatpush1.bf16.msra.mxu0 %v1512
    %1519 = vmatprep.subr.bf16.mxu0 0
    %1520 = vmatpush1.bf16.msra.mxu0 0
    %1521 = vmatprep.subr.bf16.mxu0 0
    %1522 = vmatpush1.bf16.msra.mxu0 0
    %1523 = vmatprep.subr.bf16.mxu0 0
    %1524 = vmatpush1.bf16.msra.mxu0 0
    %1525 = vmatprep.subr.bf16.mxu0 0
    %1526 = vmatpush1.bf16.msra.mxu0 0
    %1527 = vmatprep.subr.bf16.mxu0 0
    %1528 = vmatpush1.bf16.msra.mxu0 0
    %1529 = vmatprep.subr.bf16.mxu0 0
    %1530 = vmatpush1.bf16.msra.mxu0 0
    %1531 = vmatprep.subr.bf16.mxu0 0
    %1532 = vmatpush1.bf16.msra.mxu0 0
    %1533 = vmatprep.subr.bf16.mxu0 0
    %1534 = vmatpush1.bf16.msra.mxu0 0
    %1535 = vmatprep.subr.bf16.mxu0 0
    %1536 = vmatpush1.bf16.msra.mxu0 0
    %1537 = vmatprep.subr.bf16.mxu0 0
    %1538 = vmatpush1.bf16.msra.mxu0 0
    %1539 = vmatprep.subr.bf16.mxu0 0
    %1540 = vmatpush1.bf16.msra.mxu0 0
    %1541 = vmatprep.subr.bf16.mxu0 0
    %1542 = vmatpush1.bf16.msra.mxu0 0
    %1543 = vmatprep.subr.bf16.mxu0 0
    %1544 = vmatpush1.bf16.msra.mxu0 0
    %1545 = vmatprep.subr.bf16.mxu0 0
    %1546 = vmatpush1.bf16.msra.mxu0 0
    %1547 = vmatprep.subr.bf16.mxu0 0
    %1548 = vmatpush1.bf16.msra.mxu0 0
    %1549 = vmatprep.mubr.bf16.mxu0 0
    %1550 = vmatmul.mubr.bf16.gmra.mrb[0].mxu0 %v1515
    %v1551 = vpop.f32.mrb[0].mxu0
    %v1552 = vadd.f32 %v1507, %v1551
    %v1553 = vpop.f32.mrb[0].mxu0
    %v1554 = vpop.f32.mrb[0].mxu0
    %v1555 = vpop.f32.mrb[0].mxu0
    %1556 = vdwg.mxu0
    %v1557 = vmax.f32 %v1552, 0.0
    %v1558 = vpack.c.bf16 %v1557, %v1557
    %s1559 = scalar_lea.vmem %s4, 16
    %v1560 = vld [vmem:[%s1559] sm:$0xf]
    %v1561 = vld [vmem:[%s1559 + $0x4] sm:$0xf]
    %v1562 = vld [vmem:[%s1559 + $0x8] sm:$0xf]
    %v1563 = vld [vmem:[%s1559 + $0xc] sm:$0xf]
    %v1564 = vlaneseq
    %v1565 = vshrl.u32 %v1564, 7
    %v1566 = vsub.s32 5, %v1565
    %v1567 = vrot.slane %v904, %v1566
    %v1572 = vunpack.c.l.b16 %v1560
    %v1573 = vunpack.c.l.b16 %v1561
    %v1574 = vunpack.c.l.b16 %v1562
    %v1575 = vunpack.c.l.b16 %v1563
    %v1576 = vpack.c.b16 %v1573, %v1572
    %v1577 = vpack.c.b16 %v1575, %v1574
    %v1581 = vsel %vm795, %v1558, 0
    %1583 = vmatprep.subr.bf16.mxu0 0
    %1584 = vmatpush1.bf16.msra.mxu0 %v1576
    %1585 = vmatprep.subr.bf16.mxu0 0
    %1586 = vmatpush1.bf16.msra.mxu0 %v1577
    %1587 = vmatprep.subr.bf16.mxu0 0
    %1588 = vmatpush1.bf16.msra.mxu0 0
    %1589 = vmatprep.subr.bf16.mxu0 0
    %1590 = vmatpush1.bf16.msra.mxu0 0
    %1591 = vmatprep.subr.bf16.mxu0 0
    %1592 = vmatpush1.bf16.msra.mxu0 0
    %1593 = vmatprep.subr.bf16.mxu0 0
    %1594 = vmatpush1.bf16.msra.mxu0 0
    %1595 = vmatprep.subr.bf16.mxu0 0
    %1596 = vmatpush1.bf16.msra.mxu0 0
    %1597 = vmatprep.subr.bf16.mxu0 0
    %1598 = vmatpush1.bf16.msra.mxu0 0
    %1599 = vmatprep.subr.bf16.mxu0 0
    %1600 = vmatpush1.bf16.msra.mxu0 0
    %1601 = vmatprep.subr.bf16.mxu0 0
    %1602 = vmatpush1.bf16.msra.mxu0 0
    %1603 = vmatprep.subr.bf16.mxu0 0
    %1604 = vmatpush1.bf16.msra.mxu0 0
    %1605 = vmatprep.subr.bf16.mxu0 0
    %1606 = vmatpush1.bf16.msra.mxu0 0
    %1607 = vmatprep.subr.bf16.mxu0 0
    %1608 = vmatpush1.bf16.msra.mxu0 0
    %1609 = vmatprep.subr.bf16.mxu0 0
    %1610 = vmatpush1.bf16.msra.mxu0 0
    %1611 = vmatprep.subr.bf16.mxu0 0
    %1612 = vmatpush1.bf16.msra.mxu0 0
    %1613 = vmatprep.subr.bf16.mxu0 0
    %1614 = vmatpush1.bf16.msra.mxu0 0
    %1615 = vmatprep.mubr.bf16.mxu0 0
    %1616 = vmatmul.mubr.bf16.gmra.mrb[0].mxu0 %v1581
    %v1617 = vpop.f32.mrb[0].mxu0
    %v1618 = vadd.f32 %v1567, %v1617
    %v1619 = vpop.f32.mrb[0].mxu0
    %v1620 = vpop.f32.mrb[0].mxu0
    %v1621 = vpop.f32.mrb[0].mxu0
    %1622 = vdwg.mxu0
    %v1623 = vadd.f32 %v1499, %v1618
    %v1624 = vsel %vm692, %v1623, 0.0
    %1625 = vadd.xlane.f32.xlu0 %v1624
    %v1626 = vpop.xlane.xlu0 %1625
    %v1627 = vmul.f32 %v1626, %v696
    %v1628 = vsub.f32 %v1623, %v1627
    %v1629 = vmul.f32 %v1628, %v1628
    %v1630 = vsel %vm692, %v1629, 0.0
    %1631 = vadd.xlane.f32.xlu0 %v1630
    %v1632 = vpop.xlane.xlu0 %1631
    %v1633 = vmul.f32 %v1632, %v696
    %v1634 = vadd.f32 %v1633, 1e-05
    %v1635 = vrsqrt.pop %v1634
    %v1636 = vmul.f32 %v1628, %v1635
    %v1637 = vlaneseq
    %v1638 = vshrl.u32 %v1637, 7
    %v1639 = vsub.s32 6, %v1638
    %v1640 = vrot.slane %v904, %v1639
    %v1641 = vmul.f32 %v1636, %v1640
    %v1642 = vlaneseq
    %v1643 = vshrl.u32 %v1642, 7
    %v1644 = vsub.s32 7, %v1643
    %v1645 = vrot.slane %v904, %v1644
    %v1646 = vadd.f32 %v1641, %v1645
    %v1647 = vsel %vm176, %v1646, 0.0
    %1648 = vst [vmem:[%s9] sm:$0xf] %v1647
    %v1649 = vld [vmem:[#allocation6] sm:$0xf]
    %v1650 = vpack.c.bf16 %v1646, %v1646
    %v1651 = vld [vmem:[#allocation4] sm:$0xff]
    %v1652 = vld [vmem:[#allocation4 + $0x8] sm:$0xff]
    %v1654 = vlaneseq
    %v1655 = vshrl.u32 %v1654, 7
    %v1656 = vsub.s32 0, %v1655
    %v1657 = vrot.slane %v1649, %v1656
    %v1658 = vlaneseq
    %v1659 = vshrl.u32 %v1658, 7
    %v1660 = vsub.s32 2, %v1659
    %v1661 = vrot.slane %v1649, %v1660
    %v1664 = vlaneseq
    %v1665 = vshrl.u32 %v1664, 7
    %v1666 = vsub.s32 0, %v1665
    %v1667 = vrot.slane %v1657, %v1666
    %v1668 = vlaneseq
    %v1669 = vshrl.u32 %v1668, 7
    %v1670 = vsub.s32 0, %v1669
    %v1671 = vrot.slane %v1661, %v1670
    %v1674 = vunpack.c.l.b16 %v1651
    %v1675 = vunpack.c.h.b16 %v1651
    %v1676 = vunpack.c.l.b16 %v1652
    %v1677 = vunpack.c.h.b16 %v1652
    %v1678 = vpack.c.b16 %v1676, %v1674
    %v1679 = vpack.c.b16 %v1677, %v1675
    %v1683 = vsel %vm176, %v1650, 0
    %1685 = vmatprep.subr.bf16.mxu0 %v1679
    %1686 = vmatpush1.bf16.msra.mxu0 %v1678
    %1687 = vmatprep.subr.bf16.mxu0 0
    %1688 = vmatpush1.bf16.msra.mxu0 0
    %1689 = vmatprep.subr.bf16.mxu0 0
    %1690 = vmatpush1.bf16.msra.mxu0 0
    %1691 = vmatprep.subr.bf16.mxu0 0
    %1692 = vmatpush1.bf16.msra.mxu0 0
    %1693 = vmatprep.subr.bf16.mxu0 0
    %1694 = vmatpush1.bf16.msra.mxu0 0
    %1695 = vmatprep.subr.bf16.mxu0 0
    %1696 = vmatpush1.bf16.msra.mxu0 0
    %1697 = vmatprep.subr.bf16.mxu0 0
    %1698 = vmatpush1.bf16.msra.mxu0 0
    %1699 = vmatprep.subr.bf16.mxu0 0
    %1700 = vmatpush1.bf16.msra.mxu0 0
    %1701 = vmatprep.subr.bf16.mxu0 0
    %1702 = vmatpush1.bf16.msra.mxu0 0
    %1703 = vmatprep.subr.bf16.mxu0 0
    %1704 = vmatpush1.bf16.msra.mxu0 0
    %1705 = vmatprep.subr.bf16.mxu0 0
    %1706 = vmatpush1.bf16.msra.mxu0 0
    %1707 = vmatprep.subr.bf16.mxu0 0
    %1708 = vmatpush1.bf16.msra.mxu0 0
    %1709 = vmatprep.subr.bf16.mxu0 0
    %1710 = vmatpush1.bf16.msra.mxu0 0
    %1711 = vmatprep.subr.bf16.mxu0 0
    %1712 = vmatpush1.bf16.msra.mxu0 0
    %1713 = vmatprep.subr.bf16.mxu0 0
    %1714 = vmatpush1.bf16.msra.mxu0 0
    %1715 = vmatprep.subr.bf16.mxu0 0
    %1716 = vmatpush1.bf16.msra.mxu0 0
    %1717 = vmatprep.mubr.bf16.mxu0 0
    %1718 = vmatmul.mubr.bf16.gmra.mrb[0].mxu0 %v1683
    %v1719 = vpop.f32.mrb[0].mxu0
    %v1720 = vadd.f32 %v1667, %v1719
    %v1721 = vpop.f32.mrb[0].mxu0
    %v1722 = vadd.f32 %v1671, %v1721
    %v1723 = vpop.f32.mrb[0].mxu0
    %v1724 = vpop.f32.mrb[0].mxu0
    %1725 = vdwg.mxu0
    %v1726 = vmax.f32 %v1720, 0.0
    %v1727 = vmax.f32 %v1722, 0.0
    %v1728 = vpack.c.bf16 %v1726, %v1726
    %v1729 = vpack.c.bf16 %v1727, %v1727
    %v1730 = vld [vmem:[%s7] sm:$0xf]
    %v1731 = vld [vmem:[%s7 + $0x4] sm:$0xf]
    %v1732 = vld [vmem:[%s7 + $0x8] sm:$0xf]
    %v1733 = vld [vmem:[%s7 + $0xc] sm:$0xf]
    %v1734 = vld [vmem:[%s7 + $0x10] sm:$0xf]
    %v1735 = vld [vmem:[%s7 + $0x14] sm:$0xf]
    %v1736 = vld [vmem:[%s7 + $0x18] sm:$0xf]
    %v1737 = vld [vmem:[%s7 + $0x1c] sm:$0xf]
    %v1738 = vld [vmem:[%s7 + $0x20] sm:$0xf]
    %v1739 = vld [vmem:[%s7 + $0x24] sm:$0xf]
    %v1740 = vld [vmem:[%s7 + $0x28] sm:$0xf]
    %v1741 = vld [vmem:[%s7 + $0x2c] sm:$0xf]
    %v1742 = vld [vmem:[%s7 + $0x30] sm:$0xf]
    %v1743 = vld [vmem:[%s7 + $0x34] sm:$0xf]
    %v1744 = vld [vmem:[%s7 + $0x38] sm:$0xf]
    %v1745 = vld [vmem:[%s7 + $0x3c] sm:$0xf]
    %v1746 = vld [vmem:[%s7 + $0x40] sm:$0xf]
    %v1747 = vld [vmem:[%s7 + $0x44] sm:$0xf]
    %v1748 = vld [vmem:[%s7 + $0x48] sm:$0xf]
    %v1749 = vld [vmem:[%s7 + $0x4c] sm:$0xf]
    %v1750 = vld [vmem:[%s7 + $0x50] sm:$0xf]
    %v1751 = vld [vmem:[%s7 + $0x54] sm:$0xf]
    %v1752 = vld [vmem:[%s7 + $0x58] sm:$0xf]
    %v1753 = vld [vmem:[%s7 + $0x5c] sm:$0xf]
    %v1754 = vld [vmem:[%s7 + $0x60] sm:$0xf]
    %v1755 = vld [vmem:[%s7 + $0x64] sm:$0xf]
    %v1756 = vld [vmem:[%s7 + $0x68] sm:$0xf]
    %v1757 = vld [vmem:[%s7 + $0x6c] sm:$0xf]
    %v1758 = vld [vmem:[%s7 + $0x70] sm:$0xf]
    %v1759 = vld [vmem:[%s7 + $0x74] sm:$0xf]
    %v1760 = vld [vmem:[%s7 + $0x78] sm:$0xf]
    %v1761 = vld [vmem:[%s7 + $0x7c] sm:$0xf]
    %v1762 = vlaneseq
    %v1763 = vshrl.u32 %v1762, 7
    %v1764 = vsub.s32 1, %v1763
    %v1765 = vrot.slane %v1649, %v1764
    %v1798 = vunpack.c.l.b16 %v1730
    %v1799 = vunpack.c.l.b16 %v1731
    %v1800 = vunpack.c.l.b16 %v1732
    %v1801 = vunpack.c.l.b16 %v1733
    %v1802 = vunpack.c.l.b16 %v1734
    %v1803 = vunpack.c.l.b16 %v1735
    %v1804 = vunpack.c.l.b16 %v1736
    %v1805 = vunpack.c.l.b16 %v1737
    %v1806 = vunpack.c.l.b16 %v1738
    %v1807 = vunpack.c.l.b16 %v1739
    %v1808 = vunpack.c.l.b16 %v1740
    %v1809 = vunpack.c.l.b16 %v1741
    %v1810 = vunpack.c.l.b16 %v1742
    %v1811 = vunpack.c.l.b16 %v1743
    %v1812 = vunpack.c.l.b16 %v1744
    %v1813 = vunpack.c.l.b16 %v1745
    %v1814 = vunpack.c.l.b16 %v1746
    %v1815 = vunpack.c.l.b16 %v1747
    %v1816 = vunpack.c.l.b16 %v1748
    %v1817 = vunpack.c.l.b16 %v1749
    %v1818 = vunpack.c.l.b16 %v1750
    %v1819 = vunpack.c.l.b16 %v1751
    %v1820 = vunpack.c.l.b16 %v1752
    %v1821 = vunpack.c.l.b16 %v1753
    %v1822 = vunpack.c.l.b16 %v1754
    %v1823 = vunpack.c.l.b16 %v1755
    %v1824 = vunpack.c.l.b16 %v1756
    %v1825 = vunpack.c.l.b16 %v1757
    %v1826 = vunpack.c.l.b16 %v1758
    %v1827 = vunpack.c.l.b16 %v1759
    %v1828 = vunpack.c.l.b16 %v1760
    %v1829 = vunpack.c.l.b16 %v1761
    %v1830 = vpack.c.b16 %v1799, %v1798
    %v1831 = vpack.c.b16 %v1801, %v1800
    %v1832 = vpack.c.b16 %v1803, %v1802
    %v1833 = vpack.c.b16 %v1805, %v1804
    %v1834 = vpack.c.b16 %v1807, %v1806
    %v1835 = vpack.c.b16 %v1809, %v1808
    %v1836 = vpack.c.b16 %v1811, %v1810
    %v1837 = vpack.c.b16 %v1813, %v1812
    %v1838 = vpack.c.b16 %v1815, %v1814
    %v1839 = vpack.c.b16 %v1817, %v1816
    %v1840 = vpack.c.b16 %v1819, %v1818
    %v1841 = vpack.c.b16 %v1821, %v1820
    %v1842 = vpack.c.b16 %v1823, %v1822
    %v1843 = vpack.c.b16 %v1825, %v1824
    %v1844 = vpack.c.b16 %v1827, %v1826
    %v1845 = vpack.c.b16 %v1829, %v1828
    %1862 = vmatprep.subr.bf16.mxu0 0
    %1863 = vmatpush1.bf16.msra.mxu0 %v1830
    %1864 = vmatprep.subr.bf16.mxu0 0
    %1865 = vmatpush1.bf16.msra.mxu0 %v1831
    %1866 = vmatprep.subr.bf16.mxu0 0
    %1867 = vmatpush1.bf16.msra.mxu0 %v1832
    %1868 = vmatprep.subr.bf16.mxu0 0
    %1869 = vmatpush1.bf16.msra.mxu0 %v1833
    %1870 = vmatprep.subr.bf16.mxu0 0
    %1871 = vmatpush1.bf16.msra.mxu0 %v1834
    %1872 = vmatprep.subr.bf16.mxu0 0
    %1873 = vmatpush1.bf16.msra.mxu0 %v1835
    %1874 = vmatprep.subr.bf16.mxu0 0
    %1875 = vmatpush1.bf16.msra.mxu0 %v1836
    %1876 = vmatprep.subr.bf16.mxu0 0
    %1877 = vmatpush1.bf16.msra.mxu0 %v1837
    %1878 = vmatprep.subr.bf16.mxu0 0
    %1879 = vmatpush1.bf16.msra.mxu0 %v1838
    %1880 = vmatprep.subr.bf16.mxu0 0
    %1881 = vmatpush1.bf16.msra.mxu0 %v1839
    %1882 = vmatprep.subr.bf16.mxu0 0
    %1883 = vmatpush1.bf16.msra.mxu0 %v1840
    %1884 = vmatprep.subr.bf16.mxu0 0
    %1885 = vmatpush1.bf16.msra.mxu0 %v1841
    %1886 = vmatprep.subr.bf16.mxu0 0
    %1887 = vmatpush1.bf16.msra.mxu0 %v1842
    %1888 = vmatprep.subr.bf16.mxu0 0
    %1889 = vmatpush1.bf16.msra.mxu0 %v1843
    %1890 = vmatprep.subr.bf16.mxu0 0
    %1891 = vmatpush1.bf16.msra.mxu0 %v1844
    %1892 = vmatprep.subr.bf16.mxu0 0
    %1893 = vmatpush1.bf16.msra.mxu0 %v1845
    %1894 = vmatprep.mubr.bf16.mxu0 %v1729
    %1895 = vmatmul.mubr.bf16.gmra.mrb[0].mxu0 %v1728
    %v1896 = vpop.f32.mrb[0].mxu0
    %v1897 = vadd.f32 %v1765, %v1896
    %v1898 = vpop.f32.mrb[0].mxu0
    %v1899 = vpop.f32.mrb[0].mxu0
    %v1900 = vpop.f32.mrb[0].mxu0
    %1901 = vdwg.mxu0
    %1902 = vst [vmem:[%s10] sm:$0xf] %v1897
    %s1903 = scalar_lea.vmem %s0, 4
    %v1904 = vld [vmem:[%s1903] sm:$0xf]
    %s1905 = scalar_lea.vmem %s1, 96
    %v1906 = vld [vmem:[%s1905] sm:$0xff]
    %v1907 = vld [vmem:[%s1905 + $0x8] sm:$0xff]
    %v1908 = vld [vmem:[%s1905 + $0x10] sm:$0xff]
    %v1909 = vld [vmem:[%s1905 + $0x18] sm:$0xff]
    %v1910 = vld [vmem:[%s1905 + $0x20] sm:$0xff]
    %v1911 = vld [vmem:[%s1905 + $0x28] sm:$0xff]
    %s1912 = scalar_lea.vmem %s2, 256
    %v1913 = vld [vmem:[%s1912] sm:$0xf]
    %v1914 = vld [vmem:[%s1912 + $0x4] sm:$0xf]
    %v1915 = vld [vmem:[%s1912 + $0x8] sm:$0xf]
    %v1916 = vld [vmem:[%s1912 + $0xc] sm:$0xf]
    %v1917 = vld [vmem:[%s1912 + $0x10] sm:$0xf]
    %v1918 = vld [vmem:[%s1912 + $0x14] sm:$0xf]
    %v1919 = vld [vmem:[%s1912 + $0x18] sm:$0xf]
    %v1920 = vld [vmem:[%s1912 + $0x1c] sm:$0xf]
    %v1921 = vld [vmem:[%s1912 + $0x20] sm:$0xf]
    %v1922 = vld [vmem:[%s1912 + $0x24] sm:$0xf]
    %v1923 = vld [vmem:[%s1912 + $0x28] sm:$0xf]
    %v1924 = vld [vmem:[%s1912 + $0x2c] sm:$0xf]
    %v1925 = vld [vmem:[%s1912 + $0x30] sm:$0xf]
    %v1926 = vld [vmem:[%s1912 + $0x34] sm:$0xf]
    %v1927 = vld [vmem:[%s1912 + $0x38] sm:$0xf]
    %v1928 = vld [vmem:[%s1912 + $0x3c] sm:$0xf]
    %v1929 = vld [vmem:[%s1912 + $0x40] sm:$0xf]
    %v1930 = vld [vmem:[%s1912 + $0x44] sm:$0xf]
    %v1931 = vld [vmem:[%s1912 + $0x48] sm:$0xf]
    %v1932 = vld [vmem:[%s1912 + $0x4c] sm:$0xf]
    %v1933 = vld [vmem:[%s1912 + $0x50] sm:$0xf]
    %v1934 = vld [vmem:[%s1912 + $0x54] sm:$0xf]
    %v1935 = vld [vmem:[%s1912 + $0x58] sm:$0xf]
    %v1936 = vld [vmem:[%s1912 + $0x5c] sm:$0xf]
    %v1937 = vld [vmem:[%s1912 + $0x60] sm:$0xf]
    %v1938 = vld [vmem:[%s1912 + $0x64] sm:$0xf]
    %v1939 = vld [vmem:[%s1912 + $0x68] sm:$0xf]
    %v1940 = vld [vmem:[%s1912 + $0x6c] sm:$0xf]
    %v1941 = vld [vmem:[%s1912 + $0x70] sm:$0xf]
    %v1942 = vld [vmem:[%s1912 + $0x74] sm:$0xf]
    %v1943 = vld [vmem:[%s1912 + $0x78] sm:$0xf]
    %v1944 = vld [vmem:[%s1912 + $0x7c] sm:$0xf]
    %s1945 = scalar_lea.vmem %s5, 96
    %v1946 = vld [vmem:[%s1945] sm:$0xff]
    %v1947 = vld [vmem:[%s1945 + $0x8] sm:$0xff]
    %v1948 = vld [vmem:[%s1945 + $0x10] sm:$0xff]
    %v1949 = vld [vmem:[%s1945 + $0x18] sm:$0xff]
    %v1950 = vld [vmem:[%s1945 + $0x20] sm:$0xff]
    %v1951 = vld [vmem:[%s1945 + $0x28] sm:$0xff]
    %v1952 = vpack.c.bf16 %v1904, %v1904
    %v1953 = vlaneseq
    %v1954 = vshrl.u32 %v1953, 7
    %v1955 = vsub.s32 0, %v1954
    %v1956 = vrot.slane %v1946, %v1955
    %v1957 = vlaneseq
    %v1958 = vshrl.u32 %v1957, 7
    %v1959 = vsub.s32 0, %v1958
    %v1960 = vrot.slane %v1947, %v1959
    %v1961 = vlaneseq
    %v1962 = vshrl.u32 %v1961, 7
    %v1963 = vsub.s32 0, %v1962
    %v1964 = vrot.slane %v1948, %v1963
    %v1965 = vlaneseq
    %v1966 = vshrl.u32 %v1965, 7
    %v1967 = vsub.s32 0, %v1966
    %v1968 = vrot.slane %v1949, %v1967
    %v1969 = vlaneseq
    %v1970 = vshrl.u32 %v1969, 7
    %v1971 = vsub.s32 0, %v1970
    %v1972 = vrot.slane %v1950, %v1971
    %v1973 = vlaneseq
    %v1974 = vshrl.u32 %v1973, 7
    %v1975 = vsub.s32 0, %v1974
    %v1976 = vrot.slane %v1951, %v1975
    %v1983 = vunpack.c.l.b16 %v1906
    %v1984 = vunpack.c.h.b16 %v1906
    %v1985 = vunpack.c.l.b16 %v1907
    %v1986 = vunpack.c.h.b16 %v1907
    %v1987 = vunpack.c.l.b16 %v1908
    %v1988 = vunpack.c.h.b16 %v1908
    %v1989 = vunpack.c.l.b16 %v1909
    %v1990 = vunpack.c.h.b16 %v1909
    %v1991 = vunpack.c.l.b16 %v1910
    %v1992 = vunpack.c.h.b16 %v1910
    %v1993 = vunpack.c.l.b16 %v1911
    %v1994 = vunpack.c.h.b16 %v1911
    %v1995 = vpack.c.b16 %v1989, %v1983
    %v1996 = vpack.c.b16 %v1990, %v1984
    %v1997 = vpack.c.b16 %v1991, %v1985
    %v1998 = vpack.c.b16 %v1992, %v1986
    %v1999 = vpack.c.b16 %v1993, %v1987
    %v2000 = vpack.c.b16 %v1994, %v1988
    %v2008 = vsel %vm176, %v1952, 0
    %2010 = vmatprep.subr.bf16.mxu0 %v1996
    %2011 = vmatpush1.bf16.msra.mxu0 %v1995
    %2012 = vmatprep.subr.bf16.mxu0 0
    %2013 = vmatpush1.bf16.msra.mxu0 0
    %2014 = vmatprep.subr.bf16.mxu0 0
    %2015 = vmatpush1.bf16.msra.mxu0 0
    %2016 = vmatprep.subr.bf16.mxu0 0
    %2017 = vmatpush1.bf16.msra.mxu0 0
    %2018 = vmatprep.subr.bf16.mxu0 0
    %2019 = vmatpush1.bf16.msra.mxu0 0
    %2020 = vmatprep.subr.bf16.mxu0 0
    %2021 = vmatpush1.bf16.msra.mxu0 0
    %2022 = vmatprep.subr.bf16.mxu0 0
    %2023 = vmatpush1.bf16.msra.mxu0 0
    %2024 = vmatprep.subr.bf16.mxu0 0
    %2025 = vmatpush1.bf16.msra.mxu0 0
    %2026 = vmatprep.subr.bf16.mxu0 0
    %2027 = vmatpush1.bf16.msra.mxu0 0
    %2028 = vmatprep.subr.bf16.mxu0 0
    %2029 = vmatpush1.bf16.msra.mxu0 0
    %2030 = vmatprep.subr.bf16.mxu0 0
    %2031 = vmatpush1.bf16.msra.mxu0 0
    %2032 = vmatprep.subr.bf16.mxu0 0
    %2033 = vmatpush1.bf16.msra.mxu0 0
    %2034 = vmatprep.subr.bf16.mxu0 0
    %2035 = vmatpush1.bf16.msra.mxu0 0
    %2036 = vmatprep.subr.bf16.mxu0 0
    %2037 = vmatpush1.bf16.msra.mxu0 0
    %2038 = vmatprep.subr.bf16.mxu0 0
    %2039 = vmatpush1.bf16.msra.mxu0 0
    %2040 = vmatprep.subr.bf16.mxu0 0
    %2041 = vmatpush1.bf16.msra.mxu0 0
    %2042 = vmatprep.mubr.bf16.mxu0 0
    %2043 = vmatmul.mubr.bf16.gmra.mrb[0].mxu0 %v2008
    %v2044 = vpop.f32.mrb[0].mxu0
    %v2045 = vadd.f32 %v1956, %v2044
    %v2046 = vpop.f32.mrb[0].mxu0
    %v2047 = vadd.f32 %v1960, %v2046
    %v2048 = vpop.f32.mrb[0].mxu0
    %v2049 = vpop.f32.mrb[0].mxu0
    %2050 = vdwg.mxu0
    %2051 = vmatprep.subr.bf16.mxu0 %v1998
    %2052 = vmatpush1.bf16.msra.mxu0 %v1997
    %2053 = vmatprep.subr.bf16.mxu0 0
    %2054 = vmatpush1.bf16.msra.mxu0 0
    %2055 = vmatprep.subr.bf16.mxu0 0
    %2056 = vmatpush1.bf16.msra.mxu0 0
    %2057 = vmatprep.subr.bf16.mxu0 0
    %2058 = vmatpush1.bf16.msra.mxu0 0
    %2059 = vmatprep.subr.bf16.mxu0 0
    %2060 = vmatpush1.bf16.msra.mxu0 0
    %2061 = vmatprep.subr.bf16.mxu0 0
    %2062 = vmatpush1.bf16.msra.mxu0 0
    %2063 = vmatprep.subr.bf16.mxu0 0
    %2064 = vmatpush1.bf16.msra.mxu0 0
    %2065 = vmatprep.subr.bf16.mxu0 0
    %2066 = vmatpush1.bf16.msra.mxu0 0
    %2067 = vmatprep.subr.bf16.mxu0 0
    %2068 = vmatpush1.bf16.msra.mxu0 0
    %2069 = vmatprep.subr.bf16.mxu0 0
    %2070 = vmatpush1.bf16.msra.mxu0 0
    %2071 = vmatprep.subr.bf16.mxu0 0
    %2072 = vmatpush1.bf16.msra.mxu0 0
    %2073 = vmatprep.subr.bf16.mxu0 0
    %2074 = vmatpush1.bf16.msra.mxu0 0
    %2075 = vmatprep.subr.bf16.mxu0 0
    %2076 = vmatpush1.bf16.msra.mxu0 0
    %2077 = vmatprep.subr.bf16.mxu0 0
    %2078 = vmatpush1.bf16.msra.mxu0 0
    %2079 = vmatprep.subr.bf16.mxu0 0
    %2080 = vmatpush1.bf16.msra.mxu0 0
    %2081 = vmatprep.subr.bf16.mxu0 0
    %2082 = vmatpush1.bf16.msra.mxu0 0
    %2083 = vmatprep.mubr.bf16.mxu0 0
    %2084 = vmatmul.mubr.bf16.gmra.mrb[0].mxu0 %v2008
    %v2085 = vpop.f32.mrb[0].mxu0
    %v2086 = vadd.f32 %v1964, %v2085
    %v2087 = vpop.f32.mrb[0].mxu0
    %v2088 = vadd.f32 %v1968, %v2087
    %v2089 = vpop.f32.mrb[0].mxu0
    %v2090 = vpop.f32.mrb[0].mxu0
    %2091 = vdwg.mxu0
    %2092 = vmatprep.subr.bf16.mxu0 %v2000
    %2093 = vmatpush1.bf16.msra.mxu0 %v1999
    %2094 = vmatprep.subr.bf16.mxu0 0
    %2095 = vmatpush1.bf16.msra.mxu0 0
    %2096 = vmatprep.subr.bf16.mxu0 0
    %2097 = vmatpush1.bf16.msra.mxu0 0
    %2098 = vmatprep.subr.bf16.mxu0 0
    %2099 = vmatpush1.bf16.msra.mxu0 0
    %2100 = vmatprep.subr.bf16.mxu0 0
    %2101 = vmatpush1.bf16.msra.mxu0 0
    %2102 = vmatprep.subr.bf16.mxu0 0
    %2103 = vmatpush1.bf16.msra.mxu0 0
    %2104 = vmatprep.subr.bf16.mxu0 0
    %2105 = vmatpush1.bf16.msra.mxu0 0
    %2106 = vmatprep.subr.bf16.mxu0 0
    %2107 = vmatpush1.bf16.msra.mxu0 0
    %2108 = vmatprep.subr.bf16.mxu0 0
    %2109 = vmatpush1.bf16.msra.mxu0 0
    %2110 = vmatprep.subr.bf16.mxu0 0
    %2111 = vmatpush1.bf16.msra.mxu0 0
    %2112 = vmatprep.subr.bf16.mxu0 0
    %2113 = vmatpush1.bf16.msra.mxu0 0
    %2114 = vmatprep.subr.bf16.mxu0 0
    %2115 = vmatpush1.bf16.msra.mxu0 0
    %2116 = vmatprep.subr.bf16.mxu0 0
    %2117 = vmatpush1.bf16.msra.mxu0 0
    %2118 = vmatprep.subr.bf16.mxu0 0
    %2119 = vmatpush1.bf16.msra.mxu0 0
    %2120 = vmatprep.subr.bf16.mxu0 0
    %2121 = vmatpush1.bf16.msra.mxu0 0
    %2122 = vmatprep.subr.bf16.mxu0 0
    %2123 = vmatpush1.bf16.msra.mxu0 0
    %2124 = vmatprep.mubr.bf16.mxu0 0
    %2125 = vmatmul.mubr.bf16.gmra.mrb[0].mxu0 %v2008
    %v2126 = vpop.f32.mrb[0].mxu0
    %v2127 = vadd.f32 %v1972, %v2126
    %v2128 = vpop.f32.mrb[0].mxu0
    %v2129 = vadd.f32 %v1976, %v2128
    %v2130 = vpop.f32.mrb[0].mxu0
    %v2131 = vpop.f32.mrb[0].mxu0
    %2132 = vdwg.mxu0
    %v2133 = vpack.c.bf16 %v2045, %v2045
    %v2134 = vpack.c.bf16 %v2047, %v2047
    %2135 = vmatprep.subr.bf16.mxu0 0
    %2136 = vmatpush1.bf16.xpose.msra.mxu0 %v2134
    %2137 = vmatprep.subr.bf16.mxu0 0
    %2138 = vmatpush1.bf16.xpose.msra.mxu0 0
    %2139 = vmatprep.subr.bf16.mxu0 0
    %2140 = vmatpush1.bf16.xpose.msra.mxu0 0
    %2141 = vmatprep.subr.bf16.mxu0 0
    %2142 = vmatpush1.bf16.xpose.msra.mxu0 0
    %2143 = vmatprep.subr.bf16.mxu0 0
    %2144 = vmatpush1.bf16.xpose.msra.mxu0 0
    %2145 = vmatprep.subr.bf16.mxu0 0
    %2146 = vmatpush1.bf16.xpose.msra.mxu0 0
    %2147 = vmatprep.subr.bf16.mxu0 0
    %2148 = vmatpush1.bf16.xpose.msra.mxu0 0
    %2149 = vmatprep.subr.bf16.mxu0 0
    %2150 = vmatpush1.bf16.xpose.msra.mxu0 0
    %2151 = vmatprep.subr.bf16.mxu0 0
    %2152 = vmatpush1.bf16.xpose.msra.mxu0 0
    %2153 = vmatprep.subr.bf16.mxu0 0
    %2154 = vmatpush1.bf16.xpose.msra.mxu0 0
    %2155 = vmatprep.subr.bf16.mxu0 0
    %2156 = vmatpush1.bf16.xpose.msra.mxu0 0
    %2157 = vmatprep.subr.bf16.mxu0 0
    %2158 = vmatpush1.bf16.xpose.msra.mxu0 0
    %2159 = vmatprep.subr.bf16.mxu0 0
    %2160 = vmatpush1.bf16.xpose.msra.mxu0 0
    %2161 = vmatprep.subr.bf16.mxu0 0
    %2162 = vmatpush1.bf16.xpose.msra.mxu0 0
    %2163 = vmatprep.subr.bf16.mxu0 0
    %2164 = vmatpush1.bf16.xpose.msra.mxu0 0
    %2165 = vmatprep.subr.bf16.mxu0 0
    %2166 = vmatpush1.bf16.xpose.msra.mxu0 0
    %2167 = vmatprep.mubr.bf16.mxu0 0
    %2168 = vmatmul.mubr.bf16.gmra.mrb[0].mxu0 %v2133
    %v2169 = vpop.f32.mrb[0].mxu0
    %v2170 = vadd.f32 0.0, %v2169
    %v2171 = vpop.f32.mrb[0].mxu0
    %v2172 = vpop.f32.mrb[0].mxu0
    %v2173 = vpop.f32.mrb[0].mxu0
    %2174 = vdwg.mxu0
    %v2175 = vsel %vm345, %v2170, -inf
    %2176 = vmax.xlane.f32.xlu0 %v2175
    %v2177 = vpop.xlane.xlu0 %2176
    %v2178 = vsub.f32 %v2170, %v2177
    %v2179 = vmul.f32 %v2178, 1.442695
    %v2180 = vpow.pop %v2179
    %v2181 = vsel %vm345, %v2180, 0.0
    %2182 = vadd.xlane.f32.xlu0 %v2181
    %v2183 = vpop.xlane.xlu0 %2182
    %v2184 = vrcp.pop %v2183
    %v2185 = vmul.f32 %v2180, %v2184
    %v2186 = vpack.c.bf16 %v2185, %v2185
    %v2187 = vpack.c.bf16 %v2086, %v2086
    %v2189 = vsel %vm359, %v2186, 0
    %v2192 = vsel %vm363, %v2187, 0
    %2194 = vmatprep.subr.bf16.mxu0 0
    %2195 = vmatpush1.bf16.msra.mxu0 %v2192
    %2196 = vmatprep.subr.bf16.mxu0 0
    %2197 = vmatpush1.bf16.msra.mxu0 0
    %2198 = vmatprep.subr.bf16.mxu0 0
    %2199 = vmatpush1.bf16.msra.mxu0 0
    %2200 = vmatprep.subr.bf16.mxu0 0
    %2201 = vmatpush1.bf16.msra.mxu0 0
    %2202 = vmatprep.subr.bf16.mxu0 0
    %2203 = vmatpush1.bf16.msra.mxu0 0
    %2204 = vmatprep.subr.bf16.mxu0 0
    %2205 = vmatpush1.bf16.msra.mxu0 0
    %2206 = vmatprep.subr.bf16.mxu0 0
    %2207 = vmatpush1.bf16.msra.mxu0 0
    %2208 = vmatprep.subr.bf16.mxu0 0
    %2209 = vmatpush1.bf16.msra.mxu0 0
    %2210 = vmatprep.subr.bf16.mxu0 0
    %2211 = vmatpush1.bf16.msra.mxu0 0
    %2212 = vmatprep.subr.bf16.mxu0 0
    %2213 = vmatpush1.bf16.msra.mxu0 0
    %2214 = vmatprep.subr.bf16.mxu0 0
    %2215 = vmatpush1.bf16.msra.mxu0 0
    %2216 = vmatprep.subr.bf16.mxu0 0
    %2217 = vmatpush1.bf16.msra.mxu0 0
    %2218 = vmatprep.subr.bf16.mxu0 0
    %2219 = vmatpush1.bf16.msra.mxu0 0
    %2220 = vmatprep.subr.bf16.mxu0 0
    %2221 = vmatpush1.bf16.msra.mxu0 0
    %2222 = vmatprep.subr.bf16.mxu0 0
    %2223 = vmatpush1.bf16.msra.mxu0 0
    %2224 = vmatprep.subr.bf16.mxu0 0
    %2225 = vmatpush1.bf16.msra.mxu0 0
    %2226 = vmatprep.mubr.bf16.mxu0 0
    %2227 = vmatmul.mubr.bf16.gmra.mrb[0].mxu0 %v2189
    %v2228 = vpop.f32.mrb[0].mxu0
    %v2229 = vadd.f32 0.0, %v2228
    %v2230 = vpop.f32.mrb[0].mxu0
    %v2231 = vpop.f32.mrb[0].mxu0
    %v2232 = vpop.f32.mrb[0].mxu0
    %2233 = vdwg.mxu0
    %v2234 = vpack.c.bf16 %v2229, %v2229
    %v2235 = vpack.c.bf16 %v2088, %v2088
    %v2236 = vpack.c.bf16 %v2127, %v2127
    %2237 = vmatprep.subr.bf16.mxu0 0
    %2238 = vmatpush1.bf16.xpose.msra.mxu0 %v2236
    %2239 = vmatprep.subr.bf16.mxu0 0
    %2240 = vmatpush1.bf16.xpose.msra.mxu0 0
    %2241 = vmatprep.subr.bf16.mxu0 0
    %2242 = vmatpush1.bf16.xpose.msra.mxu0 0
    %2243 = vmatprep.subr.bf16.mxu0 0
    %2244 = vmatpush1.bf16.xpose.msra.mxu0 0
    %2245 = vmatprep.subr.bf16.mxu0 0
    %2246 = vmatpush1.bf16.xpose.msra.mxu0 0
    %2247 = vmatprep.subr.bf16.mxu0 0
    %2248 = vmatpush1.bf16.xpose.msra.mxu0 0
    %2249 = vmatprep.subr.bf16.mxu0 0
    %2250 = vmatpush1.bf16.xpose.msra.mxu0 0
    %2251 = vmatprep.subr.bf16.mxu0 0
    %2252 = vmatpush1.bf16.xpose.msra.mxu0 0
    %2253 = vmatprep.subr.bf16.mxu0 0
    %2254 = vmatpush1.bf16.xpose.msra.mxu0 0
    %2255 = vmatprep.subr.bf16.mxu0 0
    %2256 = vmatpush1.bf16.xpose.msra.mxu0 0
    %2257 = vmatprep.subr.bf16.mxu0 0
    %2258 = vmatpush1.bf16.xpose.msra.mxu0 0
    %2259 = vmatprep.subr.bf16.mxu0 0
    %2260 = vmatpush1.bf16.xpose.msra.mxu0 0
    %2261 = vmatprep.subr.bf16.mxu0 0
    %2262 = vmatpush1.bf16.xpose.msra.mxu0 0
    %2263 = vmatprep.subr.bf16.mxu0 0
    %2264 = vmatpush1.bf16.xpose.msra.mxu0 0
    %2265 = vmatprep.subr.bf16.mxu0 0
    %2266 = vmatpush1.bf16.xpose.msra.mxu0 0
    %2267 = vmatprep.subr.bf16.mxu0 0
    %2268 = vmatpush1.bf16.xpose.msra.mxu0 0
    %2269 = vmatprep.mubr.bf16.mxu0 0
    %2270 = vmatmul.mubr.bf16.gmra.mrb[0].mxu0 %v2235
    %v2271 = vpop.f32.mrb[0].mxu0
    %v2272 = vadd.f32 0.0, %v2271
    %v2273 = vpop.f32.mrb[0].mxu0
    %v2274 = vpop.f32.mrb[0].mxu0
    %v2275 = vpop.f32.mrb[0].mxu0
    %2276 = vdwg.mxu0
    %v2277 = vsel %vm345, %v2272, -inf
    %2278 = vmax.xlane.f32.xlu0 %v2277
    %v2279 = vpop.xlane.xlu0 %2278
    %v2280 = vsub.f32 %v2272, %v2279
    %v2281 = vmul.f32 %v2280, 1.442695
    %v2282 = vpow.pop %v2281
    %v2283 = vsel %vm345, %v2282, 0.0
    %2284 = vadd.xlane.f32.xlu0 %v2283
    %v2285 = vpop.xlane.xlu0 %2284
    %v2286 = vrcp.pop %v2285
    %v2287 = vmul.f32 %v2282, %v2286
    %v2288 = vpack.c.bf16 %v2287, %v2287
    %v2289 = vpack.c.bf16 %v2129, %v2129
    %v2291 = vsel %vm359, %v2288, 0
    %v2294 = vsel %vm363, %v2289, 0
    %2296 = vmatprep.subr.bf16.mxu0 0
    %2297 = vmatpush1.bf16.msra.mxu0 %v2294
    %2298 = vmatprep.subr.bf16.mxu0 0
    %2299 = vmatpush1.bf16.msra.mxu0 0
    %2300 = vmatprep.subr.bf16.mxu0 0
    %2301 = vmatpush1.bf16.msra.mxu0 0
    %2302 = vmatprep.subr.bf16.mxu0 0
    %2303 = vmatpush1.bf16.msra.mxu0 0
    %2304 = vmatprep.subr.bf16.mxu0 0
    %2305 = vmatpush1.bf16.msra.mxu0 0
    %2306 = vmatprep.subr.bf16.mxu0 0
    %2307 = vmatpush1.bf16.msra.mxu0 0
    %2308 = vmatprep.subr.bf16.mxu0 0
    %2309 = vmatpush1.bf16.msra.mxu0 0
    %2310 = vmatprep.subr.bf16.mxu0 0
    %2311 = vmatpush1.bf16.msra.mxu0 0
    %2312 = vmatprep.subr.bf16.mxu0 0
    %2313 = vmatpush1.bf16.msra.mxu0 0
    %2314 = vmatprep.subr.bf16.mxu0 0
    %2315 = vmatpush1.bf16.msra.mxu0 0
    %2316 = vmatprep.subr.bf16.mxu0 0
    %2317 = vmatpush1.bf16.msra.mxu0 0
    %2318 = vmatprep.subr.bf16.mxu0 0
    %2319 = vmatpush1.bf16.msra.mxu0 0
    %2320 = vmatprep.subr.bf16.mxu0 0
    %2321 = vmatpush1.bf16.msra.mxu0 0
    %2322 = vmatprep.subr.bf16.mxu0 0
    %2323 = vmatpush1.bf16.msra.mxu0 0
    %2324 = vmatprep.subr.bf16.mxu0 0
    %2325 = vmatpush1.bf16.msra.mxu0 0
    %2326 = vmatprep.subr.bf16.mxu0 0
    %2327 = vmatpush1.bf16.msra.mxu0 0
    %2328 = vmatprep.mubr.bf16.mxu0 0
    %2329 = vmatmul.mubr.bf16.gmra.mrb[0].mxu0 %v2291
    %v2330 = vpop.f32.mrb[0].mxu0
    %v2331 = vadd.f32 0.0, %v2330
    %v2332 = vpop.f32.mrb[0].mxu0
    %v2333 = vpop.f32.mrb[0].mxu0
    %v2334 = vpop.f32.mrb[0].mxu0
    %2335 = vdwg.mxu0
    %v2336 = vpack.c.bf16 %v2331, %v2331
    %v2353 = vunpack.c.l.b16 %v1929
    %v2354 = vunpack.c.l.b16 %v1930
    %v2355 = vunpack.c.l.b16 %v1931
    %v2356 = vunpack.c.l.b16 %v1932
    %v2357 = vunpack.c.l.b16 %v1933
    %v2358 = vunpack.c.l.b16 %v1934
    %v2359 = vunpack.c.l.b16 %v1935
    %v2360 = vunpack.c.l.b16 %v1936
    %v2361 = vunpack.c.l.b16 %v1937
    %v2362 = vunpack.c.l.b16 %v1938
    %v2363 = vunpack.c.l.b16 %v1939
    %v2364 = vunpack.c.l.b16 %v1940
    %v2365 = vunpack.c.l.b16 %v1941
    %v2366 = vunpack.c.l.b16 %v1942
    %v2367 = vunpack.c.l.b16 %v1943
    %v2368 = vunpack.c.l.b16 %v1944
    %v2369 = vpack.c.b16 %v2354, %v2353
    %v2370 = vpack.c.b16 %v2356, %v2355
    %v2371 = vpack.c.b16 %v2358, %v2357
    %v2372 = vpack.c.b16 %v2360, %v2359
    %v2373 = vpack.c.b16 %v2362, %v2361
    %v2374 = vpack.c.b16 %v2364, %v2363
    %v2375 = vpack.c.b16 %v2366, %v2365
    %v2376 = vpack.c.b16 %v2368, %v2367
    %2385 = vmatprep.subr.bf16.mxu0 0
    %2386 = vmatpush1.bf16.msra.mxu0 %v2369
    %2387 = vmatprep.subr.bf16.mxu0 0
    %2388 = vmatpush1.bf16.msra.mxu0 %v2370
    %2389 = vmatprep.subr.bf16.mxu0 0
    %2390 = vmatpush1.bf16.msra.mxu0 %v2371
    %2391 = vmatprep.subr.bf16.mxu0 0
    %2392 = vmatpush1.bf16.msra.mxu0 %v2372
    %2393 = vmatprep.subr.bf16.mxu0 0
    %2394 = vmatpush1.bf16.msra.mxu0 %v2373
    %2395 = vmatprep.subr.bf16.mxu0 0
    %2396 = vmatpush1.bf16.msra.mxu0 %v2374
    %2397 = vmatprep.subr.bf16.mxu0 0
    %2398 = vmatpush1.bf16.msra.mxu0 %v2375
    %2399 = vmatprep.subr.bf16.mxu0 0
    %2400 = vmatpush1.bf16.msra.mxu0 %v2376
    %2401 = vmatprep.subr.bf16.mxu0 0
    %2402 = vmatpush1.bf16.msra.mxu0 0
    %2403 = vmatprep.subr.bf16.mxu0 0
    %2404 = vmatpush1.bf16.msra.mxu0 0
    %2405 = vmatprep.subr.bf16.mxu0 0
    %2406 = vmatpush1.bf16.msra.mxu0 0
    %2407 = vmatprep.subr.bf16.mxu0 0
    %2408 = vmatpush1.bf16.msra.mxu0 0
    %2409 = vmatprep.subr.bf16.mxu0 0
    %2410 = vmatpush1.bf16.msra.mxu0 0
    %2411 = vmatprep.subr.bf16.mxu0 0
    %2412 = vmatpush1.bf16.msra.mxu0 0
    %2413 = vmatprep.subr.bf16.mxu0 0
    %2414 = vmatpush1.bf16.msra.mxu0 0
    %2415 = vmatprep.subr.bf16.mxu0 0
    %2416 = vmatpush1.bf16.msra.mxu0 0
    %2417 = vmatprep.mubr.bf16.mxu0 0
    %2418 = vmatmul.mubr.bf16.gmra.mrb[0].mxu0 %v2336
    %v2419 = vpop.f32.mrb[0].mxu0
    %v2420 = vadd.f32 0.0, %v2419
    %v2421 = vpop.f32.mrb[0].mxu0
    %v2422 = vpop.f32.mrb[0].mxu0
    %v2423 = vpop.f32.mrb[0].mxu0
    %2424 = vdwg.mxu0
    %v2441 = vunpack.c.l.b16 %v1913
    %v2442 = vunpack.c.l.b16 %v1914
    %v2443 = vunpack.c.l.b16 %v1915
    %v2444 = vunpack.c.l.b16 %v1916
    %v2445 = vunpack.c.l.b16 %v1917
    %v2446 = vunpack.c.l.b16 %v1918
    %v2447 = vunpack.c.l.b16 %v1919
    %v2448 = vunpack.c.l.b16 %v1920
    %v2449 = vunpack.c.l.b16 %v1921
    %v2450 = vunpack.c.l.b16 %v1922
    %v2451 = vunpack.c.l.b16 %v1923
    %v2452 = vunpack.c.l.b16 %v1924
    %v2453 = vunpack.c.l.b16 %v1925
    %v2454 = vunpack.c.l.b16 %v1926
    %v2455 = vunpack.c.l.b16 %v1927
    %v2456 = vunpack.c.l.b16 %v1928
    %v2457 = vpack.c.b16 %v2442, %v2441
    %v2458 = vpack.c.b16 %v2444, %v2443
    %v2459 = vpack.c.b16 %v2446, %v2445
    %v2460 = vpack.c.b16 %v2448, %v2447
    %v2461 = vpack.c.b16 %v2450, %v2449
    %v2462 = vpack.c.b16 %v2452, %v2451
    %v2463 = vpack.c.b16 %v2454, %v2453
    %v2464 = vpack.c.b16 %v2456, %v2455
    %2473 = vmatprep.subr.bf16.mxu0 0
    %2474 = vmatpush1.bf16.msra.mxu0 %v2457
    %2475 = vmatprep.subr.bf16.mxu0 0
    %2476 = vmatpush1.bf16.msra.mxu0 %v2458
    %2477 = vmatprep.subr.bf16.mxu0 0
    %2478 = vmatpush1.bf16.msra.mxu0 %v2459
    %2479 = vmatprep.subr.bf16.mxu0 0
    %2480 = vmatpush1.bf16.msra.mxu0 %v2460
    %2481 = vmatprep.subr.bf16.mxu0 0
    %2482 = vmatpush1.bf16.msra.mxu0 %v2461
    %2483 = vmatprep.subr.bf16.mxu0 0
    %2484 = vmatpush1.bf16.msra.mxu0 %v2462
    %2485 = vmatprep.subr.bf16.mxu0 0
    %2486 = vmatpush1.bf16.msra.mxu0 %v2463
    %2487 = vmatprep.subr.bf16.mxu0 0
    %2488 = vmatpush1.bf16.msra.mxu0 %v2464
    %2489 = vmatprep.subr.bf16.mxu0 0
    %2490 = vmatpush1.bf16.msra.mxu0 0
    %2491 = vmatprep.subr.bf16.mxu0 0
    %2492 = vmatpush1.bf16.msra.mxu0 0
    %2493 = vmatprep.subr.bf16.mxu0 0
    %2494 = vmatpush1.bf16.msra.mxu0 0
    %2495 = vmatprep.subr.bf16.mxu0 0
    %2496 = vmatpush1.bf16.msra.mxu0 0
    %2497 = vmatprep.subr.bf16.mxu0 0
    %2498 = vmatpush1.bf16.msra.mxu0 0
    %2499 = vmatprep.subr.bf16.mxu0 0
    %2500 = vmatpush1.bf16.msra.mxu0 0
    %2501 = vmatprep.subr.bf16.mxu0 0
    %2502 = vmatpush1.bf16.msra.mxu0 0
    %2503 = vmatprep.subr.bf16.mxu0 0
    %2504 = vmatpush1.bf16.msra.mxu0 0
    %2505 = vmatprep.mubr.bf16.mxu0 0
    %2506 = vmatmul.mubr.bf16.gmra.mrb[0].mxu0 %v2234
    %v2507 = vpop.f32.mrb[0].mxu0
    %v2508 = vadd.f32 %v2420, %v2507
    %v2509 = vpop.f32.mrb[0].mxu0
    %v2510 = vpop.f32.mrb[0].mxu0
    %v2511 = vpop.f32.mrb[0].mxu0
    %2512 = vdwg.mxu0
    %v2513 = vlaneseq
    %v2514 = vshrl.u32 %v2513, 7
    %v2515 = vsub.s32 1, %v2514
    %v2516 = vrot.slane %v1946, %v2515
    %v2517 = vadd.f32 %v2508, %v2516
    %v2518 = vadd.f32 %v1904, %v2517
    %v2519 = vsel %vm692, %v2518, 0.0
    %2520 = vadd.xlane.f32.xlu0 %v2519
    %v2521 = vpop.xlane.xlu0 %2520
    %v2522 = vmul.f32 %v2521, %v696
    %v2523 = vsub.f32 %v2518, %v2522
    %v2524 = vmul.f32 %v2523, %v2523
    %v2525 = vsel %vm692, %v2524, 0.0
    %2526 = vadd.xlane.f32.xlu0 %v2525
    %v2527 = vpop.xlane.xlu0 %2526
    %v2528 = vmul.f32 %v2527, %v696
    %v2529 = vadd.f32 %v2528, 1e-05
    %v2530 = vrsqrt.pop %v2529
    %v2531 = vmul.f32 %v2523, %v2530
    %v2532 = vlaneseq
    %v2533 = vshrl.u32 %v2532, 7
    %v2534 = vsub.s32 2, %v2533
    %v2535 = vrot.slane %v1946, %v2534
    %v2536 = vmul.f32 %v2531, %v2535
    %v2537 = vlaneseq
    %v2538 = vshrl.u32 %v2537, 7
    %v2539 = vsub.s32 3, %v2538
    %v2540 = vrot.slane %v1946, %v2539
    %v2541 = vadd.f32 %v2536, %v2540
    %v2542 = vpack.c.bf16 %v2541, %v2541
    %s2543 = scalar_lea.vmem [#allocation2], 16
    %v2544 = vld [vmem:[%s2543] sm:$0xf]
    %v2545 = vld [vmem:[%s2543 + $0x4] sm:$0xf]
    %v2546 = vlaneseq
    %v2547 = vshrl.u32 %v2546, 7
    %v2548 = vsub.s32 4, %v2547
    %v2549 = vrot.slane %v1946, %v2548
    %v2552 = vunpack.c.l.b16 %v2544
    %v2553 = vunpack.c.l.b16 %v2545
    %v2554 = vpack.c.b16 %v2553, %v2552
    %v2557 = vsel %vm176, %v2542, 0
    %2559 = vmatprep.subr.bf16.mxu0 0
    %2560 = vmatpush1.bf16.msra.mxu0 %v2554
    %2561 = vmatprep.subr.bf16.mxu0 0
    %2562 = vmatpush1.bf16.msra.mxu0 0
    %2563 = vmatprep.subr.bf16.mxu0 0
    %2564 = vmatpush1.bf16.msra.mxu0 0
    %2565 = vmatprep.subr.bf16.mxu0 0
    %2566 = vmatpush1.bf16.msra.mxu0 0
    %2567 = vmatprep.subr.bf16.mxu0 0
    %2568 = vmatpush1.bf16.msra.mxu0 0
    %2569 = vmatprep.subr.bf16.mxu0 0
    %2570 = vmatpush1.bf16.msra.mxu0 0
    %2571 = vmatprep.subr.bf16.mxu0 0
    %2572 = vmatpush1.bf16.msra.mxu0 0
    %2573 = vmatprep.subr.bf16.mxu0 0
    %2574 = vmatpush1.bf16.msra.mxu0 0
    %2575 = vmatprep.subr.bf16.mxu0 0
    %2576 = vmatpush1.bf16.msra.mxu0 0
    %2577 = vmatprep.subr.bf16.mxu0 0
    %2578 = vmatpush1.bf16.msra.mxu0 0
    %2579 = vmatprep.subr.bf16.mxu0 0
    %2580 = vmatpush1.bf16.msra.mxu0 0
    %2581 = vmatprep.subr.bf16.mxu0 0
    %2582 = vmatpush1.bf16.msra.mxu0 0
    %2583 = vmatprep.subr.bf16.mxu0 0
    %2584 = vmatpush1.bf16.msra.mxu0 0
    %2585 = vmatprep.subr.bf16.mxu0 0
    %2586 = vmatpush1.bf16.msra.mxu0 0
    %2587 = vmatprep.subr.bf16.mxu0 0
    %2588 = vmatpush1.bf16.msra.mxu0 0
    %2589 = vmatprep.subr.bf16.mxu0 0
    %2590 = vmatpush1.bf16.msra.mxu0 0
    %2591 = vmatprep.mubr.bf16.mxu0 0
    %2592 = vmatmul.mubr.bf16.gmra.mrb[0].mxu0 %v2557
    %v2593 = vpop.f32.mrb[0].mxu0
    %v2594 = vadd.f32 %v2549, %v2593
    %v2595 = vpop.f32.mrb[0].mxu0
    %v2596 = vpop.f32.mrb[0].mxu0
    %v2597 = vpop.f32.mrb[0].mxu0
    %2598 = vdwg.mxu0
    %v2599 = vmax.f32 %v2594, 0.0
    %v2600 = vpack.c.bf16 %v2599, %v2599
    %s2601 = scalar_lea.vmem %s4, 32
    %v2602 = vld [vmem:[%s2601] sm:$0xf]
    %v2603 = vld [vmem:[%s2601 + $0x4] sm:$0xf]
    %v2604 = vld [vmem:[%s2601 + $0x8] sm:$0xf]
    %v2605 = vld [vmem:[%s2601 + $0xc] sm:$0xf]
    %v2606 = vlaneseq
    %v2607 = vshrl.u32 %v2606, 7
    %v2608 = vsub.s32 5, %v2607
    %v2609 = vrot.slane %v1946, %v2608
    %v2614 = vunpack.c.l.b16 %v2602
    %v2615 = vunpack.c.l.b16 %v2603
    %v2616 = vunpack.c.l.b16 %v2604
    %v2617 = vunpack.c.l.b16 %v2605
    %v2618 = vpack.c.b16 %v2615, %v2614
    %v2619 = vpack.c.b16 %v2617, %v2616
    %v2623 = vsel %vm795, %v2600, 0
    %2625 = vmatprep.subr.bf16.mxu0 0
    %2626 = vmatpush1.bf16.msra.mxu0 %v2618
    %2627 = vmatprep.subr.bf16.mxu0 0
    %2628 = vmatpush1.bf16.msra.mxu0 %v2619
    %2629 = vmatprep.subr.bf16.mxu0 0
    %2630 = vmatpush1.bf16.msra.mxu0 0
    %2631 = vmatprep.subr.bf16.mxu0 0
    %2632 = vmatpush1.bf16.msra.mxu0 0
    %2633 = vmatprep.subr.bf16.mxu0 0
    %2634 = vmatpush1.bf16.msra.mxu0 0
    %2635 = vmatprep.subr.bf16.mxu0 0
    %2636 = vmatpush1.bf16.msra.mxu0 0
    %2637 = vmatprep.subr.bf16.mxu0 0
    %2638 = vmatpush1.bf16.msra.mxu0 0
    %2639 = vmatprep.subr.bf16.mxu0 0
    %2640 = vmatpush1.bf16.msra.mxu0 0
    %2641 = vmatprep.subr.bf16.mxu0 0
    %2642 = vmatpush1.bf16.msra.mxu0 0
    %2643 = vmatprep.subr.bf16.mxu0 0
    %2644 = vmatpush1.bf16.msra.mxu0 0
    %2645 = vmatprep.subr.bf16.mxu0 0
    %2646 = vmatpush1.bf16.msra.mxu0 0
    %2647 = vmatprep.subr.bf16.mxu0 0
    %2648 = vmatpush1.bf16.msra.mxu0 0
    %2649 = vmatprep.subr.bf16.mxu0 0
    %2650 = vmatpush1.bf16.msra.mxu0 0
    %2651 = vmatprep.subr.bf16.mxu0 0
    %2652 = vmatpush1.bf16.msra.mxu0 0
    %2653 = vmatprep.subr.bf16.mxu0 0
    %2654 = vmatpush1.bf16.msra.mxu0 0
    %2655 = vmatprep.subr.bf16.mxu0 0
    %2656 = vmatpush1.bf16.msra.mxu0 0
    %2657 = vmatprep.mubr.bf16.mxu0 0
    %2658 = vmatmul.mubr.bf16.gmra.mrb[0].mxu0 %v2623
    %v2659 = vpop.f32.mrb[0].mxu0
    %v2660 = vadd.f32 %v2609, %v2659
    %v2661 = vpop.f32.mrb[0].mxu0
    %v2662 = vpop.f32.mrb[0].mxu0
    %v2663 = vpop.f32.mrb[0].mxu0
    %2664 = vdwg.mxu0
    %v2665 = vadd.f32 %v2541, %v2660
    %v2666 = vsel %vm692, %v2665, 0.0
    %2667 = vadd.xlane.f32.xlu0 %v2666
    %v2668 = vpop.xlane.xlu0 %2667
    %v2669 = vmul.f32 %v2668, %v696
    %v2670 = vsub.f32 %v2665, %v2669
    %v2671 = vmul.f32 %v2670, %v2670
    %v2672 = vsel %vm692, %v2671, 0.0
    %2673 = vadd.xlane.f32.xlu0 %v2672
    %v2674 = vpop.xlane.xlu0 %2673
    %v2675 = vmul.f32 %v2674, %v696
    %v2676 = vadd.f32 %v2675, 1e-05
    %v2677 = vrsqrt.pop %v2676
    %v2678 = vmul.f32 %v2670, %v2677
    %v2679 = vlaneseq
    %v2680 = vshrl.u32 %v2679, 7
    %v2681 = vsub.s32 6, %v2680
    %v2682 = vrot.slane %v1946, %v2681
    %v2683 = vmul.f32 %v2678, %v2682
    %v2684 = vlaneseq
    %v2685 = vshrl.u32 %v2684, 7
    %v2686 = vsub.s32 7, %v2685
    %v2687 = vrot.slane %v1946, %v2686
    %v2688 = vadd.f32 %v2683, %v2687
    %s2689 = scalar_lea.vmem %s1, 144
    %v2690 = vld [vmem:[%s2689] sm:$0xff]
    %v2691 = vld [vmem:[%s2689 + $0x8] sm:$0xff]
    %v2692 = vld [vmem:[%s2689 + $0x10] sm:$0xff]
    %v2693 = vld [vmem:[%s2689 + $0x18] sm:$0xff]
    %v2694 = vld [vmem:[%s2689 + $0x20] sm:$0xff]
    %v2695 = vld [vmem:[%s2689 + $0x28] sm:$0xff]
    %s2696 = scalar_lea.vmem %s2, 384
    %v2697 = vld [vmem:[%s2696] sm:$0xf]
    %v2698 = vld [vmem:[%s2696 + $0x4] sm:$0xf]
    %v2699 = vld [vmem:[%s2696 + $0x8] sm:$0xf]
    %v2700 = vld [vmem:[%s2696 + $0xc] sm:$0xf]
    %v2701 = vld [vmem:[%s2696 + $0x10] sm:$0xf]
    %v2702 = vld [vmem:[%s2696 + $0x14] sm:$0xf]
    %v2703 = vld [vmem:[%s2696 + $0x18] sm:$0xf]
    %v2704 = vld [vmem:[%s2696 + $0x1c] sm:$0xf]
    %v2705 = vld [vmem:[%s2696 + $0x20] sm:$0xf]
    %v2706 = vld [vmem:[%s2696 + $0x24] sm:$0xf]
    %v2707 = vld [vmem:[%s2696 + $0x28] sm:$0xf]
    %v2708 = vld [vmem:[%s2696 + $0x2c] sm:$0xf]
    %v2709 = vld [vmem:[%s2696 + $0x30] sm:$0xf]
    %v2710 = vld [vmem:[%s2696 + $0x34] sm:$0xf]
    %v2711 = vld [vmem:[%s2696 + $0x38] sm:$0xf]
    %v2712 = vld [vmem:[%s2696 + $0x3c] sm:$0xf]
    %v2713 = vld [vmem:[%s2696 + $0x40] sm:$0xf]
    %v2714 = vld [vmem:[%s2696 + $0x44] sm:$0xf]
    %v2715 = vld [vmem:[%s2696 + $0x48] sm:$0xf]
    %v2716 = vld [vmem:[%s2696 + $0x4c] sm:$0xf]
    %v2717 = vld [vmem:[%s2696 + $0x50] sm:$0xf]
    %v2718 = vld [vmem:[%s2696 + $0x54] sm:$0xf]
    %v2719 = vld [vmem:[%s2696 + $0x58] sm:$0xf]
    %v2720 = vld [vmem:[%s2696 + $0x5c] sm:$0xf]
    %v2721 = vld [vmem:[%s2696 + $0x60] sm:$0xf]
    %v2722 = vld [vmem:[%s2696 + $0x64] sm:$0xf]
    %v2723 = vld [vmem:[%s2696 + $0x68] sm:$0xf]
    %v2724 = vld [vmem:[%s2696 + $0x6c] sm:$0xf]
    %v2725 = vld [vmem:[%s2696 + $0x70] sm:$0xf]
    %v2726 = vld [vmem:[%s2696 + $0x74] sm:$0xf]
    %v2727 = vld [vmem:[%s2696 + $0x78] sm:$0xf]
    %v2728 = vld [vmem:[%s2696 + $0x7c] sm:$0xf]
    %s2729 = scalar_lea.vmem %s5, 144
    %v2730 = vld [vmem:[%s2729] sm:$0xff]
    %v2731 = vld [vmem:[%s2729 + $0x8] sm:$0xff]
    %v2732 = vld [vmem:[%s2729 + $0x10] sm:$0xff]
    %v2733 = vld [vmem:[%s2729 + $0x18] sm:$0xff]
    %v2734 = vld [vmem:[%s2729 + $0x20] sm:$0xff]
    %v2735 = vld [vmem:[%s2729 + $0x28] sm:$0xff]
    %v2736 = vpack.c.bf16 %v2688, %v2688
    %v2737 = vlaneseq
    %v2738 = vshrl.u32 %v2737, 7
    %v2739 = vsub.s32 0, %v2738
    %v2740 = vrot.slane %v2730, %v2739
    %v2741 = vlaneseq
    %v2742 = vshrl.u32 %v2741, 7
    %v2743 = vsub.s32 0, %v2742
    %v2744 = vrot.slane %v2731, %v2743
    %v2745 = vlaneseq
    %v2746 = vshrl.u32 %v2745, 7
    %v2747 = vsub.s32 0, %v2746
    %v2748 = vrot.slane %v2732, %v2747
    %v2749 = vlaneseq
    %v2750 = vshrl.u32 %v2749, 7
    %v2751 = vsub.s32 0, %v2750
    %v2752 = vrot.slane %v2733, %v2751
    %v2753 = vlaneseq
    %v2754 = vshrl.u32 %v2753, 7
    %v2755 = vsub.s32 0, %v2754
    %v2756 = vrot.slane %v2734, %v2755
    %v2757 = vlaneseq
    %v2758 = vshrl.u32 %v2757, 7
    %v2759 = vsub.s32 0, %v2758
    %v2760 = vrot.slane %v2735, %v2759
    %v2767 = vunpack.c.l.b16 %v2690
    %v2768 = vunpack.c.h.b16 %v2690
    %v2769 = vunpack.c.l.b16 %v2691
    %v2770 = vunpack.c.h.b16 %v2691
    %v2771 = vunpack.c.l.b16 %v2692
    %v2772 = vunpack.c.h.b16 %v2692
    %v2773 = vunpack.c.l.b16 %v2693
    %v2774 = vunpack.c.h.b16 %v2693
    %v2775 = vunpack.c.l.b16 %v2694
    %v2776 = vunpack.c.h.b16 %v2694
    %v2777 = vunpack.c.l.b16 %v2695
    %v2778 = vunpack.c.h.b16 %v2695
    %v2779 = vpack.c.b16 %v2773, %v2767
    %v2780 = vpack.c.b16 %v2774, %v2768
    %v2781 = vpack.c.b16 %v2775, %v2769
    %v2782 = vpack.c.b16 %v2776, %v2770
    %v2783 = vpack.c.b16 %v2777, %v2771
    %v2784 = vpack.c.b16 %v2778, %v2772
    %v2792 = vsel %vm176, %v2736, 0
    %2794 = vmatprep.subr.bf16.mxu0 %v2780
    %2795 = vmatpush1.bf16.msra.mxu0 %v2779
    %2796 = vmatprep.subr.bf16.mxu0 0
    %2797 = vmatpush1.bf16.msra.mxu0 0
    %2798 = vmatprep.subr.bf16.mxu0 0
    %2799 = vmatpush1.bf16.msra.mxu0 0
    %2800 = vmatprep.subr.bf16.mxu0 0
    %2801 = vmatpush1.bf16.msra.mxu0 0
    %2802 = vmatprep.subr.bf16.mxu0 0
    %2803 = vmatpush1.bf16.msra.mxu0 0
    %2804 = vmatprep.subr.bf16.mxu0 0
    %2805 = vmatpush1.bf16.msra.mxu0 0
    %2806 = vmatprep.subr.bf16.mxu0 0
    %2807 = vmatpush1.bf16.msra.mxu0 0
    %2808 = vmatprep.subr.bf16.mxu0 0
    %2809 = vmatpush1.bf16.msra.mxu0 0
    %2810 = vmatprep.subr.bf16.mxu0 0
    %2811 = vmatpush1.bf16.msra.mxu0 0
    %2812 = vmatprep.subr.bf16.mxu0 0
    %2813 = vmatpush1.bf16.msra.mxu0 0
    %2814 = vmatprep.subr.bf16.mxu0 0
    %2815 = vmatpush1.bf16.msra.mxu0 0
    %2816 = vmatprep.subr.bf16.mxu0 0
    %2817 = vmatpush1.bf16.msra.mxu0 0
    %2818 = vmatprep.subr.bf16.mxu0 0
    %2819 = vmatpush1.bf16.msra.mxu0 0
    %2820 = vmatprep.subr.bf16.mxu0 0
    %2821 = vmatpush1.bf16.msra.mxu0 0
    %2822 = vmatprep.subr.bf16.mxu0 0
    %2823 = vmatpush1.bf16.msra.mxu0 0
    %2824 = vmatprep.subr.bf16.mxu0 0
    %2825 = vmatpush1.bf16.msra.mxu0 0
    %2826 = vmatprep.mubr.bf16.mxu0 0
    %2827 = vmatmul.mubr.bf16.gmra.mrb[0].mxu0 %v2792
    %v2828 = vpop.f32.mrb[0].mxu0
    %v2829 = vadd.f32 %v2740, %v2828
    %v2830 = vpop.f32.mrb[0].mxu0
    %v2831 = vadd.f32 %v2744, %v2830
    %v2832 = vpop.f32.mrb[0].mxu0
    %v2833 = vpop.f32.mrb[0].mxu0
    %2834 = vdwg.mxu0
    %2835 = vmatprep.subr.bf16.mxu0 %v2782
    %2836 = vmatpush1.bf16.msra.mxu0 %v2781
    %2837 = vmatprep.subr.bf16.mxu0 0
    %2838 = vmatpush1.bf16.msra.mxu0 0
    %2839 = vmatprep.subr.bf16.mxu0 0
    %2840 = vmatpush1.bf16.msra.mxu0 0
    %2841 = vmatprep.subr.bf16.mxu0 0
    %2842 = vmatpush1.bf16.msra.mxu0 0
    %2843 = vmatprep.subr.bf16.mxu0 0
    %2844 = vmatpush1.bf16.msra.mxu0 0
    %2845 = vmatprep.subr.bf16.mxu0 0
    %2846 = vmatpush1.bf16.msra.mxu0 0
    %2847 = vmatprep.subr.bf16.mxu0 0
    %2848 = vmatpush1.bf16.msra.mxu0 0
    %2849 = vmatprep.subr.bf16.mxu0 0
    %2850 = vmatpush1.bf16.msra.mxu0 0
    %2851 = vmatprep.subr.bf16.mxu0 0
    %2852 = vmatpush1.bf16.msra.mxu0 0
    %2853 = vmatprep.subr.bf16.mxu0 0
    %2854 = vmatpush1.bf16.msra.mxu0 0
    %2855 = vmatprep.subr.bf16.mxu0 0
    %2856 = vmatpush1.bf16.msra.mxu0 0
    %2857 = vmatprep.subr.bf16.mxu0 0
    %2858 = vmatpush1.bf16.msra.mxu0 0
    %2859 = vmatprep.subr.bf16.mxu0 0
    %2860 = vmatpush1.bf16.msra.mxu0 0
    %2861 = vmatprep.subr.bf16.mxu0 0
    %2862 = vmatpush1.bf16.msra.mxu0 0
    %2863 = vmatprep.subr.bf16.mxu0 0
    %2864 = vmatpush1.bf16.msra.mxu0 0
    %2865 = vmatprep.subr.bf16.mxu0 0
    %2866 = vmatpush1.bf16.msra.mxu0 0
    %2867 = vmatprep.mubr.bf16.mxu0 0
    %2868 = vmatmul.mubr.bf16.gmra.mrb[0].mxu0 %v2792
    %v2869 = vpop.f32.mrb[0].mxu0
    %v2870 = vadd.f32 %v2748, %v2869
    %v2871 = vpop.f32.mrb[0].mxu0
    %v2872 = vadd.f32 %v2752, %v2871
    %v2873 = vpop.f32.mrb[0].mxu0
    %v2874 = vpop.f32.mrb[0].mxu0
    %2875 = vdwg.mxu0
    %2876 = vmatprep.subr.bf16.mxu0 %v2784
    %2877 = vmatpush1.bf16.msra.mxu0 %v2783
    %2878 = vmatprep.subr.bf16.mxu0 0
    %2879 = vmatpush1.bf16.msra.mxu0 0
    %2880 = vmatprep.subr.bf16.mxu0 0
    %2881 = vmatpush1.bf16.msra.mxu0 0
    %2882 = vmatprep.subr.bf16.mxu0 0
    %2883 = vmatpush1.bf16.msra.mxu0 0
    %2884 = vmatprep.subr.bf16.mxu0 0
    %2885 = vmatpush1.bf16.msra.mxu0 0
    %2886 = vmatprep.subr.bf16.mxu0 0
    %2887 = vmatpush1.bf16.msra.mxu0 0
    %2888 = vmatprep.subr.bf16.mxu0 0
    %2889 = vmatpush1.bf16.msra.mxu0 0
    %2890 = vmatprep.subr.bf16.mxu0 0
    %2891 = vmatpush1.bf16.msra.mxu0 0
    %2892 = vmatprep.subr.bf16.mxu0 0
    %2893 = vmatpush1.bf16.msra.mxu0 0
    %2894 = vmatprep.subr.bf16.mxu0 0
    %2895 = vmatpush1.bf16.msra.mxu0 0
    %2896 = vmatprep.subr.bf16.mxu0 0
    %2897 = vmatpush1.bf16.msra.mxu0 0
    %2898 = vmatprep.subr.bf16.mxu0 0
    %2899 = vmatpush1.bf16.msra.mxu0 0
    %2900 = vmatprep.subr.bf16.mxu0 0
    %2901 = vmatpush1.bf16.msra.mxu0 0
    %2902 = vmatprep.subr.bf16.mxu0 0
    %2903 = vmatpush1.bf16.msra.mxu0 0
    %2904 = vmatprep.subr.bf16.mxu0 0
    %2905 = vmatpush1.bf16.msra.mxu0 0
    %2906 = vmatprep.subr.bf16.mxu0 0
    %2907 = vmatpush1.bf16.msra.mxu0 0
    %2908 = vmatprep.mubr.bf16.mxu0 0
    %2909 = vmatmul.mubr.bf16.gmra.mrb[0].mxu0 %v2792
    %v2910 = vpop.f32.mrb[0].mxu0
    %v2911 = vadd.f32 %v2756, %v2910
    %v2912 = vpop.f32.mrb[0].mxu0
    %v2913 = vadd.f32 %v2760, %v2912
    %v2914 = vpop.f32.mrb[0].mxu0
    %v2915 = vpop.f32.mrb[0].mxu0
    %2916 = vdwg.mxu0
    %v2917 = vpack.c.bf16 %v2829, %v2829
    %v2918 = vpack.c.bf16 %v2831, %v2831
    %2919 = vmatprep.subr.bf16.mxu0 0
    %2920 = vmatpush1.bf16.xpose.msra.mxu0 %v2918
    %2921 = vmatprep.subr.bf16.mxu0 0
    %2922 = vmatpush1.bf16.xpose.msra.mxu0 0
    %2923 = vmatprep.subr.bf16.mxu0 0
    %2924 = vmatpush1.bf16.xpose.msra.mxu0 0
    %2925 = vmatprep.subr.bf16.mxu0 0
    %2926 = vmatpush1.bf16.xpose.msra.mxu0 0
    %2927 = vmatprep.subr.bf16.mxu0 0
    %2928 = vmatpush1.bf16.xpose.msra.mxu0 0
    %2929 = vmatprep.subr.bf16.mxu0 0
    %2930 = vmatpush1.bf16.xpose.msra.mxu0 0
    %2931 = vmatprep.subr.bf16.mxu0 0
    %2932 = vmatpush1.bf16.xpose.msra.mxu0 0
    %2933 = vmatprep.subr.bf16.mxu0 0
    %2934 = vmatpush1.bf16.xpose.msra.mxu0 0
    %2935 = vmatprep.subr.bf16.mxu0 0
    %2936 = vmatpush1.bf16.xpose.msra.mxu0 0
    %2937 = vmatprep.subr.bf16.mxu0 0
    %2938 = vmatpush1.bf16.xpose.msra.mxu0 0
    %2939 = vmatprep.subr.bf16.mxu0 0
    %2940 = vmatpush1.bf16.xpose.msra.mxu0 0
    %2941 = vmatprep.subr.bf16.mxu0 0
    %2942 = vmatpush1.bf16.xpose.msra.mxu0 0
    %2943 = vmatprep.subr.bf16.mxu0 0
    %2944 = vmatpush1.bf16.xpose.msra.mxu0 0
    %2945 = vmatprep.subr.bf16.mxu0 0
    %2946 = vmatpush1.bf16.xpose.msra.mxu0 0
    %2947 = vmatprep.subr.bf16.mxu0 0
    %2948 = vmatpush1.bf16.xpose.msra.mxu0 0
    %2949 = vmatprep.subr.bf16.mxu0 0
    %2950 = vmatpush1.bf16.xpose.msra.mxu0 0
    %2951 = vmatprep.mubr.bf16.mxu0 0
    %2952 = vmatmul.mubr.bf16.gmra.mrb[0].mxu0 %v2917
    %v2953 = vpop.f32.mrb[0].mxu0
    %v2954 = vadd.f32 0.0, %v2953
    %v2955 = vpop.f32.mrb[0].mxu0
    %v2956 = vpop.f32.mrb[0].mxu0
    %v2957 = vpop.f32.mrb[0].mxu0
    %2958 = vdwg.mxu0
    %v2959 = vsel %vm345, %v2954, -inf
    %2960 = vmax.xlane.f32.xlu0 %v2959
    %v2961 = vpop.xlane.xlu0 %2960
    %v2962 = vsub.f32 %v2954, %v2961
    %v2963 = vmul.f32 %v2962, 1.442695
    %v2964 = vpow.pop %v2963
    %v2965 = vsel %vm345, %v2964, 0.0
    %2966 = vadd.xlane.f32.xlu0 %v2965
    %v2967 = vpop.xlane.xlu0 %2966
    %v2968 = vrcp.pop %v2967
    %v2969 = vmul.f32 %v2964, %v2968
    %v2970 = vpack.c.bf16 %v2969, %v2969
    %v2971 = vpack.c.bf16 %v2870, %v2870
    %v2973 = vsel %vm359, %v2970, 0
    %v2976 = vsel %vm363, %v2971, 0
    %2978 = vmatprep.subr.bf16.mxu0 0
    %2979 = vmatpush1.bf16.msra.mxu0 %v2976
    %2980 = vmatprep.subr.bf16.mxu0 0
    %2981 = vmatpush1.bf16.msra.mxu0 0
    %2982 = vmatprep.subr.bf16.mxu0 0
    %2983 = vmatpush1.bf16.msra.mxu0 0
    %2984 = vmatprep.subr.bf16.mxu0 0
    %2985 = vmatpush1.bf16.msra.mxu0 0
    %2986 = vmatprep.subr.bf16.mxu0 0
    %2987 = vmatpush1.bf16.msra.mxu0 0
    %2988 = vmatprep.subr.bf16.mxu0 0
    %2989 = vmatpush1.bf16.msra.mxu0 0
    %2990 = vmatprep.subr.bf16.mxu0 0
    %2991 = vmatpush1.bf16.msra.mxu0 0
    %2992 = vmatprep.subr.bf16.mxu0 0
    %2993 = vmatpush1.bf16.msra.mxu0 0
    %2994 = vmatprep.subr.bf16.mxu0 0
    %2995 = vmatpush1.bf16.msra.mxu0 0
    %2996 = vmatprep.subr.bf16.mxu0 0
    %2997 = vmatpush1.bf16.msra.mxu0 0
    %2998 = vmatprep.subr.bf16.mxu0 0
    %2999 = vmatpush1.bf16.msra.mxu0 0
    %3000 = vmatprep.subr.bf16.mxu0 0
    %3001 = vmatpush1.bf16.msra.mxu0 0
    %3002 = vmatprep.subr.bf16.mxu0 0
    %3003 = vmatpush1.bf16.msra.mxu0 0
    %3004 = vmatprep.subr.bf16.mxu0 0
    %3005 = vmatpush1.bf16.msra.mxu0 0
    %3006 = vmatprep.subr.bf16.mxu0 0
    %3007 = vmatpush1.bf16.msra.mxu0 0
    %3008 = vmatprep.subr.bf16.mxu0 0
    %3009 = vmatpush1.bf16.msra.mxu0 0
    %3010 = vmatprep.mubr.bf16.mxu0 0
    %3011 = vmatmul.mubr.bf16.gmra.mrb[0].mxu0 %v2973
    %v3012 = vpop.f32.mrb[0].mxu0
    %v3013 = vadd.f32 0.0, %v3012
    %v3014 = vpop.f32.mrb[0].mxu0
    %v3015 = vpop.f32.mrb[0].mxu0
    %v3016 = vpop.f32.mrb[0].mxu0
    %3017 = vdwg.mxu0
    %v3018 = vpack.c.bf16 %v3013, %v3013
    %v3019 = vpack.c.bf16 %v2872, %v2872
    %v3020 = vpack.c.bf16 %v2911, %v2911
    %3021 = vmatprep.subr.bf16.mxu0 0
    %3022 = vmatpush1.bf16.xpose.msra.mxu0 %v3020
    %3023 = vmatprep.subr.bf16.mxu0 0
    %3024 = vmatpush1.bf16.xpose.msra.mxu0 0
    %3025 = vmatprep.subr.bf16.mxu0 0
    %3026 = vmatpush1.bf16.xpose.msra.mxu0 0
    %3027 = vmatprep.subr.bf16.mxu0 0
    %3028 = vmatpush1.bf16.xpose.msra.mxu0 0
    %3029 = vmatprep.subr.bf16.mxu0 0
    %3030 = vmatpush1.bf16.xpose.msra.mxu0 0
    %3031 = vmatprep.subr.bf16.mxu0 0
    %3032 = vmatpush1.bf16.xpose.msra.mxu0 0
    %3033 = vmatprep.subr.bf16.mxu0 0
    %3034 = vmatpush1.bf16.xpose.msra.mxu0 0
    %3035 = vmatprep.subr.bf16.mxu0 0
    %3036 = vmatpush1.bf16.xpose.msra.mxu0 0
    %3037 = vmatprep.subr.bf16.mxu0 0
    %3038 = vmatpush1.bf16.xpose.msra.mxu0 0
    %3039 = vmatprep.subr.bf16.mxu0 0
    %3040 = vmatpush1.bf16.xpose.msra.mxu0 0
    %3041 = vmatprep.subr.bf16.mxu0 0
    %3042 = vmatpush1.bf16.xpose.msra.mxu0 0
    %3043 = vmatprep.subr.bf16.mxu0 0
    %3044 = vmatpush1.bf16.xpose.msra.mxu0 0
    %3045 = vmatprep.subr.bf16.mxu0 0
    %3046 = vmatpush1.bf16.xpose.msra.mxu0 0
    %3047 = vmatprep.subr.bf16.mxu0 0
    %3048 = vmatpush1.bf16.xpose.msra.mxu0 0
    %3049 = vmatprep.subr.bf16.mxu0 0
    %3050 = vmatpush1.bf16.xpose.msra.mxu0 0
    %3051 = vmatprep.subr.bf16.mxu0 0
    %3052 = vmatpush1.bf16.xpose.msra.mxu0 0
    %3053 = vmatprep.mubr.bf16.mxu0 0
    %3054 = vmatmul.mubr.bf16.gmra.mrb[0].mxu0 %v3019
    %v3055 = vpop.f32.mrb[0].mxu0
    %v3056 = vadd.f32 0.0, %v3055
    %v3057 = vpop.f32.mrb[0].mxu0
    %v3058 = vpop.f32.mrb[0].mxu0
    %v3059 = vpop.f32.mrb[0].mxu0
    %3060 = vdwg.mxu0
    %v3061 = vsel %vm345, %v3056, -inf
    %3062 = vmax.xlane.f32.xlu0 %v3061
    %v3063 = vpop.xlane.xlu0 %3062
    %v3064 = vsub.f32 %v3056, %v3063
    %v3065 = vmul.f32 %v3064, 1.442695
    %v3066 = vpow.pop %v3065
    %v3067 = vsel %vm345, %v3066, 0.0
    %3068 = vadd.xlane.f32.xlu0 %v3067
    %v3069 = vpop.xlane.xlu0 %3068
    %v3070 = vrcp.pop %v3069
    %v3071 = vmul.f32 %v3066, %v3070
    %v3072 = vpack.c.bf16 %v3071, %v3071
    %v3073 = vpack.c.bf16 %v2913, %v2913
    %v3075 = vsel %vm359, %v3072, 0
    %v3078 = vsel %vm363, %v3073, 0
    %3080 = vmatprep.subr.bf16.mxu0 0
    %3081 = vmatpush1.bf16.msra.mxu0 %v3078
    %3082 = vmatprep.subr.bf16.mxu0 0
    %3083 = vmatpush1.bf16.msra.mxu0 0
    %3084 = vmatprep.subr.bf16.mxu0 0
    %3085 = vmatpush1.bf16.msra.mxu0 0
    %3086 = vmatprep.subr.bf16.mxu0 0
    %3087 = vmatpush1.bf16.msra.mxu0 0
    %3088 = vmatprep.subr.bf16.mxu0 0
    %3089 = vmatpush1.bf16.msra.mxu0 0
    %3090 = vmatprep.subr.bf16.mxu0 0
    %3091 = vmatpush1.bf16.msra.mxu0 0
    %3092 = vmatprep.subr.bf16.mxu0 0
    %3093 = vmatpush1.bf16.msra.mxu0 0
    %3094 = vmatprep.subr.bf16.mxu0 0
    %3095 = vmatpush1.bf16.msra.mxu0 0
    %3096 = vmatprep.subr.bf16.mxu0 0
    %3097 = vmatpush1.bf16.msra.mxu0 0
    %3098 = vmatprep.subr.bf16.mxu0 0
    %3099 = vmatpush1.bf16.msra.mxu0 0
    %3100 = vmatprep.subr.bf16.mxu0 0
    %3101 = vmatpush1.bf16.msra.mxu0 0
    %3102 = vmatprep.subr.bf16.mxu0 0
    %3103 = vmatpush1.bf16.msra.mxu0 0
    %3104 = vmatprep.subr.bf16.mxu0 0
    %3105 = vmatpush1.bf16.msra.mxu0 0
    %3106 = vmatprep.subr.bf16.mxu0 0
    %3107 = vmatpush1.bf16.msra.mxu0 0
    %3108 = vmatprep.subr.bf16.mxu0 0
    %3109 = vmatpush1.bf16.msra.mxu0 0
    %3110 = vmatprep.subr.bf16.mxu0 0
    %3111 = vmatpush1.bf16.msra.mxu0 0
    %3112 = vmatprep.mubr.bf16.mxu0 0
    %3113 = vmatmul.mubr.bf16.gmra.mrb[0].mxu0 %v3075
    %v3114 = vpop.f32.mrb[0].mxu0
    %v3115 = vadd.f32 0.0, %v3114
    %v3116 = vpop.f32.mrb[0].mxu0
    %v3117 = vpop.f32.mrb[0].mxu0
    %v3118 = vpop.f32.mrb[0].mxu0
    %3119 = vdwg.mxu0
    %v3120 = vpack.c.bf16 %v3115, %v3115
    %v3137 = vunpack.c.l.b16 %v2713
    %v3138 = vunpack.c.l.b16 %v2714
    %v3139 = vunpack.c.l.b16 %v2715
    %v3140 = vunpack.c.l.b16 %v2716
    %v3141 = vunpack.c.l.b16 %v2717
    %v3142 = vunpack.c.l.b16 %v2718
    %v3143 = vunpack.c.l.b16 %v2719
    %v3144 = vunpack.c.l.b16 %v2720
    %v3145 = vunpack.c.l.b16 %v2721
    %v3146 = vunpack.c.l.b16 %v2722
    %v3147 = vunpack.c.l.b16 %v2723
    %v3148 = vunpack.c.l.b16 %v2724
    %v3149 = vunpack.c.l.b16 %v2725
    %v3150 = vunpack.c.l.b16 %v2726
    %v3151 = vunpack.c.l.b16 %v2727
    %v3152 = vunpack.c.l.b16 %v2728
    %v3153 = vpack.c.b16 %v3138, %v3137
    %v3154 = vpack.c.b16 %v3140, %v3139
    %v3155 = vpack.c.b16 %v3142, %v3141
    %v3156 = vpack.c.b16 %v3144, %v3143
    %v3157 = vpack.c.b16 %v3146, %v3145
    %v3158 = vpack.c.b16 %v3148, %v3147
    %v3159 = vpack.c.b16 %v3150, %v3149
    %v3160 = vpack.c.b16 %v3152, %v3151
    %3169 = vmatprep.subr.bf16.mxu0 0
    %3170 = vmatpush1.bf16.msra.mxu0 %v3153
    %3171 = vmatprep.subr.bf16.mxu0 0
    %3172 = vmatpush1.bf16.msra.mxu0 %v3154
    %3173 = vmatprep.subr.bf16.mxu0 0
    %3174 = vmatpush1.bf16.msra.mxu0 %v3155
    %3175 = vmatprep.subr.bf16.mxu0 0
    %3176 = vmatpush1.bf16.msra.mxu0 %v3156
    %3177 = vmatprep.subr.bf16.mxu0 0
    %3178 = vmatpush1.bf16.msra.mxu0 %v3157
    %3179 = vmatprep.subr.bf16.mxu0 0
    %3180 = vmatpush1.bf16.msra.mxu0 %v3158
    %3181 = vmatprep.subr.bf16.mxu0 0
    %3182 = vmatpush1.bf16.msra.mxu0 %v3159
    %3183 = vmatprep.subr.bf16.mxu0 0
    %3184 = vmatpush1.bf16.msra.mxu0 %v3160
    %3185 = vmatprep.subr.bf16.mxu0 0
    %3186 = vmatpush1.bf16.msra.mxu0 0
    %3187 = vmatprep.subr.bf16.mxu0 0
    %3188 = vmatpush1.bf16.msra.mxu0 0
    %3189 = vmatprep.subr.bf16.mxu0 0
    %3190 = vmatpush1.bf16.msra.mxu0 0
    %3191 = vmatprep.subr.bf16.mxu0 0
    %3192 = vmatpush1.bf16.msra.mxu0 0
    %3193 = vmatprep.subr.bf16.mxu0 0
    %3194 = vmatpush1.bf16.msra.mxu0 0
    %3195 = vmatprep.subr.bf16.mxu0 0
    %3196 = vmatpush1.bf16.msra.mxu0 0
    %3197 = vmatprep.subr.bf16.mxu0 0
    %3198 = vmatpush1.bf16.msra.mxu0 0
    %3199 = vmatprep.subr.bf16.mxu0 0
    %3200 = vmatpush1.bf16.msra.mxu0 0
    %3201 = vmatprep.mubr.bf16.mxu0 0
    %3202 = vmatmul.mubr.bf16.gmra.mrb[0].mxu0 %v3120
    %v3203 = vpop.f32.mrb[0].mxu0
    %v3204 = vadd.f32 0.0, %v3203
    %v3205 = vpop.f32.mrb[0].mxu0
    %v3206 = vpop.f32.mrb[0].mxu0
    %v3207 = vpop.f32.mrb[0].mxu0
    %3208 = vdwg.mxu0
    %v3225 = vunpack.c.l.b16 %v2697
    %v3226 = vunpack.c.l.b16 %v2698
    %v3227 = vunpack.c.l.b16 %v2699
    %v3228 = vunpack.c.l.b16 %v2700
    %v3229 = vunpack.c.l.b16 %v2701
    %v3230 = vunpack.c.l.b16 %v2702
    %v3231 = vunpack.c.l.b16 %v2703
    %v3232 = vunpack.c.l.b16 %v2704
    %v3233 = vunpack.c.l.b16 %v2705
    %v3234 = vunpack.c.l.b16 %v2706
    %v3235 = vunpack.c.l.b16 %v2707
    %v3236 = vunpack.c.l.b16 %v2708
    %v3237 = vunpack.c.l.b16 %v2709
    %v3238 = vunpack.c.l.b16 %v2710
    %v3239 = vunpack.c.l.b16 %v2711
    %v3240 = vunpack.c.l.b16 %v2712
    %v3241 = vpack.c.b16 %v3226, %v3225
    %v3242 = vpack.c.b16 %v3228, %v3227
    %v3243 = vpack.c.b16 %v3230, %v3229
    %v3244 = vpack.c.b16 %v3232, %v3231
    %v3245 = vpack.c.b16 %v3234, %v3233
    %v3246 = vpack.c.b16 %v3236, %v3235
    %v3247 = vpack.c.b16 %v3238, %v3237
    %v3248 = vpack.c.b16 %v3240, %v3239
    %3257 = vmatprep.subr.bf16.mxu0 0
    %3258 = vmatpush1.bf16.msra.mxu0 %v3241
    %3259 = vmatprep.subr.bf16.mxu0 0
    %3260 = vmatpush1.bf16.msra.mxu0 %v3242
    %3261 = vmatprep.subr.bf16.mxu0 0
    %3262 = vmatpush1.bf16.msra.mxu0 %v3243
    %3263 = vmatprep.subr.bf16.mxu0 0
    %3264 = vmatpush1.bf16.msra.mxu0 %v3244
    %3265 = vmatprep.subr.bf16.mxu0 0
    %3266 = vmatpush1.bf16.msra.mxu0 %v3245
    %3267 = vmatprep.subr.bf16.mxu0 0
    %3268 = vmatpush1.bf16.msra.mxu0 %v3246
    %3269 = vmatprep.subr.bf16.mxu0 0
    %3270 = vmatpush1.bf16.msra.mxu0 %v3247
    %3271 = vmatprep.subr.bf16.mxu0 0
    %3272 = vmatpush1.bf16.msra.mxu0 %v3248
    %3273 = vmatprep.subr.bf16.mxu0 0
    %3274 = vmatpush1.bf16.msra.mxu0 0
    %3275 = vmatprep.subr.bf16.mxu0 0
    %3276 = vmatpush1.bf16.msra.mxu0 0
    %3277 = vmatprep.subr.bf16.mxu0 0
    %3278 = vmatpush1.bf16.msra.mxu0 0
    %3279 = vmatprep.subr.bf16.mxu0 0
    %3280 = vmatpush1.bf16.msra.mxu0 0
    %3281 = vmatprep.subr.bf16.mxu0 0
    %3282 = vmatpush1.bf16.msra.mxu0 0
    %3283 = vmatprep.subr.bf16.mxu0 0
    %3284 = vmatpush1.bf16.msra.mxu0 0
    %3285 = vmatprep.subr.bf16.mxu0 0
    %3286 = vmatpush1.bf16.msra.mxu0 0
    %3287 = vmatprep.subr.bf16.mxu0 0
    %3288 = vmatpush1.bf16.msra.mxu0 0
    %3289 = vmatprep.mubr.bf16.mxu0 0
    %3290 = vmatmul.mubr.bf16.gmra.mrb[0].mxu0 %v3018
    %v3291 = vpop.f32.mrb[0].mxu0
    %v3292 = vadd.f32 %v3204, %v3291
    %v3293 = vpop.f32.mrb[0].mxu0
    %v3294 = vpop.f32.mrb[0].mxu0
    %v3295 = vpop.f32.mrb[0].mxu0
    %3296 = vdwg.mxu0
    %v3297 = vlaneseq
    %v3298 = vshrl.u32 %v3297, 7
    %v3299 = vsub.s32 1, %v3298
    %v3300 = vrot.slane %v2730, %v3299
    %v3301 = vadd.f32 %v3292, %v3300
    %v3302 = vadd.f32 %v2688, %v3301
    %v3303 = vsel %vm692, %v3302, 0.0
    %3304 = vadd.xlane.f32.xlu0 %v3303
    %v3305 = vpop.xlane.xlu0 %3304
    %v3306 = vmul.f32 %v3305, %v696
    %v3307 = vsub.f32 %v3302, %v3306
    %v3308 = vmul.f32 %v3307, %v3307
    %v3309 = vsel %vm692, %v3308, 0.0
    %3310 = vadd.xlane.f32.xlu0 %v3309
    %v3311 = vpop.xlane.xlu0 %3310
    %v3312 = vmul.f32 %v3311, %v696
    %v3313 = vadd.f32 %v3312, 1e-05
    %v3314 = vrsqrt.pop %v3313
    %v3315 = vmul.f32 %v3307, %v3314
    %v3316 = vlaneseq
    %v3317 = vshrl.u32 %v3316, 7
    %v3318 = vsub.s32 2, %v3317
    %v3319 = vrot.slane %v2730, %v3318
    %v3320 = vmul.f32 %v3315, %v3319
    %v3321 = vlaneseq
    %v3322 = vshrl.u32 %v3321, 7
    %v3323 = vsub.s32 3, %v3322
    %v3324 = vrot.slane %v2730, %v3323
    %v3325 = vadd.f32 %v3320, %v3324
    %v3326 = vpack.c.bf16 %v3325, %v3325
    %s3327 = scalar_lea.vmem [#allocation2], 24
    %v3328 = vld [vmem:[%s3327] sm:$0xf]
    %v3329 = vld [vmem:[%s3327 + $0x4] sm:$0xf]
    %v3330 = vlaneseq
    %v3331 = vshrl.u32 %v3330, 7
    %v3332 = vsub.s32 4, %v3331
    %v3333 = vrot.slane %v2730, %v3332
    %v3336 = vunpack.c.l.b16 %v3328
    %v3337 = vunpack.c.l.b16 %v3329
    %v3338 = vpack.c.b16 %v3337, %v3336
    %v3341 = vsel %vm176, %v3326, 0
    %3343 = vmatprep.subr.bf16.mxu0 0
    %3344 = vmatpush1.bf16.msra.mxu0 %v3338
    %3345 = vmatprep.subr.bf16.mxu0 0
    %3346 = vmatpush1.bf16.msra.mxu0 0
    %3347 = vmatprep.subr.bf16.mxu0 0
    %3348 = vmatpush1.bf16.msra.mxu0 0
    %3349 = vmatprep.subr.bf16.mxu0 0
    %3350 = vmatpush1.bf16.msra.mxu0 0
    %3351 = vmatprep.subr.bf16.mxu0 0
    %3352 = vmatpush1.bf16.msra.mxu0 0
    %3353 = vmatprep.subr.bf16.mxu0 0
    %3354 = vmatpush1.bf16.msra.mxu0 0
    %3355 = vmatprep.subr.bf16.mxu0 0
    %3356 = vmatpush1.bf16.msra.mxu0 0
    %3357 = vmatprep.subr.bf16.mxu0 0
    %3358 = vmatpush1.bf16.msra.mxu0 0
    %3359 = vmatprep.subr.bf16.mxu0 0
    %3360 = vmatpush1.bf16.msra.mxu0 0
    %3361 = vmatprep.subr.bf16.mxu0 0
    %3362 = vmatpush1.bf16.msra.mxu0 0
    %3363 = vmatprep.subr.bf16.mxu0 0
    %3364 = vmatpush1.bf16.msra.mxu0 0
    %3365 = vmatprep.subr.bf16.mxu0 0
    %3366 = vmatpush1.bf16.msra.mxu0 0
    %3367 = vmatprep.subr.bf16.mxu0 0
    %3368 = vmatpush1.bf16.msra.mxu0 0
    %3369 = vmatprep.subr.bf16.mxu0 0
    %3370 = vmatpush1.bf16.msra.mxu0 0
    %3371 = vmatprep.subr.bf16.mxu0 0
    %3372 = vmatpush1.bf16.msra.mxu0 0
    %3373 = vmatprep.subr.bf16.mxu0 0
    %3374 = vmatpush1.bf16.msra.mxu0 0
    %3375 = vmatprep.mubr.bf16.mxu0 0
    %3376 = vmatmul.mubr.bf16.gmra.mrb[0].mxu0 %v3341
    %v3377 = vpop.f32.mrb[0].mxu0
    %v3378 = vadd.f32 %v3333, %v3377
    %v3379 = vpop.f32.mrb[0].mxu0
    %v3380 = vpop.f32.mrb[0].mxu0
    %v3381 = vpop.f32.mrb[0].mxu0
    %3382 = vdwg.mxu0
    %v3383 = vmax.f32 %v3378, 0.0
    %v3384 = vpack.c.bf16 %v3383, %v3383
    %s3385 = scalar_lea.vmem %s4, 48
    %v3386 = vld [vmem:[%s3385] sm:$0xf]
    %v3387 = vld [vmem:[%s3385 + $0x4] sm:$0xf]
    %v3388 = vld [vmem:[%s3385 + $0x8] sm:$0xf]
    %v3389 = vld [vmem:[%s3385 + $0xc] sm:$0xf]
    %v3390 = vlaneseq
    %v3391 = vshrl.u32 %v3390, 7
    %v3392 = vsub.s32 5, %v3391
    %v3393 = vrot.slane %v2730, %v3392
    %v3398 = vunpack.c.l.b16 %v3386
    %v3399 = vunpack.c.l.b16 %v3387
    %v3400 = vunpack.c.l.b16 %v3388
    %v3401 = vunpack.c.l.b16 %v3389
    %v3402 = vpack.c.b16 %v3399, %v3398
    %v3403 = vpack.c.b16 %v3401, %v3400
    %v3407 = vsel %vm795, %v3384, 0
    %3409 = vmatprep.subr.bf16.mxu0 0
    %3410 = vmatpush1.bf16.msra.mxu0 %v3402
    %3411 = vmatprep.subr.bf16.mxu0 0
    %3412 = vmatpush1.bf16.msra.mxu0 %v3403
    %3413 = vmatprep.subr.bf16.mxu0 0
    %3414 = vmatpush1.bf16.msra.mxu0 0
    %3415 = vmatprep.subr.bf16.mxu0 0
    %3416 = vmatpush1.bf16.msra.mxu0 0
    %3417 = vmatprep.subr.bf16.mxu0 0
    %3418 = vmatpush1.bf16.msra.mxu0 0
    %3419 = vmatprep.subr.bf16.mxu0 0
    %3420 = vmatpush1.bf16.msra.mxu0 0
    %3421 = vmatprep.subr.bf16.mxu0 0
    %3422 = vmatpush1.bf16.msra.mxu0 0
    %3423 = vmatprep.subr.bf16.mxu0 0
    %3424 = vmatpush1.bf16.msra.mxu0 0
    %3425 = vmatprep.subr.bf16.mxu0 0
    %3426 = vmatpush1.bf16.msra.mxu0 0
    %3427 = vmatprep.subr.bf16.mxu0 0
    %3428 = vmatpush1.bf16.msra.mxu0 0
    %3429 = vmatprep.subr.bf16.mxu0 0
    %3430 = vmatpush1.bf16.msra.mxu0 0
    %3431 = vmatprep.subr.bf16.mxu0 0
    %3432 = vmatpush1.bf16.msra.mxu0 0
    %3433 = vmatprep.subr.bf16.mxu0 0
    %3434 = vmatpush1.bf16.msra.mxu0 0
    %3435 = vmatprep.subr.bf16.mxu0 0
    %3436 = vmatpush1.bf16.msra.mxu0 0
    %3437 = vmatprep.subr.bf16.mxu0 0
    %3438 = vmatpush1.bf16.msra.mxu0 0
    %3439 = vmatprep.subr.bf16.mxu0 0
    %3440 = vmatpush1.bf16.msra.mxu0 0
    %3441 = vmatprep.mubr.bf16.mxu0 0
    %3442 = vmatmul.mubr.bf16.gmra.mrb[0].mxu0 %v3407
    %v3443 = vpop.f32.mrb[0].mxu0
    %v3444 = vadd.f32 %v3393, %v3443
    %v3445 = vpop.f32.mrb[0].mxu0
    %v3446 = vpop.f32.mrb[0].mxu0
    %v3447 = vpop.f32.mrb[0].mxu0
    %3448 = vdwg.mxu0
    %v3449 = vadd.f32 %v3325, %v3444
    %v3450 = vsel %vm692, %v3449, 0.0
    %3451 = vadd.xlane.f32.xlu0 %v3450
    %v3452 = vpop.xlane.xlu0 %3451
    %v3453 = vmul.f32 %v3452, %v696
    %v3454 = vsub.f32 %v3449, %v3453
    %v3455 = vmul.f32 %v3454, %v3454
    %v3456 = vsel %vm692, %v3455, 0.0
    %3457 = vadd.xlane.f32.xlu0 %v3456
    %v3458 = vpop.xlane.xlu0 %3457
    %v3459 = vmul.f32 %v3458, %v696
    %v3460 = vadd.f32 %v3459, 1e-05
    %v3461 = vrsqrt.pop %v3460
    %v3462 = vmul.f32 %v3454, %v3461
    %v3463 = vlaneseq
    %v3464 = vshrl.u32 %v3463, 7
    %v3465 = vsub.s32 6, %v3464
    %v3466 = vrot.slane %v2730, %v3465
    %v3467 = vmul.f32 %v3462, %v3466
    %v3468 = vlaneseq
    %v3469 = vshrl.u32 %v3468, 7
    %v3470 = vsub.s32 7, %v3469
    %v3471 = vrot.slane %v2730, %v3470
    %v3472 = vadd.f32 %v3467, %v3471
    %v3473 = vsel %vm176, %v3472, 0.0
    %s3474 = scalar_lea.vmem %s9, 4
    %3475 = vst [vmem:[%s3474] sm:$0xf] %v3473
    %s3476 = scalar_lea.vmem [#allocation6], 4
    %v3477 = vld [vmem:[%s3476] sm:$0xf]
    %v3478 = vpack.c.bf16 %v3472, %v3472
    %s3479 = scalar_lea.vmem [#allocation4], 16
    %v3480 = vld [vmem:[%s3479] sm:$0xff]
    %v3481 = vld [vmem:[%s3479 + $0x8] sm:$0xff]
    %v3483 = vlaneseq
    %v3484 = vshrl.u32 %v3483, 7
    %v3485 = vsub.s32 0, %v3484
    %v3486 = vrot.slane %v3477, %v3485
    %v3487 = vlaneseq
    %v3488 = vshrl.u32 %v3487, 7
    %v3489 = vsub.s32 2, %v3488
    %v3490 = vrot.slane %v3477, %v3489
    %v3493 = vlaneseq
    %v3494 = vshrl.u32 %v3493, 7
    %v3495 = vsub.s32 0, %v3494
    %v3496 = vrot.slane %v3486, %v3495
    %v3497 = vlaneseq
    %v3498 = vshrl.u32 %v3497, 7
    %v3499 = vsub.s32 0, %v3498
    %v3500 = vrot.slane %v3490, %v3499
    %v3503 = vunpack.c.l.b16 %v3480
    %v3504 = vunpack.c.h.b16 %v3480
    %v3505 = vunpack.c.l.b16 %v3481
    %v3506 = vunpack.c.h.b16 %v3481
    %v3507 = vpack.c.b16 %v3505, %v3503
    %v3508 = vpack.c.b16 %v3506, %v3504
    %v3512 = vsel %vm176, %v3478, 0
    %3514 = vmatprep.subr.bf16.mxu0 %v3508
    %3515 = vmatpush1.bf16.msra.mxu0 %v3507
    %3516 = vmatprep.subr.bf16.mxu0 0
    %3517 = vmatpush1.bf16.msra.mxu0 0
    %3518 = vmatprep.subr.bf16.mxu0 0
    %3519 = vmatpush1.bf16.msra.mxu0 0
    %3520 = vmatprep.subr.bf16.mxu0 0
    %3521 = vmatpush1.bf16.msra.mxu0 0
    %3522 = vmatprep.subr.bf16.mxu0 0
    %3523 = vmatpush1.bf16.msra.mxu0 0
    %3524 = vmatprep.subr.bf16.mxu0 0
    %3525 = vmatpush1.bf16.msra.mxu0 0
    %3526 = vmatprep.subr.bf16.mxu0 0
    %3527 = vmatpush1.bf16.msra.mxu0 0
    %3528 = vmatprep.subr.bf16.mxu0 0
    %3529 = vmatpush1.bf16.msra.mxu0 0
    %3530 = vmatprep.subr.bf16.mxu0 0
    %3531 = vmatpush1.bf16.msra.mxu0 0
    %3532 = vmatprep.subr.bf16.mxu0 0
    %3533 = vmatpush1.bf16.msra.mxu0 0
    %3534 = vmatprep.subr.bf16.mxu0 0
    %3535 = vmatpush1.bf16.msra.mxu0 0
    %3536 = vmatprep.subr.bf16.mxu0 0
    %3537 = vmatpush1.bf16.msra.mxu0 0
    %3538 = vmatprep.subr.bf16.mxu0 0
    %3539 = vmatpush1.bf16.msra.mxu0 0
    %3540 = vmatprep.subr.bf16.mxu0 0
    %3541 = vmatpush1.bf16.msra.mxu0 0
    %3542 = vmatprep.subr.bf16.mxu0 0
    %3543 = vmatpush1.bf16.msra.mxu0 0
    %3544 = vmatprep.subr.bf16.mxu0 0
    %3545 = vmatpush1.bf16.msra.mxu0 0
    %3546 = vmatprep.mubr.bf16.mxu0 0
    %3547 = vmatmul.mubr.bf16.gmra.mrb[0].mxu0 %v3512
    %v3548 = vpop.f32.mrb[0].mxu0
    %v3549 = vadd.f32 %v3496, %v3548
    %v3550 = vpop.f32.mrb[0].mxu0
    %v3551 = vadd.f32 %v3500, %v3550
    %v3552 = vpop.f32.mrb[0].mxu0
    %v3553 = vpop.f32.mrb[0].mxu0
    %3554 = vdwg.mxu0
    %v3555 = vmax.f32 %v3549, 0.0
    %v3556 = vmax.f32 %v3551, 0.0
    %v3557 = vpack.c.bf16 %v3555, %v3555
    %v3558 = vpack.c.bf16 %v3556, %v3556
    %s3559 = scalar_lea.vmem %s7, 128
    %v3560 = vld [vmem:[%s3559] sm:$0xf]
    %v3561 = vld [vmem:[%s3559 + $0x4] sm:$0xf]
    %v3562 = vld [vmem:[%s3559 + $0x8] sm:$0xf]
    %v3563 = vld [vmem:[%s3559 + $0xc] sm:$0xf]
    %v3564 = vld [vmem:[%s3559 + $0x10] sm:$0xf]
    %v3565 = vld [vmem:[%s3559 + $0x14] sm:$0xf]
    %v3566 = vld [vmem:[%s3559 + $0x18] sm:$0xf]
    %v3567 = vld [vmem:[%s3559 + $0x1c] sm:$0xf]
    %v3568 = vld [vmem:[%s3559 + $0x20] sm:$0xf]
    %v3569 = vld [vmem:[%s3559 + $0x24] sm:$0xf]
    %v3570 = vld [vmem:[%s3559 + $0x28] sm:$0xf]
    %v3571 = vld [vmem:[%s3559 + $0x2c] sm:$0xf]
    %v3572 = vld [vmem:[%s3559 + $0x30] sm:$0xf]
    %v3573 = vld [vmem:[%s3559 + $0x34] sm:$0xf]
    %v3574 = vld [vmem:[%s3559 + $0x38] sm:$0xf]
    %v3575 = vld [vmem:[%s3559 + $0x3c] sm:$0xf]
    %v3576 = vld [vmem:[%s3559 + $0x40] sm:$0xf]
    %v3577 = vld [vmem:[%s3559 + $0x44] sm:$0xf]
    %v3578 = vld [vmem:[%s3559 + $0x48] sm:$0xf]
    %v3579 = vld [vmem:[%s3559 + $0x4c] sm:$0xf]
    %v3580 = vld [vmem:[%s3559 + $0x50] sm:$0xf]
    %v3581 = vld [vmem:[%s3559 + $0x54] sm:$0xf]
    %v3582 = vld [vmem:[%s3559 + $0x58] sm:$0xf]
    %v3583 = vld [vmem:[%s3559 + $0x5c] sm:$0xf]
    %v3584 = vld [vmem:[%s3559 + $0x60] sm:$0xf]
    %v3585 = vld [vmem:[%s3559 + $0x64] sm:$0xf]
    %v3586 = vld [vmem:[%s3559 + $0x68] sm:$0xf]
    %v3587 = vld [vmem:[%s3559 + $0x6c] sm:$0xf]
    %v3588 = vld [vmem:[%s3559 + $0x70] sm:$0xf]
    %v3589 = vld [vmem:[%s3559 + $0x74] sm:$0xf]
    %v3590 = vld [vmem:[%s3559 + $0x78] sm:$0xf]
    %v3591 = vld [vmem:[%s3559 + $0x7c] sm:$0xf]
    %v3592 = vlaneseq
    %v3593 = vshrl.u32 %v3592, 7
    %v3594 = vsub.s32 1, %v3593
    %v3595 = vrot.slane %v3477, %v3594
    %v3628 = vunpack.c.l.b16 %v3560
    %v3629 = vunpack.c.l.b16 %v3561
    %v3630 = vunpack.c.l.b16 %v3562
    %v3631 = vunpack.c.l.b16 %v3563
    %v3632 = vunpack.c.l.b16 %v3564
    %v3633 = vunpack.c.l.b16 %v3565
    %v3634 = vunpack.c.l.b16 %v3566
    %v3635 = vunpack.c.l.b16 %v3567
    %v3636 = vunpack.c.l.b16 %v3568
    %v3637 = vunpack.c.l.b16 %v3569
    %v3638 = vunpack.c.l.b16 %v3570
    %v3639 = vunpack.c.l.b16 %v3571
    %v3640 = vunpack.c.l.b16 %v3572
    %v3641 = vunpack.c.l.b16 %v3573
    %v3642 = vunpack.c.l.b16 %v3574
    %v3643 = vunpack.c.l.b16 %v3575
    %v3644 = vunpack.c.l.b16 %v3576
    %v3645 = vunpack.c.l.b16 %v3577
    %v3646 = vunpack.c.l.b16 %v3578
    %v3647 = vunpack.c.l.b16 %v3579
    %v3648 = vunpack.c.l.b16 %v3580
    %v3649 = vunpack.c.l.b16 %v3581
    %v3650 = vunpack.c.l.b16 %v3582
    %v3651 = vunpack.c.l.b16 %v3583
    %v3652 = vunpack.c.l.b16 %v3584
    %v3653 = vunpack.c.l.b16 %v3585
    %v3654 = vunpack.c.l.b16 %v3586
    %v3655 = vunpack.c.l.b16 %v3587
    %v3656 = vunpack.c.l.b16 %v3588
    %v3657 = vunpack.c.l.b16 %v3589
    %v3658 = vunpack.c.l.b16 %v3590
    %v3659 = vunpack.c.l.b16 %v3591
    %v3660 = vpack.c.b16 %v3629, %v3628
    %v3661 = vpack.c.b16 %v3631, %v3630
    %v3662 = vpack.c.b16 %v3633, %v3632
    %v3663 = vpack.c.b16 %v3635, %v3634
    %v3664 = vpack.c.b16 %v3637, %v3636
    %v3665 = vpack.c.b16 %v3639, %v3638
    %v3666 = vpack.c.b16 %v3641, %v3640
    %v3667 = vpack.c.b16 %v3643, %v3642
    %v3668 = vpack.c.b16 %v3645, %v3644
    %v3669 = vpack.c.b16 %v3647, %v3646
    %v3670 = vpack.c.b16 %v3649, %v3648
    %v3671 = vpack.c.b16 %v3651, %v3650
    %v3672 = vpack.c.b16 %v3653, %v3652
    %v3673 = vpack.c.b16 %v3655, %v3654
    %v3674 = vpack.c.b16 %v3657, %v3656
    %v3675 = vpack.c.b16 %v3659, %v3658
    %3692 = vmatprep.subr.bf16.mxu0 0
    %3693 = vmatpush1.bf16.msra.mxu0 %v3660
    %3694 = vmatprep.subr.bf16.mxu0 0
    %3695 = vmatpush1.bf16.msra.mxu0 %v3661
    %3696 = vmatprep.subr.bf16.mxu0 0
    %3697 = vmatpush1.bf16.msra.mxu0 %v3662
    %3698 = vmatprep.subr.bf16.mxu0 0
    %3699 = vmatpush1.bf16.msra.mxu0 %v3663
    %3700 = vmatprep.subr.bf16.mxu0 0
    %3701 = vmatpush1.bf16.msra.mxu0 %v3664
    %3702 = vmatprep.subr.bf16.mxu0 0
    %3703 = vmatpush1.bf16.msra.mxu0 %v3665
    %3704 = vmatprep.subr.bf16.mxu0 0
    %3705 = vmatpush1.bf16.msra.mxu0 %v3666
    %3706 = vmatprep.subr.bf16.mxu0 0
    %3707 = vmatpush1.bf16.msra.mxu0 %v3667
    %3708 = vmatprep.subr.bf16.mxu0 0
    %3709 = vmatpush1.bf16.msra.mxu0 %v3668
    %3710 = vmatprep.subr.bf16.mxu0 0
    %3711 = vmatpush1.bf16.msra.mxu0 %v3669
    %3712 = vmatprep.subr.bf16.mxu0 0
    %3713 = vmatpush1.bf16.msra.mxu0 %v3670
    %3714 = vmatprep.subr.bf16.mxu0 0
    %3715 = vmatpush1.bf16.msra.mxu0 %v3671
    %3716 = vmatprep.subr.bf16.mxu0 0
    %3717 = vmatpush1.bf16.msra.mxu0 %v3672
    %3718 = vmatprep.subr.bf16.mxu0 0
    %3719 = vmatpush1.bf16.msra.mxu0 %v3673
    %3720 = vmatprep.subr.bf16.mxu0 0
    %3721 = vmatpush1.bf16.msra.mxu0 %v3674
    %3722 = vmatprep.subr.bf16.mxu0 0
    %3723 = vmatpush1.bf16.msra.mxu0 %v3675
    %3724 = vmatprep.mubr.bf16.mxu0 %v3558
    %3725 = vmatmul.mubr.bf16.gmra.mrb[0].mxu0 %v3557
    %v3726 = vpop.f32.mrb[0].mxu0
    %v3727 = vadd.f32 %v3595, %v3726
    %v3728 = vpop.f32.mrb[0].mxu0
    %v3729 = vpop.f32.mrb[0].mxu0
    %v3730 = vpop.f32.mrb[0].mxu0
    %3731 = vdwg.mxu0
    %s3732 = scalar_lea.vmem %s10, 4
    %3733 = vst [vmem:[%s3732] sm:$0xf] %v3727
    // Predicated region
    $region50: #{tfc_forward.1} parent=1 // pred_check
      _
    $region51: #{tfc_forward.1} parent=1 // pred_check_branch
      %3735 = sbr.rel (0) target = $region53
    $region52: #{tfc_forward.1} parent=1 // pred_region
      _
    $region53: #{tfc_forward.1} parent=1 // pred_fallthru
      _
    // Predicated region
    $region54: #{tfc_forward.1} parent=1 // pred_check
      _
    $region55: #{tfc_forward.1} parent=1 // pred_check_branch
      %3737 = sbr.rel (0) target = $region57
    $region56: #{tfc_forward.1} parent=1 // pred_region
      _
    $region57: #{tfc_forward.1} parent=1 // pred_fallthru
      _
    // Predicated region
    $region58: #{tfc_forward.1} parent=1 // pred_check
      _
    $region59: #{tfc_forward.1} parent=1 // pred_check_branch
      %3739 = sbr.rel (0) target = $region61
    $region60: #{tfc_forward.1} parent=1 // pred_region
      _
    $region61: #{tfc_forward.1} parent=1 // pred_fallthru
      _
    // Predicated region
    $region62: #{tfc_forward.1} parent=1 // pred_check
      _
    $region63: #{tfc_forward.1} parent=1 // pred_check_branch
      %3741 = sbr.rel (0) target = $region65
    $region64: #{tfc_forward.1} parent=1 // pred_region
      _
    $region65: #{tfc_forward.1} parent=1 // pred_fallthru
      _
    %3742 = vsyncpa [#allocation3], 1
    %3743 = vsyncpa [#allocation5], 1

</llo_original>
